<compile_context>
chip_gen: v7x
topology: tpu7x:2x2x1
jax: 0.10.0
libtpu: 0.0.40
codegen_flags: <defaults>
</compile_context>

<pallas_src>
import jax
import jax.numpy as jnp
import numpy as np
from jax import lax
from jax.experimental import pallas as pl
from jax.experimental.pallas import tpu as pltpu

B = 2
H = W = 7
HW = H * W                  # 49 valid spatial positions per sample
HWP = 56                    # rows per sample, padded to a bf16 sublane multiple (16)
C_RES = 512
C_VIT = 256
C_OUT = C_RES + C_VIT       # 768
NUM_CLASS = 2
NUM_CLASS_PAD = 8           # logits padded only to 8 lanes (was 128); sliced back in wrapper
LN_EPS = 1e-5


def _head_kernel(r_ref, v_ref, pool_ref, wr_ref, wv_ref, bp_ref,
                 gamma_ref, gmean_ref, bmean_ref, wfc_ref, bfc_ref, out_ref):
    # Fused (dw o pointwise) 1x1 conv as a K-split MXU matmul: bf16 operands, f32 accumulate.
    z = (jnp.dot(r_ref[...], wr_ref[...], preferred_element_type=jnp.float32)
         + jnp.dot(v_ref[...], wv_ref[...], preferred_element_type=jnp.float32)
         + bp_ref[...])                                                   # (ROWS, 768) f32

    # gamma shipped once as (HWP, 768) bf16; tile per batch inside VMEM (cheap local copy).
    reps = r_ref.shape[0] // gamma_ref.shape[0]
    gamma = jnp.tile(gamma_ref[...].astype(jnp.float32), (reps, 1))       # (ROWS, 768)

    # One wide pooling matmul instead of three skinny ones (amortizes MXU fill/drain).
    # pool[b, s] = 1/HW iff row s is a *valid* (non-pad) row of sample b, else 0.
    cat = jnp.concatenate([z, z * z, z * gamma], axis=1)                  # (ROWS, 2304)
    pooled3 = jnp.dot(pool_ref[...], cat,
                      preferred_element_type=jnp.float32)                 # (B, 2304)
    pooled_z = pooled3[:, :C_OUT]          # E_s[z]
    pooled_z2 = pooled3[:, C_OUT:2 * C_OUT]  # E_s[z^2]
    pooled_zg = pooled3[:, 2 * C_OUT:]     # E_s[z*gamma]

    # One-pass LayerNorm statistics over (C,H,W) per sample.
    inv_c = 1.0 / float(C_OUT)
    mean = jnp.sum(pooled_z, axis=1, keepdims=True) * inv_c               # (B,1)
    ex2 = jnp.sum(pooled_z2, axis=1, keepdims=True) * inv_c               # (B,1)
    var = jnp.maximum(ex2 - mean * mean, 0.0)
    inv_std = lax.rsqrt(var + LN_EPS)                                     # (B,1)

    # LayerNorm affine + AdaptiveAvgPool2d(1), fused algebraically (exact rewrite):
    # pooled = inv_std * (E_s[z*gamma] - mean * E_s[gamma]) + E_s[beta]
    pooled = inv_std * (pooled_zg - mean * gmean_ref[...]) + bmean_ref[...]   # (B,768)

    # Flatten -> Dropout(eval: identity) -> ReLU -> Linear(768, num_class) (8-lane padded).
    act = jnp.maximum(pooled, 0.0).astype(jnp.bfloat16)
    out_ref[...] = (jnp.dot(act, wfc_ref[...], preferred_element_type=jnp.float32)
                    + bfc_ref[...])                                       # (B, 8)


def prepare_params(params, batch_size):
    """One-time parameter folding / layout prep (hoisted out of the forward path)."""
    w_dw = params["w_dw"]                       # (768,)   depthwise 1x1 scale
    b_dw = params["b_dw"]                       # (768,)
    w_pt = params["w_pt"]                       # (768,768) pointwise, (out, in)
    b_pt = params["b_pt"]                       # (768,)

    # Fold dw into pointwise:  point(dw(x)) = (W_pt * w_dw) x + (W_pt b_dw + b_pt)
    w_fold_t = w_dw[:, None] * jnp.transpose(w_pt)            # (in=768, out=768)
    b_fold = w_pt @ b_dw + b_pt                               # (768,)
    wr = w_fold_t[:C_RES].astype(jnp.bfloat16)                # (512,768) bf16
    wv = w_fold_t[C_RES:].astype(jnp.bfloat16)                # (256,768) bf16
    bp = b_fold.reshape(1, C_OUT).astype(jnp.float32)

    # LayerNorm affine params, (C,H,W) -> (HW,C) channels-last.
    gamma_hw = jnp.transpose(params["gamma"], (1, 2, 0)).reshape(HW, C_OUT)
    beta_hw = jnp.transpose(params["beta"], (1, 2, 0)).reshape(HW, C_OUT)
    gmean = jnp.mean(gamma_hw, axis=0, keepdims=True).astype(jnp.float32)   # (1,768) exact
    bmean = jnp.mean(beta_hw, axis=0, keepdims=True).astype(jnp.float32)    # (1,768) exact
    gamma_pad = jnp.pad(gamma_hw, ((0, HWP - HW), (0, 0))).astype(jnp.bfloat16)  # (56,768)

    # Classifier weights, transposed + zero-padded only to 8 lanes, bf16 (tiny matmul).
    wfc = jnp.pad(jnp.transpose(params["w_fc"]),
                  ((0, 0), (0, NUM_CLASS_PAD - NUM_CLASS))).astype(jnp.bfloat16)  # (768,8)
    bfc = jnp.pad(params["b_fc"],
                  (0, NUM_CLASS_PAD - NUM_CLASS)).reshape(1, NUM_CLASS_PAD).astype(jnp.float32)

    # Per-sample spatial-mean pooling matrix over the padded row layout.
    rows = jnp.arange(batch_size * HWP)
    samp = rows // HWP
    valid = (rows % HWP) < HW
    pool = ((samp[None, :] == jnp.arange(batch_size)[:, None]) & valid[None, :]
            ).astype(jnp.float32) / float(HW)                               # (B, B*HWP)

    return dict(wr=wr, wv=wv, bp=bp, gamma=gamma_pad, gmean=gmean, bmean=bmean,
                wfc=wfc, bfc=bfc, pool=pool)


@jax.jit
def restevit_head_forward(res_feat_nchw, vit_feat_nchw, prepared):
    """res_feat_nchw: (B,512,7,7) f32, vit_feat_nchw: (B,256,7,7) f32 -> (B,num_class) f32."""
    b = res_feat_nchw.shape[0]

    # TODO(synk): ideally the preceding backbone stage emits channels-last bf16 directly (or
    # this head is fused into its last pallas_call); here the relayout is one fused
    # transpose+pad+cast per input.
    def relayout(x, c):
        x = jnp.transpose(x, (0, 2, 3, 1)).reshape(b, HW, c)
        x = jnp.pad(x, ((0, 0), (0, HWP - HW), (0, 0)))
        return x.reshape(b * HWP, c).astype(jnp.bfloat16)

    r = relayout(res_feat_nchw, C_RES)          # (B*56, 512) bf16
    v = relayout(vit_feat_nchw, C_VIT)          # (B*56, 256) bf16

    operands = (r, v, prepared["pool"], prepared["wr"], prepared["wv"], prepared["bp"],
                prepared["gamma"], prepared["gmean"], prepared["bmean"],
                prepared["wfc"], prepared["bfc"])

    rows = b * HWP
    bytes_accessed = (sum(int(np.prod(a.shape)) * a.dtype.itemsize for a in operands)
                      + b * NUM_CLASS_PAD * 4)
    flops = (2 * rows * C_OUT * C_OUT           # K-split pointwise matmul
             + 2 * b * rows * 3 * C_OUT         # fused pooling matmul
             + 2 * b * C_OUT * NUM_CLASS_PAD)   # classifier

    vmem_spec = pl.BlockSpec(memory_space=pltpu.MemorySpace.VMEM)

    # Single grid-less invocation: whole batch, all weights resident once (~1.5 MB << VMEM).
    out = pl.pallas_call(
        _head_kernel,
        out_shape=jax.ShapeDtypeStruct((b, NUM_CLASS_PAD), jnp.float32),
        in_specs=[vmem_spec] * len(operands),
        out_specs=vmem_spec,
        cost_estimate=pl.CostEstimate(flops=flops, transcendentals=b,
                                      bytes_accessed=bytes_accessed),
    )(*operands)
    return out[:, :NUM_CLASS]


def _reference(res_feat, vit_feat, p):
    """Pure-JAX f32 NCHW reference mirroring the PyTorch forward (eval mode)."""
    z = jnp.concatenate([res_feat, vit_feat], axis=1)                     # (B,768,7,7)
    z = z * p["w_dw"][None, :, None, None] + p["b_dw"][None, :, None, None]
    z = jnp.einsum("bchw,oc->bohw", z, p["w_pt"]) + p["b_pt"][None, :, None, None]
    mean = jnp.mean(z, axis=(1, 2, 3), keepdims=True)
    var = jnp.mean((z - mean) ** 2, axis=(1, 2, 3), keepdims=True)
    z = (z - mean) / jnp.sqrt(var + LN_EPS) * p["gamma"][None] + p["beta"][None]
    pooled = jnp.mean(z, axis=(2, 3))                                     # (B,768)
    act = jnp.maximum(pooled, 0.0)                                        # dropout = id (eval)
    return act @ p["w_fc"].T + p["b_fc"]


def _init_params(key):
    ks = jax.random.split(key, 8)
    return {
        "w_dw": 0.5 + 0.1 * jax.random.normal(ks[0], (C_OUT,), jnp.float32),
        "b_dw": 0.02 * jax.random.normal(ks[1], (C_OUT,), jnp.float32),
        "w_pt": 0.02 * jax.random.normal(ks[2], (C_OUT, C_OUT), jnp.float32),
        "b_pt": 0.02 * jax.random.normal(ks[3], (C_OUT,), jnp.float32),
        "gamma": 1.0 + 0.1 * jax.random.normal(ks[4], (C_OUT, H, W), jnp.float32),
        "beta": 0.1 * jax.random.normal(ks[5], (C_OUT, H, W), jnp.float32),
        "w_fc": 0.05 * jax.random.normal(ks[6], (NUM_CLASS, C_OUT), jnp.float32),
        "b_fc": 0.05 * jax.random.normal(ks[7], (NUM_CLASS,), jnp.float32),
    }


if __name__ == "__main__":
    key = jax.random.PRNGKey(0)
    k_res, k_vit, k_par = jax.random.split(key, 3)
    # Feature maps that feed Combine_block (see TODO(synk) above re: upstream stages).
    res_feat = jax.random.normal(k_res, (B, C_RES, H, W), jnp.float32)
    vit_feat = jax.random.normal(k_vit, (B, C_VIT, H, W), jnp.float32)
    params = _init_params(k_par)

    prepared = prepare_params(params, B)   # one-time weight folding / layout prep

    out = jax.block_until_ready(restevit_head_forward(res_feat, vit_feat, prepared))
    ref = jax.block_until_ready(_reference(res_feat, vit_feat, params))

    assert out.shape == (B, NUM_CLASS), out.shape
    # Tolerance accounts for bf16 MXU operands (f32 accumulation) in the pointwise conv and
    # the (tiny) bf16 gamma / classifier stages.
    np.testing.assert_allclose(np.asarray(out), np.asarray(ref), rtol=1e-2, atol=2e-2)
    print("KERNEL_OK")
</pallas_src>

<mosaic_0001>
module attributes {stable_mosaic.version = 11 : i64} {
  func.func @_head_kernel(%arg0: memref<112x512xbf16, #tpu.memory_space<vmem>>, %arg1: memref<112x256xbf16, #tpu.memory_space<vmem>>, %arg2: memref<2x112xf32, #tpu.memory_space<vmem>>, %arg3: memref<512x768xbf16, #tpu.memory_space<vmem>>, %arg4: memref<256x768xbf16, #tpu.memory_space<vmem>>, %arg5: memref<1x768xf32, #tpu.memory_space<vmem>>, %arg6: memref<56x768xbf16, #tpu.memory_space<vmem>>, %arg7: memref<1x768xf32, #tpu.memory_space<vmem>>, %arg8: memref<1x768xf32, #tpu.memory_space<vmem>>, %arg9: memref<768x8xbf16, #tpu.memory_space<vmem>>, %arg10: memref<1x8xf32, #tpu.memory_space<vmem>>, %arg11: memref<2x8xf32, #tpu.memory_space<vmem>>) attributes {dimension_semantics = [], scalar_prefetch = 0 : i64, scratch_operands = 0 : i64, tpu.core_type = #tpu.core_type<tc>} {
    %c0 = arith.constant 0 : index
    %c0_0 = arith.constant 0 : index
    %0 = vector.load %arg0[%c0, %c0_0] : memref<112x512xbf16, #tpu.memory_space<vmem>>, vector<112x512xbf16>
    %c0_1 = arith.constant 0 : index
    %c0_2 = arith.constant 0 : index
    %1 = vector.load %arg3[%c0_1, %c0_2] : memref<512x768xbf16, #tpu.memory_space<vmem>>, vector<512x768xbf16>
    %cst = arith.constant dense<0.000000e+00> : vector<112x768xf32>
    %2 = tpu.matmul %0, %1, %cst {dimension_numbers = #tpu.dot_dimension_numbers<[1], [0], [0], [1], [0, 0, 1, 1], [], []>} : vector<112x512xbf16>, vector<512x768xbf16>, vector<112x768xf32> -> vector<112x768xf32>
    %c0_3 = arith.constant 0 : index
    %c0_4 = arith.constant 0 : index
    %3 = vector.load %arg1[%c0_3, %c0_4] : memref<112x256xbf16, #tpu.memory_space<vmem>>, vector<112x256xbf16>
    %c0_5 = arith.constant 0 : index
    %c0_6 = arith.constant 0 : index
    %4 = vector.load %arg4[%c0_5, %c0_6] : memref<256x768xbf16, #tpu.memory_space<vmem>>, vector<256x768xbf16>
    %cst_7 = arith.constant dense<0.000000e+00> : vector<112x768xf32>
    %5 = tpu.matmul %3, %4, %cst_7 {dimension_numbers = #tpu.dot_dimension_numbers<[1], [0], [0], [1], [0, 0, 1, 1], [], []>} : vector<112x256xbf16>, vector<256x768xbf16>, vector<112x768xf32> -> vector<112x768xf32>
    %6 = arith.addf %2, %5 : vector<112x768xf32>
    %c0_8 = arith.constant 0 : index
    %c0_9 = arith.constant 0 : index
    %7 = vector.load %arg5[%c0_8, %c0_9] : memref<1x768xf32, #tpu.memory_space<vmem>>, vector<1x768xf32>
    %8 = vector.broadcast %7 : vector<1x768xf32> to vector<112x768xf32>
    %9 = arith.addf %6, %8 : vector<112x768xf32>
    %c0_10 = arith.constant 0 : index
    %c0_11 = arith.constant 0 : index
    %10 = vector.load %arg6[%c0_10, %c0_11] : memref<56x768xbf16, #tpu.memory_space<vmem>>, vector<56x768xbf16>
    %11 = arith.extf %10 : vector<56x768xbf16> to vector<56x768xf32>
    %12 = tpu.concatenate %11, %11 in 0 : vector<56x768xf32>, vector<56x768xf32> -> vector<112x768xf32>
    %13 = arith.mulf %9, %9 : vector<112x768xf32>
    %14 = arith.mulf %9, %12 : vector<112x768xf32>
    %15 = tpu.concatenate %9, %13, %14 in 1 : vector<112x768xf32>, vector<112x768xf32>, vector<112x768xf32> -> vector<112x2304xf32>
    %c0_12 = arith.constant 0 : index
    %c0_13 = arith.constant 0 : index
    %16 = vector.load %arg2[%c0_12, %c0_13] : memref<2x112xf32, #tpu.memory_space<vmem>>, vector<2x112xf32>
    %cst_14 = arith.constant dense<0.000000e+00> : vector<2x2304xf32>
    %17 = tpu.matmul %16, %15, %cst_14 {dimension_numbers = #tpu.dot_dimension_numbers<[1], [0], [0], [1], [0, 0, 1, 1], [], []>} : vector<2x112xf32>, vector<112x2304xf32>, vector<2x2304xf32> -> vector<2x2304xf32>
    %18 = vector.extract_strided_slice %17 {offsets = [0, 0], sizes = [2, 768], strides = [1, 1]} : vector<2x2304xf32> to vector<2x768xf32>
    %19 = vector.extract_strided_slice %17 {offsets = [0, 768], sizes = [2, 768], strides = [1, 1]} : vector<2x2304xf32> to vector<2x768xf32>
    %20 = vector.extract_strided_slice %17 {offsets = [0, 1536], sizes = [2, 768], strides = [1, 1]} : vector<2x2304xf32> to vector<2x768xf32>
    %cst_15 = arith.constant dense<0.000000e+00> : vector<2xf32>
    %21 = vector.multi_reduction <add>, %18, %cst_15 [1] : vector<2x768xf32> to vector<2xf32>
    %22 = vector.shape_cast %21 : vector<2xf32> to vector<2x1xf32>
    %cst_16 = arith.constant 0.00130208337 : f32
    %23 = vector.broadcast %cst_16 : f32 to vector<2x1xf32>
    %24 = arith.mulf %22, %23 : vector<2x1xf32>
    %cst_17 = arith.constant dense<0.000000e+00> : vector<2xf32>
    %25 = vector.multi_reduction <add>, %19, %cst_17 [1] : vector<2x768xf32> to vector<2xf32>
    %26 = vector.shape_cast %25 : vector<2xf32> to vector<2x1xf32>
    %cst_18 = arith.constant 0.00130208337 : f32
    %27 = vector.broadcast %cst_18 : f32 to vector<2x1xf32>
    %28 = arith.mulf %26, %27 : vector<2x1xf32>
    %29 = arith.mulf %24, %24 : vector<2x1xf32>
    %30 = arith.subf %28, %29 : vector<2x1xf32>
    %cst_19 = arith.constant 0.000000e+00 : f32
    %31 = vector.broadcast %cst_19 : f32 to vector<2x1xf32>
    %32 = arith.maximumf %30, %31 : vector<2x1xf32>
    %cst_20 = arith.constant 9.99999974E-6 : f32
    %33 = vector.broadcast %cst_20 : f32 to vector<2x1xf32>
    %34 = arith.addf %32, %33 : vector<2x1xf32>
    %35 = math.rsqrt %34 : vector<2x1xf32>
    %c0_21 = arith.constant 0 : index
    %c0_22 = arith.constant 0 : index
    %36 = vector.load %arg7[%c0_21, %c0_22] : memref<1x768xf32, #tpu.memory_space<vmem>>, vector<1x768xf32>
    %37 = vector.broadcast %24 : vector<2x1xf32> to vector<2x768xf32>
    %38 = vector.broadcast %36 : vector<1x768xf32> to vector<2x768xf32>
    %39 = arith.mulf %37, %38 : vector<2x768xf32>
    %40 = arith.subf %20, %39 : vector<2x768xf32>
    %41 = vector.broadcast %35 : vector<2x1xf32> to vector<2x768xf32>
    %42 = arith.mulf %41, %40 : vector<2x768xf32>
    %c0_23 = arith.constant 0 : index
    %c0_24 = arith.constant 0 : index
    %43 = vector.load %arg8[%c0_23, %c0_24] : memref<1x768xf32, #tpu.memory_space<vmem>>, vector<1x768xf32>
    %44 = vector.broadcast %43 : vector<1x768xf32> to vector<2x768xf32>
    %45 = arith.addf %42, %44 : vector<2x768xf32>
    %cst_25 = arith.constant 0.000000e+00 : f32
    %46 = vector.broadcast %cst_25 : f32 to vector<2x768xf32>
    %47 = arith.maximumf %45, %46 : vector<2x768xf32>
    %48 = arith.truncf %47 : vector<2x768xf32> to vector<2x768xbf16>
    %c0_26 = arith.constant 0 : index
    %c0_27 = arith.constant 0 : index
    %49 = vector.load %arg9[%c0_26, %c0_27] : memref<768x8xbf16, #tpu.memory_space<vmem>>, vector<768x8xbf16>
    %cst_28 = arith.constant dense<0.000000e+00> : vector<2x8xf32>
    %50 = tpu.matmul %48, %49, %cst_28 {dimension_numbers = #tpu.dot_dimension_numbers<[1], [0], [0], [1], [0, 0, 1, 1], [], []>} : vector<2x768xbf16>, vector<768x8xbf16>, vector<2x8xf32> -> vector<2x8xf32>
    %c0_29 = arith.constant 0 : index
    %c0_30 = arith.constant 0 : index
    %51 = vector.load %arg10[%c0_29, %c0_30] : memref<1x8xf32, #tpu.memory_space<vmem>>, vector<1x8xf32>
    %52 = vector.broadcast %51 : vector<1x8xf32> to vector<2x8xf32>
    %53 = arith.addf %50, %52 : vector<2x8xf32>
    %c0_31 = arith.constant 0 : index
    %c0_32 = arith.constant 0 : index
    %54 = vector.load %arg11[%c0_31, %c0_32] : memref<2x8xf32, #tpu.memory_space<vmem>>, vector<2x8xf32>
    tpu.vector_store %arg11[%c0_31, %c0_32], %53 {strides = array<i32>} : memref<2x8xf32, #tpu.memory_space<vmem>>, vector<2x8xf32>,
    return
  }
}

</mosaic_0001>

<llo_original>
// kernel: restevit_head_forward.1
$region0: #{restevit_head_forward.1}
  #allocation0 [shape = 'u32[]', space=smem, size = 0x4, offset = 0x4, fixed_abs, tag = 'smem constant byte address 0x4 - core index']
  #allocation1 [shape = 'u32[144,128]{1,0:T(1,128)}', space=vmem, size = 0x12000, scoped, tag = 'internal scratch']
  %s0 = inlined_call_operand.vmem [shape: bf16[112,512], index: 0, kind: input, shape index: {}]
  %s1 = inlined_call_operand.vmem [shape: bf16[112,256], index: 1, kind: input, shape index: {}]
  %s2 = inlined_call_operand.vmem [shape: f32[2,112], index: 2, kind: input, shape index: {}]
  %s3 = inlined_call_operand.vmem [shape: bf16[512,768], index: 3, kind: input, shape index: {}]
  %s4 = inlined_call_operand.vmem [shape: bf16[256,768], index: 4, kind: input, shape index: {}]
  %s5 = inlined_call_operand.vmem [shape: f32[1,768], index: 5, kind: input, shape index: {}]
  %s6 = inlined_call_operand.vmem [shape: bf16[56,768], index: 6, kind: input, shape index: {}]
  %s7 = inlined_call_operand.vmem [shape: f32[1,768], index: 7, kind: input, shape index: {}]
  %s8 = inlined_call_operand.vmem [shape: f32[1,768], index: 8, kind: input, shape index: {}]
  %s9 = inlined_call_operand.vmem [shape: bf16[768,8], index: 9, kind: input, shape index: {}]
  %s10 = inlined_call_operand.vmem [shape: f32[1,8], index: 10, kind: input, shape index: {}]
  %s11 = inlined_call_operand.hbm [shape: f32[2,8], index: 11, kind: output, shape index: {}]
  %s12 = sld [smem:[#allocation0]]
  $region54: #{restevit_head_forward.1} parent=0
    _
  %s14 = ssub.s32 1, %s12
  %s15 = scalar_select 0, %s14, %s12
  $region1: #{restevit_head_forward.1} parent=0
    #allocation2 [shape = 'u8[1024]{0}', space=vmem, size = 0x400, scoped, tag = 'output window, operand 0, single buffered']
    #allocation3 [shape = 's32[1]{0}', space=sflag, size = 0x4, scoped, tag = 'scoped memory for restevit_head_forward.1']
    %16 = vsyncpa [#allocation3], 0
    // Predicated region
    $region2: #{restevit_head_forward.1} parent=1 // pred_check
      _
    $region3: #{restevit_head_forward.1} parent=1 // pred_check_branch
      %18 = sbr.rel (0) target = $region5
    $region4: #{restevit_head_forward.1} parent=1 // pred_region
      _
    $region5: #{restevit_head_forward.1} parent=1 // pred_fallthru
      _
    // Predicated region
    $region6: #{restevit_head_forward.1} parent=1 // pred_check
      _
    $region7: #{restevit_head_forward.1} parent=1 // pred_check_branch
      %20 = sbr.rel (0) target = $region9
    $region8: #{restevit_head_forward.1} parent=1 // pred_region
      _
    $region9: #{restevit_head_forward.1} parent=1 // pred_fallthru
      _
    // Predicated region
    $region10: #{restevit_head_forward.1} parent=1 // pred_check
      _
    $region11: #{restevit_head_forward.1} parent=1 // pred_check_branch
      %22 = sbr.rel (0) target = $region13
    $region12: #{restevit_head_forward.1} parent=1 // pred_region
      _
    $region13: #{restevit_head_forward.1} parent=1 // pred_fallthru
      _
    // Predicated region
    $region14: #{restevit_head_forward.1} parent=1 // pred_check
      _
    $region15: #{restevit_head_forward.1} parent=1 // pred_check_branch
      %24 = sbr.rel (0) target = $region17
    $region16: #{restevit_head_forward.1} parent=1 // pred_region
      _
    $region17: #{restevit_head_forward.1} parent=1 // pred_fallthru
      _
    // Predicated region
    $region18: #{restevit_head_forward.1} parent=1 // pred_check
      _
    $region19: #{restevit_head_forward.1} parent=1 // pred_check_branch
      %26 = sbr.rel (0) target = $region21
    $region20: #{restevit_head_forward.1} parent=1 // pred_region
      _
    $region21: #{restevit_head_forward.1} parent=1 // pred_fallthru
      _
    // Predicated region
    $region22: #{restevit_head_forward.1} parent=1 // pred_check
      _
    $region23: #{restevit_head_forward.1} parent=1 // pred_check_branch
      %28 = sbr.rel (0) target = $region25
    $region24: #{restevit_head_forward.1} parent=1 // pred_region
      _
    $region25: #{restevit_head_forward.1} parent=1 // pred_fallthru
      _
    // Predicated region
    $region26: #{restevit_head_forward.1} parent=1 // pred_check
      _
    $region27: #{restevit_head_forward.1} parent=1 // pred_check_branch
      %30 = sbr.rel (0) target = $region29
    $region28: #{restevit_head_forward.1} parent=1 // pred_region
      _
    $region29: #{restevit_head_forward.1} parent=1 // pred_fallthru
      _
    // Predicated region
    $region30: #{restevit_head_forward.1} parent=1 // pred_check
      _
    $region31: #{restevit_head_forward.1} parent=1 // pred_check_branch
      %32 = sbr.rel (0) target = $region33
    $region32: #{restevit_head_forward.1} parent=1 // pred_region
      _
    $region33: #{restevit_head_forward.1} parent=1 // pred_fallthru
      _
    // Predicated region
    $region34: #{restevit_head_forward.1} parent=1 // pred_check
      _
    $region35: #{restevit_head_forward.1} parent=1 // pred_check_branch
      %34 = sbr.rel (0) target = $region37
    $region36: #{restevit_head_forward.1} parent=1 // pred_region
      _
    $region37: #{restevit_head_forward.1} parent=1 // pred_fallthru
      _
    // Predicated region
    $region38: #{restevit_head_forward.1} parent=1 // pred_check
      _
    $region39: #{restevit_head_forward.1} parent=1 // pred_check_branch
      %36 = sbr.rel (0) target = $region41
    $region40: #{restevit_head_forward.1} parent=1 // pred_region
      _
    $region41: #{restevit_head_forward.1} parent=1 // pred_fallthru
      _
    // Predicated region
    $region42: #{restevit_head_forward.1} parent=1 // pred_check
      _
    $region43: #{restevit_head_forward.1} parent=1 // pred_check_branch
      %38 = sbr.rel (0) target = $region45
    $region44: #{restevit_head_forward.1} parent=1 // pred_region
      _
    $region45: #{restevit_head_forward.1} parent=1 // pred_fallthru
      _
    %v40 = vld [vmem:[%s0] sm:$0xff]
    %v41 = vld [vmem:[%s0 + $0x8] sm:$0xff]
    %v42 = vld [vmem:[%s0 + $0x10] sm:$0xff]
    %v43 = vld [vmem:[%s0 + $0x18] sm:$0xff]
    %v44 = vld [vmem:[%s0 + $0x20] sm:$0xff]
    %v45 = vld [vmem:[%s0 + $0x28] sm:$0xff]
    %v46 = vld [vmem:[%s0 + $0x30] sm:$0xff]
    %v47 = vld [vmem:[%s0 + $0x38] sm:$0xff]
    %v48 = vld [vmem:[%s0 + $0x40] sm:$0xff]
    %v49 = vld [vmem:[%s0 + $0x48] sm:$0xff]
    %v50 = vld [vmem:[%s0 + $0x50] sm:$0xff]
    %v51 = vld [vmem:[%s0 + $0x58] sm:$0xff]
    %v52 = vld [vmem:[%s0 + $0x60] sm:$0xff]
    %v53 = vld [vmem:[%s0 + $0x68] sm:$0xff]
    %v54 = vld [vmem:[%s0 + $0x70] sm:$0xff]
    %v55 = vld [vmem:[%s0 + $0x78] sm:$0xff]
    %v56 = vld [vmem:[%s0 + $0x80] sm:$0xff]
    %v57 = vld [vmem:[%s0 + $0x88] sm:$0xff]
    %v58 = vld [vmem:[%s0 + $0x90] sm:$0xff]
    %v59 = vld [vmem:[%s0 + $0x98] sm:$0xff]
    %v60 = vld [vmem:[%s0 + $0xa0] sm:$0xff]
    %v61 = vld [vmem:[%s0 + $0xa8] sm:$0xff]
    %v62 = vld [vmem:[%s0 + $0xb0] sm:$0xff]
    %v63 = vld [vmem:[%s0 + $0xb8] sm:$0xff]
    %v64 = vld [vmem:[%s0 + $0xc0] sm:$0xff]
    %v65 = vld [vmem:[%s0 + $0xc8] sm:$0xff]
    %v66 = vld [vmem:[%s0 + $0xd0] sm:$0xff]
    %v67 = vld [vmem:[%s0 + $0xd8] sm:$0xff]
    %v68 = vld [vmem:[%s3] sm:$0xff]
    %v69 = vld [vmem:[%s3 + $0x8] sm:$0xff]
    %v70 = vld [vmem:[%s3 + $0x10] sm:$0xff]
    %v71 = vld [vmem:[%s3 + $0x18] sm:$0xff]
    %v72 = vld [vmem:[%s3 + $0x20] sm:$0xff]
    %v73 = vld [vmem:[%s3 + $0x28] sm:$0xff]
    %v74 = vld [vmem:[%s3 + $0x30] sm:$0xff]
    %v75 = vld [vmem:[%s3 + $0x38] sm:$0xff]
    %v76 = vld [vmem:[%s3 + $0x40] sm:$0xff]
    %v77 = vld [vmem:[%s3 + $0x48] sm:$0xff]
    %v78 = vld [vmem:[%s3 + $0x50] sm:$0xff]
    %v79 = vld [vmem:[%s3 + $0x58] sm:$0xff]
    %v80 = vld [vmem:[%s3 + $0x60] sm:$0xff]
    %v81 = vld [vmem:[%s3 + $0x68] sm:$0xff]
    %v82 = vld [vmem:[%s3 + $0x70] sm:$0xff]
    %v83 = vld [vmem:[%s3 + $0x78] sm:$0xff]
    %v84 = vld [vmem:[%s3 + $0x80] sm:$0xff]
    %v85 = vld [vmem:[%s3 + $0x88] sm:$0xff]
    %v86 = vld [vmem:[%s3 + $0x90] sm:$0xff]
    %v87 = vld [vmem:[%s3 + $0x98] sm:$0xff]
    %v88 = vld [vmem:[%s3 + $0xa0] sm:$0xff]
    %v89 = vld [vmem:[%s3 + $0xa8] sm:$0xff]
    %v90 = vld [vmem:[%s3 + $0xb0] sm:$0xff]
    %v91 = vld [vmem:[%s3 + $0xb8] sm:$0xff]
    %v92 = vld [vmem:[%s3 + $0xc0] sm:$0xff]
    %v93 = vld [vmem:[%s3 + $0xc8] sm:$0xff]
    %v94 = vld [vmem:[%s3 + $0xd0] sm:$0xff]
    %v95 = vld [vmem:[%s3 + $0xd8] sm:$0xff]
    %v96 = vld [vmem:[%s3 + $0xe0] sm:$0xff]
    %v97 = vld [vmem:[%s3 + $0xe8] sm:$0xff]
    %v98 = vld [vmem:[%s3 + $0xf0] sm:$0xff]
    %v99 = vld [vmem:[%s3 + $0xf8] sm:$0xff]
    %v100 = vld [vmem:[%s3 + $0x100] sm:$0xff]
    %v101 = vld [vmem:[%s3 + $0x108] sm:$0xff]
    %v102 = vld [vmem:[%s3 + $0x110] sm:$0xff]
    %v103 = vld [vmem:[%s3 + $0x118] sm:$0xff]
    %v104 = vld [vmem:[%s3 + $0x120] sm:$0xff]
    %v105 = vld [vmem:[%s3 + $0x128] sm:$0xff]
    %v106 = vld [vmem:[%s3 + $0x130] sm:$0xff]
    %v107 = vld [vmem:[%s3 + $0x138] sm:$0xff]
    %v108 = vld [vmem:[%s3 + $0x140] sm:$0xff]
    %v109 = vld [vmem:[%s3 + $0x148] sm:$0xff]
    %v110 = vld [vmem:[%s3 + $0x150] sm:$0xff]
    %v111 = vld [vmem:[%s3 + $0x158] sm:$0xff]
    %v112 = vld [vmem:[%s3 + $0x160] sm:$0xff]
    %v113 = vld [vmem:[%s3 + $0x168] sm:$0xff]
    %v114 = vld [vmem:[%s3 + $0x170] sm:$0xff]
    %v115 = vld [vmem:[%s3 + $0x178] sm:$0xff]
    %v116 = vld [vmem:[%s3 + $0x180] sm:$0xff]
    %v117 = vld [vmem:[%s3 + $0x188] sm:$0xff]
    %v118 = vld [vmem:[%s3 + $0x190] sm:$0xff]
    %v119 = vld [vmem:[%s3 + $0x198] sm:$0xff]
    %v120 = vld [vmem:[%s3 + $0x1a0] sm:$0xff]
    %v121 = vld [vmem:[%s3 + $0x1a8] sm:$0xff]
    %v122 = vld [vmem:[%s3 + $0x1b0] sm:$0xff]
    %v123 = vld [vmem:[%s3 + $0x1b8] sm:$0xff]
    %v124 = vld [vmem:[%s3 + $0x1c0] sm:$0xff]
    %v125 = vld [vmem:[%s3 + $0x1c8] sm:$0xff]
    %v126 = vld [vmem:[%s3 + $0x1d0] sm:$0xff]
    %v127 = vld [vmem:[%s3 + $0x1d8] sm:$0xff]
    %v128 = vld [vmem:[%s3 + $0x1e0] sm:$0xff]
    %v129 = vld [vmem:[%s3 + $0x1e8] sm:$0xff]
    %v130 = vld [vmem:[%s3 + $0x1f0] sm:$0xff]
    %v131 = vld [vmem:[%s3 + $0x1f8] sm:$0xff]
    %v132 = vld [vmem:[%s3 + $0x200] sm:$0xff]
    %v133 = vld [vmem:[%s3 + $0x208] sm:$0xff]
    %v134 = vld [vmem:[%s3 + $0x210] sm:$0xff]
    %v135 = vld [vmem:[%s3 + $0x218] sm:$0xff]
    %v136 = vld [vmem:[%s3 + $0x220] sm:$0xff]
    %v137 = vld [vmem:[%s3 + $0x228] sm:$0xff]
    %v138 = vld [vmem:[%s3 + $0x230] sm:$0xff]
    %v139 = vld [vmem:[%s3 + $0x238] sm:$0xff]
    %v140 = vld [vmem:[%s3 + $0x240] sm:$0xff]
    %v141 = vld [vmem:[%s3 + $0x248] sm:$0xff]
    %v142 = vld [vmem:[%s3 + $0x250] sm:$0xff]
    %v143 = vld [vmem:[%s3 + $0x258] sm:$0xff]
    %v144 = vld [vmem:[%s3 + $0x260] sm:$0xff]
    %v145 = vld [vmem:[%s3 + $0x268] sm:$0xff]
    %v146 = vld [vmem:[%s3 + $0x270] sm:$0xff]
    %v147 = vld [vmem:[%s3 + $0x278] sm:$0xff]
    %v148 = vld [vmem:[%s3 + $0x280] sm:$0xff]
    %v149 = vld [vmem:[%s3 + $0x288] sm:$0xff]
    %v150 = vld [vmem:[%s3 + $0x290] sm:$0xff]
    %v151 = vld [vmem:[%s3 + $0x298] sm:$0xff]
    %v152 = vld [vmem:[%s3 + $0x2a0] sm:$0xff]
    %v153 = vld [vmem:[%s3 + $0x2a8] sm:$0xff]
    %v154 = vld [vmem:[%s3 + $0x2b0] sm:$0xff]
    %v155 = vld [vmem:[%s3 + $0x2b8] sm:$0xff]
    %v156 = vld [vmem:[%s3 + $0x2c0] sm:$0xff]
    %v157 = vld [vmem:[%s3 + $0x2c8] sm:$0xff]
    %v158 = vld [vmem:[%s3 + $0x2d0] sm:$0xff]
    %v159 = vld [vmem:[%s3 + $0x2d8] sm:$0xff]
    %v160 = vld [vmem:[%s3 + $0x2e0] sm:$0xff]
    %v161 = vld [vmem:[%s3 + $0x2e8] sm:$0xff]
    %v162 = vld [vmem:[%s3 + $0x2f0] sm:$0xff]
    %v163 = vld [vmem:[%s3 + $0x2f8] sm:$0xff]
    %v164 = vld [vmem:[%s3 + $0x300] sm:$0xff]
    %v165 = vld [vmem:[%s3 + $0x308] sm:$0xff]
    %v166 = vld [vmem:[%s3 + $0x310] sm:$0xff]
    %v167 = vld [vmem:[%s3 + $0x318] sm:$0xff]
    %v168 = vld [vmem:[%s3 + $0x320] sm:$0xff]
    %v169 = vld [vmem:[%s3 + $0x328] sm:$0xff]
    %v170 = vld [vmem:[%s3 + $0x330] sm:$0xff]
    %v171 = vld [vmem:[%s3 + $0x338] sm:$0xff]
    %v172 = vld [vmem:[%s3 + $0x340] sm:$0xff]
    %v173 = vld [vmem:[%s3 + $0x348] sm:$0xff]
    %v174 = vld [vmem:[%s3 + $0x350] sm:$0xff]
    %v175 = vld [vmem:[%s3 + $0x358] sm:$0xff]
    %v176 = vld [vmem:[%s3 + $0x360] sm:$0xff]
    %v177 = vld [vmem:[%s3 + $0x368] sm:$0xff]
    %v178 = vld [vmem:[%s3 + $0x370] sm:$0xff]
    %v179 = vld [vmem:[%s3 + $0x378] sm:$0xff]
    %v180 = vld [vmem:[%s3 + $0x380] sm:$0xff]
    %v181 = vld [vmem:[%s3 + $0x388] sm:$0xff]
    %v182 = vld [vmem:[%s3 + $0x390] sm:$0xff]
    %v183 = vld [vmem:[%s3 + $0x398] sm:$0xff]
    %v184 = vld [vmem:[%s3 + $0x3a0] sm:$0xff]
    %v185 = vld [vmem:[%s3 + $0x3a8] sm:$0xff]
    %v186 = vld [vmem:[%s3 + $0x3b0] sm:$0xff]
    %v187 = vld [vmem:[%s3 + $0x3b8] sm:$0xff]
    %v188 = vld [vmem:[%s3 + $0x3c0] sm:$0xff]
    %v189 = vld [vmem:[%s3 + $0x3c8] sm:$0xff]
    %v190 = vld [vmem:[%s3 + $0x3d0] sm:$0xff]
    %v191 = vld [vmem:[%s3 + $0x3d8] sm:$0xff]
    %v192 = vld [vmem:[%s3 + $0x3e0] sm:$0xff]
    %v193 = vld [vmem:[%s3 + $0x3e8] sm:$0xff]
    %v194 = vld [vmem:[%s3 + $0x3f0] sm:$0xff]
    %v195 = vld [vmem:[%s3 + $0x3f8] sm:$0xff]
    %v196 = vld [vmem:[%s3 + $0x400] sm:$0xff]
    %v197 = vld [vmem:[%s3 + $0x408] sm:$0xff]
    %v198 = vld [vmem:[%s3 + $0x410] sm:$0xff]
    %v199 = vld [vmem:[%s3 + $0x418] sm:$0xff]
    %v200 = vld [vmem:[%s3 + $0x420] sm:$0xff]
    %v201 = vld [vmem:[%s3 + $0x428] sm:$0xff]
    %v202 = vld [vmem:[%s3 + $0x430] sm:$0xff]
    %v203 = vld [vmem:[%s3 + $0x438] sm:$0xff]
    %v204 = vld [vmem:[%s3 + $0x440] sm:$0xff]
    %v205 = vld [vmem:[%s3 + $0x448] sm:$0xff]
    %v206 = vld [vmem:[%s3 + $0x450] sm:$0xff]
    %v207 = vld [vmem:[%s3 + $0x458] sm:$0xff]
    %v208 = vld [vmem:[%s3 + $0x460] sm:$0xff]
    %v209 = vld [vmem:[%s3 + $0x468] sm:$0xff]
    %v210 = vld [vmem:[%s3 + $0x470] sm:$0xff]
    %v211 = vld [vmem:[%s3 + $0x478] sm:$0xff]
    %v212 = vld [vmem:[%s3 + $0x480] sm:$0xff]
    %v213 = vld [vmem:[%s3 + $0x488] sm:$0xff]
    %v214 = vld [vmem:[%s3 + $0x490] sm:$0xff]
    %v215 = vld [vmem:[%s3 + $0x498] sm:$0xff]
    %v216 = vld [vmem:[%s3 + $0x4a0] sm:$0xff]
    %v217 = vld [vmem:[%s3 + $0x4a8] sm:$0xff]
    %v218 = vld [vmem:[%s3 + $0x4b0] sm:$0xff]
    %v219 = vld [vmem:[%s3 + $0x4b8] sm:$0xff]
    %v220 = vld [vmem:[%s3 + $0x4c0] sm:$0xff]
    %v221 = vld [vmem:[%s3 + $0x4c8] sm:$0xff]
    %v222 = vld [vmem:[%s3 + $0x4d0] sm:$0xff]
    %v223 = vld [vmem:[%s3 + $0x4d8] sm:$0xff]
    %v224 = vld [vmem:[%s3 + $0x4e0] sm:$0xff]
    %v225 = vld [vmem:[%s3 + $0x4e8] sm:$0xff]
    %v226 = vld [vmem:[%s3 + $0x4f0] sm:$0xff]
    %v227 = vld [vmem:[%s3 + $0x4f8] sm:$0xff]
    %v228 = vld [vmem:[%s3 + $0x500] sm:$0xff]
    %v229 = vld [vmem:[%s3 + $0x508] sm:$0xff]
    %v230 = vld [vmem:[%s3 + $0x510] sm:$0xff]
    %v231 = vld [vmem:[%s3 + $0x518] sm:$0xff]
    %v232 = vld [vmem:[%s3 + $0x520] sm:$0xff]
    %v233 = vld [vmem:[%s3 + $0x528] sm:$0xff]
    %v234 = vld [vmem:[%s3 + $0x530] sm:$0xff]
    %v235 = vld [vmem:[%s3 + $0x538] sm:$0xff]
    %v236 = vld [vmem:[%s3 + $0x540] sm:$0xff]
    %v237 = vld [vmem:[%s3 + $0x548] sm:$0xff]
    %v238 = vld [vmem:[%s3 + $0x550] sm:$0xff]
    %v239 = vld [vmem:[%s3 + $0x558] sm:$0xff]
    %v240 = vld [vmem:[%s3 + $0x560] sm:$0xff]
    %v241 = vld [vmem:[%s3 + $0x568] sm:$0xff]
    %v242 = vld [vmem:[%s3 + $0x570] sm:$0xff]
    %v243 = vld [vmem:[%s3 + $0x578] sm:$0xff]
    %v244 = vld [vmem:[%s3 + $0x580] sm:$0xff]
    %v245 = vld [vmem:[%s3 + $0x588] sm:$0xff]
    %v246 = vld [vmem:[%s3 + $0x590] sm:$0xff]
    %v247 = vld [vmem:[%s3 + $0x598] sm:$0xff]
    %v248 = vld [vmem:[%s3 + $0x5a0] sm:$0xff]
    %v249 = vld [vmem:[%s3 + $0x5a8] sm:$0xff]
    %v250 = vld [vmem:[%s3 + $0x5b0] sm:$0xff]
    %v251 = vld [vmem:[%s3 + $0x5b8] sm:$0xff]
    %v252 = vld [vmem:[%s3 + $0x5c0] sm:$0xff]
    %v253 = vld [vmem:[%s3 + $0x5c8] sm:$0xff]
    %v254 = vld [vmem:[%s3 + $0x5d0] sm:$0xff]
    %v255 = vld [vmem:[%s3 + $0x5d8] sm:$0xff]
    %v256 = vld [vmem:[%s3 + $0x5e0] sm:$0xff]
    %v257 = vld [vmem:[%s3 + $0x5e8] sm:$0xff]
    %v258 = vld [vmem:[%s3 + $0x5f0] sm:$0xff]
    %v259 = vld [vmem:[%s3 + $0x5f8] sm:$0xff]
    %v260 = vld [vmem:[%s1] sm:$0xff]
    %v261 = vld [vmem:[%s1 + $0x8] sm:$0xff]
    %v262 = vld [vmem:[%s1 + $0x10] sm:$0xff]
    %v263 = vld [vmem:[%s1 + $0x18] sm:$0xff]
    %v264 = vld [vmem:[%s1 + $0x20] sm:$0xff]
    %v265 = vld [vmem:[%s1 + $0x28] sm:$0xff]
    %v266 = vld [vmem:[%s1 + $0x30] sm:$0xff]
    %v267 = vld [vmem:[%s1 + $0x38] sm:$0xff]
    %v268 = vld [vmem:[%s1 + $0x40] sm:$0xff]
    %v269 = vld [vmem:[%s1 + $0x48] sm:$0xff]
    %v270 = vld [vmem:[%s1 + $0x50] sm:$0xff]
    %v271 = vld [vmem:[%s1 + $0x58] sm:$0xff]
    %v272 = vld [vmem:[%s1 + $0x60] sm:$0xff]
    %v273 = vld [vmem:[%s1 + $0x68] sm:$0xff]
    %v274 = vld [vmem:[%s4] sm:$0xff]
    %v275 = vld [vmem:[%s4 + $0x8] sm:$0xff]
    %v276 = vld [vmem:[%s4 + $0x10] sm:$0xff]
    %v277 = vld [vmem:[%s4 + $0x18] sm:$0xff]
    %v278 = vld [vmem:[%s4 + $0x20] sm:$0xff]
    %v279 = vld [vmem:[%s4 + $0x28] sm:$0xff]
    %v280 = vld [vmem:[%s4 + $0x30] sm:$0xff]
    %v281 = vld [vmem:[%s4 + $0x38] sm:$0xff]
    %v282 = vld [vmem:[%s4 + $0x40] sm:$0xff]
    %v283 = vld [vmem:[%s4 + $0x48] sm:$0xff]
    %v284 = vld [vmem:[%s4 + $0x50] sm:$0xff]
    %v285 = vld [vmem:[%s4 + $0x58] sm:$0xff]
    %v286 = vld [vmem:[%s4 + $0x60] sm:$0xff]
    %v287 = vld [vmem:[%s4 + $0x68] sm:$0xff]
    %v288 = vld [vmem:[%s4 + $0x70] sm:$0xff]
    %v289 = vld [vmem:[%s4 + $0x78] sm:$0xff]
    %v290 = vld [vmem:[%s4 + $0x80] sm:$0xff]
    %v291 = vld [vmem:[%s4 + $0x88] sm:$0xff]
    %v292 = vld [vmem:[%s4 + $0x90] sm:$0xff]
    %v293 = vld [vmem:[%s4 + $0x98] sm:$0xff]
    %v294 = vld [vmem:[%s4 + $0xa0] sm:$0xff]
    %v295 = vld [vmem:[%s4 + $0xa8] sm:$0xff]
    %v296 = vld [vmem:[%s4 + $0xb0] sm:$0xff]
    %v297 = vld [vmem:[%s4 + $0xb8] sm:$0xff]
    %v298 = vld [vmem:[%s4 + $0xc0] sm:$0xff]
    %v299 = vld [vmem:[%s4 + $0xc8] sm:$0xff]
    %v300 = vld [vmem:[%s4 + $0xd0] sm:$0xff]
    %v301 = vld [vmem:[%s4 + $0xd8] sm:$0xff]
    %v302 = vld [vmem:[%s4 + $0xe0] sm:$0xff]
    %v303 = vld [vmem:[%s4 + $0xe8] sm:$0xff]
    %v304 = vld [vmem:[%s4 + $0xf0] sm:$0xff]
    %v305 = vld [vmem:[%s4 + $0xf8] sm:$0xff]
    %v306 = vld [vmem:[%s4 + $0x100] sm:$0xff]
    %v307 = vld [vmem:[%s4 + $0x108] sm:$0xff]
    %v308 = vld [vmem:[%s4 + $0x110] sm:$0xff]
    %v309 = vld [vmem:[%s4 + $0x118] sm:$0xff]
    %v310 = vld [vmem:[%s4 + $0x120] sm:$0xff]
    %v311 = vld [vmem:[%s4 + $0x128] sm:$0xff]
    %v312 = vld [vmem:[%s4 + $0x130] sm:$0xff]
    %v313 = vld [vmem:[%s4 + $0x138] sm:$0xff]
    %v314 = vld [vmem:[%s4 + $0x140] sm:$0xff]
    %v315 = vld [vmem:[%s4 + $0x148] sm:$0xff]
    %v316 = vld [vmem:[%s4 + $0x150] sm:$0xff]
    %v317 = vld [vmem:[%s4 + $0x158] sm:$0xff]
    %v318 = vld [vmem:[%s4 + $0x160] sm:$0xff]
    %v319 = vld [vmem:[%s4 + $0x168] sm:$0xff]
    %v320 = vld [vmem:[%s4 + $0x170] sm:$0xff]
    %v321 = vld [vmem:[%s4 + $0x178] sm:$0xff]
    %v322 = vld [vmem:[%s4 + $0x180] sm:$0xff]
    %v323 = vld [vmem:[%s4 + $0x188] sm:$0xff]
    %v324 = vld [vmem:[%s4 + $0x190] sm:$0xff]
    %v325 = vld [vmem:[%s4 + $0x198] sm:$0xff]
    %v326 = vld [vmem:[%s4 + $0x1a0] sm:$0xff]
    %v327 = vld [vmem:[%s4 + $0x1a8] sm:$0xff]
    %v328 = vld [vmem:[%s4 + $0x1b0] sm:$0xff]
    %v329 = vld [vmem:[%s4 + $0x1b8] sm:$0xff]
    %v330 = vld [vmem:[%s4 + $0x1c0] sm:$0xff]
    %v331 = vld [vmem:[%s4 + $0x1c8] sm:$0xff]
    %v332 = vld [vmem:[%s4 + $0x1d0] sm:$0xff]
    %v333 = vld [vmem:[%s4 + $0x1d8] sm:$0xff]
    %v334 = vld [vmem:[%s4 + $0x1e0] sm:$0xff]
    %v335 = vld [vmem:[%s4 + $0x1e8] sm:$0xff]
    %v336 = vld [vmem:[%s4 + $0x1f0] sm:$0xff]
    %v337 = vld [vmem:[%s4 + $0x1f8] sm:$0xff]
    %v338 = vld [vmem:[%s4 + $0x200] sm:$0xff]
    %v339 = vld [vmem:[%s4 + $0x208] sm:$0xff]
    %v340 = vld [vmem:[%s4 + $0x210] sm:$0xff]
    %v341 = vld [vmem:[%s4 + $0x218] sm:$0xff]
    %v342 = vld [vmem:[%s4 + $0x220] sm:$0xff]
    %v343 = vld [vmem:[%s4 + $0x228] sm:$0xff]
    %v344 = vld [vmem:[%s4 + $0x230] sm:$0xff]
    %v345 = vld [vmem:[%s4 + $0x238] sm:$0xff]
    %v346 = vld [vmem:[%s4 + $0x240] sm:$0xff]
    %v347 = vld [vmem:[%s4 + $0x248] sm:$0xff]
    %v348 = vld [vmem:[%s4 + $0x250] sm:$0xff]
    %v349 = vld [vmem:[%s4 + $0x258] sm:$0xff]
    %v350 = vld [vmem:[%s4 + $0x260] sm:$0xff]
    %v351 = vld [vmem:[%s4 + $0x268] sm:$0xff]
    %v352 = vld [vmem:[%s4 + $0x270] sm:$0xff]
    %v353 = vld [vmem:[%s4 + $0x278] sm:$0xff]
    %v354 = vld [vmem:[%s4 + $0x280] sm:$0xff]
    %v355 = vld [vmem:[%s4 + $0x288] sm:$0xff]
    %v356 = vld [vmem:[%s4 + $0x290] sm:$0xff]
    %v357 = vld [vmem:[%s4 + $0x298] sm:$0xff]
    %v358 = vld [vmem:[%s4 + $0x2a0] sm:$0xff]
    %v359 = vld [vmem:[%s4 + $0x2a8] sm:$0xff]
    %v360 = vld [vmem:[%s4 + $0x2b0] sm:$0xff]
    %v361 = vld [vmem:[%s4 + $0x2b8] sm:$0xff]
    %v362 = vld [vmem:[%s4 + $0x2c0] sm:$0xff]
    %v363 = vld [vmem:[%s4 + $0x2c8] sm:$0xff]
    %v364 = vld [vmem:[%s4 + $0x2d0] sm:$0xff]
    %v365 = vld [vmem:[%s4 + $0x2d8] sm:$0xff]
    %v366 = vld [vmem:[%s4 + $0x2e0] sm:$0xff]
    %v367 = vld [vmem:[%s4 + $0x2e8] sm:$0xff]
    %v368 = vld [vmem:[%s4 + $0x2f0] sm:$0xff]
    %v369 = vld [vmem:[%s4 + $0x2f8] sm:$0xff]
    %v384 = vunpack.c.l.b16 %v260
    %v385 = vunpack.c.h.b16 %v260
    %v386 = vunpack.c.l.b16 %v261
    %v387 = vunpack.c.h.b16 %v261
    %v388 = vunpack.c.l.b16 %v262
    %v389 = vunpack.c.h.b16 %v262
    %v390 = vunpack.c.l.b16 %v263
    %v391 = vunpack.c.h.b16 %v263
    %v392 = vunpack.c.l.b16 %v264
    %v393 = vunpack.c.h.b16 %v264
    %v394 = vunpack.c.l.b16 %v265
    %v395 = vunpack.c.h.b16 %v265
    %v396 = vunpack.c.l.b16 %v266
    %v397 = vunpack.c.h.b16 %v266
    %v398 = vunpack.c.l.b16 %v267
    %v399 = vunpack.c.h.b16 %v267
    %v400 = vunpack.c.l.b16 %v268
    %v401 = vunpack.c.h.b16 %v268
    %v402 = vunpack.c.l.b16 %v269
    %v403 = vunpack.c.h.b16 %v269
    %v404 = vunpack.c.l.b16 %v270
    %v405 = vunpack.c.h.b16 %v270
    %v406 = vunpack.c.l.b16 %v271
    %v407 = vunpack.c.h.b16 %v271
    %v408 = vunpack.c.l.b16 %v272
    %v409 = vunpack.c.h.b16 %v272
    %v410 = vunpack.c.l.b16 %v273
    %v411 = vunpack.c.h.b16 %v273
    %v412 = vpack.c.b16 %v386, %v384
    %v413 = vpack.c.b16 %v387, %v385
    %v414 = vpack.c.b16 %v390, %v388
    %v415 = vpack.c.b16 %v391, %v389
    %v416 = vpack.c.b16 %v394, %v392
    %v417 = vpack.c.b16 %v395, %v393
    %v418 = vpack.c.b16 %v398, %v396
    %v419 = vpack.c.b16 %v399, %v397
    %v420 = vpack.c.b16 %v402, %v400
    %v421 = vpack.c.b16 %v403, %v401
    %v422 = vpack.c.b16 %v406, %v404
    %v423 = vpack.c.b16 %v407, %v405
    %v424 = vpack.c.b16 %v410, %v408
    %v425 = vpack.c.b16 %v411, %v409
    %v536 = vunpack.c.l.b16 %v274
    %v537 = vunpack.c.h.b16 %v274
    %v538 = vunpack.c.l.b16 %v275
    %v539 = vunpack.c.h.b16 %v275
    %v540 = vunpack.c.l.b16 %v276
    %v541 = vunpack.c.h.b16 %v276
    %v542 = vunpack.c.l.b16 %v277
    %v543 = vunpack.c.h.b16 %v277
    %v544 = vunpack.c.l.b16 %v278
    %v545 = vunpack.c.h.b16 %v278
    %v546 = vunpack.c.l.b16 %v279
    %v547 = vunpack.c.h.b16 %v279
    %v548 = vunpack.c.l.b16 %v280
    %v549 = vunpack.c.h.b16 %v280
    %v550 = vunpack.c.l.b16 %v281
    %v551 = vunpack.c.h.b16 %v281
    %v552 = vunpack.c.l.b16 %v282
    %v553 = vunpack.c.h.b16 %v282
    %v554 = vunpack.c.l.b16 %v283
    %v555 = vunpack.c.h.b16 %v283
    %v556 = vunpack.c.l.b16 %v284
    %v557 = vunpack.c.h.b16 %v284
    %v558 = vunpack.c.l.b16 %v285
    %v559 = vunpack.c.h.b16 %v285
    %v560 = vunpack.c.l.b16 %v286
    %v561 = vunpack.c.h.b16 %v286
    %v562 = vunpack.c.l.b16 %v287
    %v563 = vunpack.c.h.b16 %v287
    %v564 = vunpack.c.l.b16 %v288
    %v565 = vunpack.c.h.b16 %v288
    %v566 = vunpack.c.l.b16 %v289
    %v567 = vunpack.c.h.b16 %v289
    %v568 = vunpack.c.l.b16 %v290
    %v569 = vunpack.c.h.b16 %v290
    %v570 = vunpack.c.l.b16 %v291
    %v571 = vunpack.c.h.b16 %v291
    %v572 = vunpack.c.l.b16 %v292
    %v573 = vunpack.c.h.b16 %v292
    %v574 = vunpack.c.l.b16 %v293
    %v575 = vunpack.c.h.b16 %v293
    %v576 = vunpack.c.l.b16 %v294
    %v577 = vunpack.c.h.b16 %v294
    %v578 = vunpack.c.l.b16 %v295
    %v579 = vunpack.c.h.b16 %v295
    %v580 = vunpack.c.l.b16 %v296
    %v581 = vunpack.c.h.b16 %v296
    %v582 = vunpack.c.l.b16 %v297
    %v583 = vunpack.c.h.b16 %v297
    %v584 = vunpack.c.l.b16 %v298
    %v585 = vunpack.c.h.b16 %v298
    %v586 = vunpack.c.l.b16 %v299
    %v587 = vunpack.c.h.b16 %v299
    %v588 = vunpack.c.l.b16 %v300
    %v589 = vunpack.c.h.b16 %v300
    %v590 = vunpack.c.l.b16 %v301
    %v591 = vunpack.c.h.b16 %v301
    %v592 = vunpack.c.l.b16 %v302
    %v593 = vunpack.c.h.b16 %v302
    %v594 = vunpack.c.l.b16 %v303
    %v595 = vunpack.c.h.b16 %v303
    %v596 = vunpack.c.l.b16 %v304
    %v597 = vunpack.c.h.b16 %v304
    %v598 = vunpack.c.l.b16 %v305
    %v599 = vunpack.c.h.b16 %v305
    %v600 = vunpack.c.l.b16 %v306
    %v601 = vunpack.c.h.b16 %v306
    %v602 = vunpack.c.l.b16 %v307
    %v603 = vunpack.c.h.b16 %v307
    %v604 = vunpack.c.l.b16 %v308
    %v605 = vunpack.c.h.b16 %v308
    %v606 = vunpack.c.l.b16 %v309
    %v607 = vunpack.c.h.b16 %v309
    %v608 = vunpack.c.l.b16 %v310
    %v609 = vunpack.c.h.b16 %v310
    %v610 = vunpack.c.l.b16 %v311
    %v611 = vunpack.c.h.b16 %v311
    %v612 = vunpack.c.l.b16 %v312
    %v613 = vunpack.c.h.b16 %v312
    %v614 = vunpack.c.l.b16 %v313
    %v615 = vunpack.c.h.b16 %v313
    %v616 = vunpack.c.l.b16 %v314
    %v617 = vunpack.c.h.b16 %v314
    %v618 = vunpack.c.l.b16 %v315
    %v619 = vunpack.c.h.b16 %v315
    %v620 = vunpack.c.l.b16 %v316
    %v621 = vunpack.c.h.b16 %v316
    %v622 = vunpack.c.l.b16 %v317
    %v623 = vunpack.c.h.b16 %v317
    %v624 = vunpack.c.l.b16 %v318
    %v625 = vunpack.c.h.b16 %v318
    %v626 = vunpack.c.l.b16 %v319
    %v627 = vunpack.c.h.b16 %v319
    %v628 = vunpack.c.l.b16 %v320
    %v629 = vunpack.c.h.b16 %v320
    %v630 = vunpack.c.l.b16 %v321
    %v631 = vunpack.c.h.b16 %v321
    %v632 = vunpack.c.l.b16 %v322
    %v633 = vunpack.c.h.b16 %v322
    %v634 = vunpack.c.l.b16 %v323
    %v635 = vunpack.c.h.b16 %v323
    %v636 = vunpack.c.l.b16 %v324
    %v637 = vunpack.c.h.b16 %v324
    %v638 = vunpack.c.l.b16 %v325
    %v639 = vunpack.c.h.b16 %v325
    %v640 = vunpack.c.l.b16 %v326
    %v641 = vunpack.c.h.b16 %v326
    %v642 = vunpack.c.l.b16 %v327
    %v643 = vunpack.c.h.b16 %v327
    %v644 = vunpack.c.l.b16 %v328
    %v645 = vunpack.c.h.b16 %v328
    %v646 = vunpack.c.l.b16 %v329
    %v647 = vunpack.c.h.b16 %v329
    %v648 = vunpack.c.l.b16 %v330
    %v649 = vunpack.c.h.b16 %v330
    %v650 = vunpack.c.l.b16 %v331
    %v651 = vunpack.c.h.b16 %v331
    %v652 = vunpack.c.l.b16 %v332
    %v653 = vunpack.c.h.b16 %v332
    %v654 = vunpack.c.l.b16 %v333
    %v655 = vunpack.c.h.b16 %v333
    %v656 = vunpack.c.l.b16 %v334
    %v657 = vunpack.c.h.b16 %v334
    %v658 = vunpack.c.l.b16 %v335
    %v659 = vunpack.c.h.b16 %v335
    %v660 = vunpack.c.l.b16 %v336
    %v661 = vunpack.c.h.b16 %v336
    %v662 = vunpack.c.l.b16 %v337
    %v663 = vunpack.c.h.b16 %v337
    %v664 = vunpack.c.l.b16 %v338
    %v665 = vunpack.c.h.b16 %v338
    %v666 = vunpack.c.l.b16 %v339
    %v667 = vunpack.c.h.b16 %v339
    %v668 = vunpack.c.l.b16 %v340
    %v669 = vunpack.c.h.b16 %v340
    %v670 = vunpack.c.l.b16 %v341
    %v671 = vunpack.c.h.b16 %v341
    %v672 = vunpack.c.l.b16 %v342
    %v673 = vunpack.c.h.b16 %v342
    %v674 = vunpack.c.l.b16 %v343
    %v675 = vunpack.c.h.b16 %v343
    %v676 = vunpack.c.l.b16 %v344
    %v677 = vunpack.c.h.b16 %v344
    %v678 = vunpack.c.l.b16 %v345
    %v679 = vunpack.c.h.b16 %v345
    %v680 = vunpack.c.l.b16 %v346
    %v681 = vunpack.c.h.b16 %v346
    %v682 = vunpack.c.l.b16 %v347
    %v683 = vunpack.c.h.b16 %v347
    %v684 = vunpack.c.l.b16 %v348
    %v685 = vunpack.c.h.b16 %v348
    %v686 = vunpack.c.l.b16 %v349
    %v687 = vunpack.c.h.b16 %v349
    %v688 = vunpack.c.l.b16 %v350
    %v689 = vunpack.c.h.b16 %v350
    %v690 = vunpack.c.l.b16 %v351
    %v691 = vunpack.c.h.b16 %v351
    %v692 = vunpack.c.l.b16 %v352
    %v693 = vunpack.c.h.b16 %v352
    %v694 = vunpack.c.l.b16 %v353
    %v695 = vunpack.c.h.b16 %v353
    %v696 = vunpack.c.l.b16 %v354
    %v697 = vunpack.c.h.b16 %v354
    %v698 = vunpack.c.l.b16 %v355
    %v699 = vunpack.c.h.b16 %v355
    %v700 = vunpack.c.l.b16 %v356
    %v701 = vunpack.c.h.b16 %v356
    %v702 = vunpack.c.l.b16 %v357
    %v703 = vunpack.c.h.b16 %v357
    %v704 = vunpack.c.l.b16 %v358
    %v705 = vunpack.c.h.b16 %v358
    %v706 = vunpack.c.l.b16 %v359
    %v707 = vunpack.c.h.b16 %v359
    %v708 = vunpack.c.l.b16 %v360
    %v709 = vunpack.c.h.b16 %v360
    %v710 = vunpack.c.l.b16 %v361
    %v711 = vunpack.c.h.b16 %v361
    %v712 = vunpack.c.l.b16 %v362
    %v713 = vunpack.c.h.b16 %v362
    %v714 = vunpack.c.l.b16 %v363
    %v715 = vunpack.c.h.b16 %v363
    %v716 = vunpack.c.l.b16 %v364
    %v717 = vunpack.c.h.b16 %v364
    %v718 = vunpack.c.l.b16 %v365
    %v719 = vunpack.c.h.b16 %v365
    %v720 = vunpack.c.l.b16 %v366
    %v721 = vunpack.c.h.b16 %v366
    %v722 = vunpack.c.l.b16 %v367
    %v723 = vunpack.c.h.b16 %v367
    %v724 = vunpack.c.l.b16 %v368
    %v725 = vunpack.c.h.b16 %v368
    %v726 = vunpack.c.l.b16 %v369
    %v727 = vunpack.c.h.b16 %v369
    %v728 = vpack.c.b16 %v542, %v536
    %v729 = vpack.c.b16 %v543, %v537
    %v730 = vpack.c.b16 %v544, %v538
    %v731 = vpack.c.b16 %v545, %v539
    %v732 = vpack.c.b16 %v546, %v540
    %v733 = vpack.c.b16 %v547, %v541
    %v734 = vpack.c.b16 %v554, %v548
    %v735 = vpack.c.b16 %v555, %v549
    %v736 = vpack.c.b16 %v556, %v550
    %v737 = vpack.c.b16 %v557, %v551
    %v738 = vpack.c.b16 %v558, %v552
    %v739 = vpack.c.b16 %v559, %v553
    %v740 = vpack.c.b16 %v566, %v560
    %v741 = vpack.c.b16 %v567, %v561
    %v742 = vpack.c.b16 %v568, %v562
    %v743 = vpack.c.b16 %v569, %v563
    %v744 = vpack.c.b16 %v570, %v564
    %v745 = vpack.c.b16 %v571, %v565
    %v746 = vpack.c.b16 %v578, %v572
    %v747 = vpack.c.b16 %v579, %v573
    %v748 = vpack.c.b16 %v580, %v574
    %v749 = vpack.c.b16 %v581, %v575
    %v750 = vpack.c.b16 %v582, %v576
    %v751 = vpack.c.b16 %v583, %v577
    %v752 = vpack.c.b16 %v590, %v584
    %v753 = vpack.c.b16 %v591, %v585
    %v754 = vpack.c.b16 %v592, %v586
    %v755 = vpack.c.b16 %v593, %v587
    %v756 = vpack.c.b16 %v594, %v588
    %v757 = vpack.c.b16 %v595, %v589
    %v758 = vpack.c.b16 %v602, %v596
    %v759 = vpack.c.b16 %v603, %v597
    %v760 = vpack.c.b16 %v604, %v598
    %v761 = vpack.c.b16 %v605, %v599
    %v762 = vpack.c.b16 %v606, %v600
    %v763 = vpack.c.b16 %v607, %v601
    %v764 = vpack.c.b16 %v614, %v608
    %v765 = vpack.c.b16 %v615, %v609
    %v766 = vpack.c.b16 %v616, %v610
    %v767 = vpack.c.b16 %v617, %v611
    %v768 = vpack.c.b16 %v618, %v612
    %v769 = vpack.c.b16 %v619, %v613
    %v770 = vpack.c.b16 %v626, %v620
    %v771 = vpack.c.b16 %v627, %v621
    %v772 = vpack.c.b16 %v628, %v622
    %v773 = vpack.c.b16 %v629, %v623
    %v774 = vpack.c.b16 %v630, %v624
    %v775 = vpack.c.b16 %v631, %v625
    %v776 = vpack.c.b16 %v638, %v632
    %v777 = vpack.c.b16 %v639, %v633
    %v778 = vpack.c.b16 %v640, %v634
    %v779 = vpack.c.b16 %v641, %v635
    %v780 = vpack.c.b16 %v642, %v636
    %v781 = vpack.c.b16 %v643, %v637
    %v782 = vpack.c.b16 %v650, %v644
    %v783 = vpack.c.b16 %v651, %v645
    %v784 = vpack.c.b16 %v652, %v646
    %v785 = vpack.c.b16 %v653, %v647
    %v786 = vpack.c.b16 %v654, %v648
    %v787 = vpack.c.b16 %v655, %v649
    %v788 = vpack.c.b16 %v662, %v656
    %v789 = vpack.c.b16 %v663, %v657
    %v790 = vpack.c.b16 %v664, %v658
    %v791 = vpack.c.b16 %v665, %v659
    %v792 = vpack.c.b16 %v666, %v660
    %v793 = vpack.c.b16 %v667, %v661
    %v794 = vpack.c.b16 %v674, %v668
    %v795 = vpack.c.b16 %v675, %v669
    %v796 = vpack.c.b16 %v676, %v670
    %v797 = vpack.c.b16 %v677, %v671
    %v798 = vpack.c.b16 %v678, %v672
    %v799 = vpack.c.b16 %v679, %v673
    %v800 = vpack.c.b16 %v686, %v680
    %v801 = vpack.c.b16 %v687, %v681
    %v802 = vpack.c.b16 %v688, %v682
    %v803 = vpack.c.b16 %v689, %v683
    %v804 = vpack.c.b16 %v690, %v684
    %v805 = vpack.c.b16 %v691, %v685
    %v806 = vpack.c.b16 %v698, %v692
    %v807 = vpack.c.b16 %v699, %v693
    %v808 = vpack.c.b16 %v700, %v694
    %v809 = vpack.c.b16 %v701, %v695
    %v810 = vpack.c.b16 %v702, %v696
    %v811 = vpack.c.b16 %v703, %v697
    %v812 = vpack.c.b16 %v710, %v704
    %v813 = vpack.c.b16 %v711, %v705
    %v814 = vpack.c.b16 %v712, %v706
    %v815 = vpack.c.b16 %v713, %v707
    %v816 = vpack.c.b16 %v714, %v708
    %v817 = vpack.c.b16 %v715, %v709
    %v818 = vpack.c.b16 %v722, %v716
    %v819 = vpack.c.b16 %v723, %v717
    %v820 = vpack.c.b16 %v724, %v718
    %v821 = vpack.c.b16 %v725, %v719
    %v822 = vpack.c.b16 %v726, %v720
    %v823 = vpack.c.b16 %v727, %v721
    %920 = vmatprep.subr.bf16.mxu0 %v729
    %921 = vmatpush1.bf16.msra.mxu0 %v728
    %922 = vmatprep.subr.bf16.mxu0 %v735
    %923 = vmatpush1.bf16.msra.mxu0 %v734
    %924 = vmatprep.subr.bf16.mxu0 %v741
    %925 = vmatpush1.bf16.msra.mxu0 %v740
    %926 = vmatprep.subr.bf16.mxu0 %v747
    %927 = vmatpush1.bf16.msra.mxu0 %v746
    %928 = vmatprep.subr.bf16.mxu0 %v753
    %929 = vmatpush1.bf16.msra.mxu0 %v752
    %930 = vmatprep.subr.bf16.mxu0 %v759
    %931 = vmatpush1.bf16.msra.mxu0 %v758
    %932 = vmatprep.subr.bf16.mxu0 %v765
    %933 = vmatpush1.bf16.msra.mxu0 %v764
    %934 = vmatprep.subr.bf16.mxu0 %v771
    %935 = vmatpush1.bf16.msra.mxu0 %v770
    %936 = vmatprep.subr.bf16.mxu0 %v777
    %937 = vmatpush1.bf16.msra.mxu0 %v776
    %938 = vmatprep.subr.bf16.mxu0 %v783
    %939 = vmatpush1.bf16.msra.mxu0 %v782
    %940 = vmatprep.subr.bf16.mxu0 %v789
    %941 = vmatpush1.bf16.msra.mxu0 %v788
    %942 = vmatprep.subr.bf16.mxu0 %v795
    %943 = vmatpush1.bf16.msra.mxu0 %v794
    %944 = vmatprep.subr.bf16.mxu0 %v801
    %945 = vmatpush1.bf16.msra.mxu0 %v800
    %946 = vmatprep.subr.bf16.mxu0 %v807
    %947 = vmatpush1.bf16.msra.mxu0 %v806
    %948 = vmatprep.subr.bf16.mxu0 %v813
    %949 = vmatpush1.bf16.msra.mxu0 %v812
    %950 = vmatprep.subr.bf16.mxu0 %v819
    %951 = vmatpush1.bf16.msra.mxu0 %v818
    %952 = vmatprep.mubr.bf16.mxu0 %v413
    %953 = vmatmul.mubr.bf16.gmra.mrb[0].mxu0 %v412
    %v954 = vpop.f32.mrb[0].mxu0
    %v955 = vadd.f32 0.0, %v954
    %v956 = vpop.f32.mrb[0].mxu0
    %v957 = vadd.f32 0.0, %v956
    %v958 = vpop.f32.mrb[0].mxu0
    %v959 = vadd.f32 0.0, %v958
    %v960 = vpop.f32.mrb[0].mxu0
    %v961 = vadd.f32 0.0, %v960
    %962 = vmatprep.mubr.bf16.mxu0 %v415
    %963 = vmatmul.mubr.bf16.gmra.mrb[0].mxu0 %v414
    %v964 = vpop.f32.mrb[0].mxu0
    %v965 = vadd.f32 0.0, %v964
    %v966 = vpop.f32.mrb[0].mxu0
    %v967 = vadd.f32 0.0, %v966
    %v968 = vpop.f32.mrb[0].mxu0
    %v969 = vadd.f32 0.0, %v968
    %v970 = vpop.f32.mrb[0].mxu0
    %v971 = vadd.f32 0.0, %v970
    %972 = vmatprep.mubr.bf16.mxu0 %v417
    %973 = vmatmul.mubr.bf16.gmra.mrb[0].mxu0 %v416
    %v974 = vpop.f32.mrb[0].mxu0
    %v975 = vadd.f32 0.0, %v974
    %v976 = vpop.f32.mrb[0].mxu0
    %v977 = vadd.f32 0.0, %v976
    %v978 = vpop.f32.mrb[0].mxu0
    %v979 = vadd.f32 0.0, %v978
    %v980 = vpop.f32.mrb[0].mxu0
    %v981 = vadd.f32 0.0, %v980
    %982 = vmatprep.mubr.bf16.mxu0 %v419
    %983 = vmatmul.mubr.bf16.gmra.mrb[0].mxu0 %v418
    %v984 = vpop.f32.mrb[0].mxu0
    %v985 = vadd.f32 0.0, %v984
    %v986 = vpop.f32.mrb[0].mxu0
    %v987 = vadd.f32 0.0, %v986
    %v988 = vpop.f32.mrb[0].mxu0
    %v989 = vadd.f32 0.0, %v988
    %v990 = vpop.f32.mrb[0].mxu0
    %v991 = vadd.f32 0.0, %v990
    %992 = vmatprep.mubr.bf16.mxu0 %v421
    %993 = vmatmul.mubr.bf16.gmra.mrb[0].mxu0 %v420
    %v994 = vpop.f32.mrb[0].mxu0
    %v995 = vadd.f32 0.0, %v994
    %v996 = vpop.f32.mrb[0].mxu0
    %v997 = vadd.f32 0.0, %v996
    %v998 = vpop.f32.mrb[0].mxu0
    %v999 = vadd.f32 0.0, %v998
    %v1000 = vpop.f32.mrb[0].mxu0
    %v1001 = vadd.f32 0.0, %v1000
    %1002 = vmatprep.mubr.bf16.mxu0 %v423
    %1003 = vmatmul.mubr.bf16.gmra.mrb[0].mxu0 %v422
    %v1004 = vpop.f32.mrb[0].mxu0
    %v1005 = vadd.f32 0.0, %v1004
    %v1006 = vpop.f32.mrb[0].mxu0
    %v1007 = vadd.f32 0.0, %v1006
    %v1008 = vpop.f32.mrb[0].mxu0
    %v1009 = vadd.f32 0.0, %v1008
    %v1010 = vpop.f32.mrb[0].mxu0
    %v1011 = vadd.f32 0.0, %v1010
    %1012 = vmatprep.mubr.bf16.mxu0 %v425
    %1013 = vmatmul.mubr.bf16.gmra.mrb[0].mxu0 %v424
    %v1014 = vpop.f32.mrb[0].mxu0
    %v1015 = vadd.f32 0.0, %v1014
    %v1016 = vpop.f32.mrb[0].mxu0
    %v1017 = vadd.f32 0.0, %v1016
    %v1018 = vpop.f32.mrb[0].mxu0
    %v1019 = vadd.f32 0.0, %v1018
    %v1020 = vpop.f32.mrb[0].mxu0
    %v1021 = vadd.f32 0.0, %v1020
    %1022 = vdwg.mxu0
    %1023 = vmatprep.subr.bf16.mxu0 %v731
    %1024 = vmatpush1.bf16.msra.mxu0 %v730
    %1025 = vmatprep.subr.bf16.mxu0 %v737
    %1026 = vmatpush1.bf16.msra.mxu0 %v736
    %1027 = vmatprep.subr.bf16.mxu0 %v743
    %1028 = vmatpush1.bf16.msra.mxu0 %v742
    %1029 = vmatprep.subr.bf16.mxu0 %v749
    %1030 = vmatpush1.bf16.msra.mxu0 %v748
    %1031 = vmatprep.subr.bf16.mxu0 %v755
    %1032 = vmatpush1.bf16.msra.mxu0 %v754
    %1033 = vmatprep.subr.bf16.mxu0 %v761
    %1034 = vmatpush1.bf16.msra.mxu0 %v760
    %1035 = vmatprep.subr.bf16.mxu0 %v767
    %1036 = vmatpush1.bf16.msra.mxu0 %v766
    %1037 = vmatprep.subr.bf16.mxu0 %v773
    %1038 = vmatpush1.bf16.msra.mxu0 %v772
    %1039 = vmatprep.subr.bf16.mxu0 %v779
    %1040 = vmatpush1.bf16.msra.mxu0 %v778
    %1041 = vmatprep.subr.bf16.mxu0 %v785
    %1042 = vmatpush1.bf16.msra.mxu0 %v784
    %1043 = vmatprep.subr.bf16.mxu0 %v791
    %1044 = vmatpush1.bf16.msra.mxu0 %v790
    %1045 = vmatprep.subr.bf16.mxu0 %v797
    %1046 = vmatpush1.bf16.msra.mxu0 %v796
    %1047 = vmatprep.subr.bf16.mxu0 %v803
    %1048 = vmatpush1.bf16.msra.mxu0 %v802
    %1049 = vmatprep.subr.bf16.mxu0 %v809
    %1050 = vmatpush1.bf16.msra.mxu0 %v808
    %1051 = vmatprep.subr.bf16.mxu0 %v815
    %1052 = vmatpush1.bf16.msra.mxu0 %v814
    %1053 = vmatprep.subr.bf16.mxu0 %v821
    %1054 = vmatpush1.bf16.msra.mxu0 %v820
    %1055 = vmatprep.mubr.bf16.mxu0 %v413
    %1056 = vmatmul.mubr.bf16.gmra.mrb[0].mxu0 %v412
    %v1057 = vpop.f32.mrb[0].mxu0
    %v1058 = vadd.f32 0.0, %v1057
    %v1059 = vpop.f32.mrb[0].mxu0
    %v1060 = vadd.f32 0.0, %v1059
    %v1061 = vpop.f32.mrb[0].mxu0
    %v1062 = vadd.f32 0.0, %v1061
    %v1063 = vpop.f32.mrb[0].mxu0
    %v1064 = vadd.f32 0.0, %v1063
    %1065 = vmatprep.mubr.bf16.mxu0 %v415
    %1066 = vmatmul.mubr.bf16.gmra.mrb[0].mxu0 %v414
    %v1067 = vpop.f32.mrb[0].mxu0
    %v1068 = vadd.f32 0.0, %v1067
    %v1069 = vpop.f32.mrb[0].mxu0
    %v1070 = vadd.f32 0.0, %v1069
    %v1071 = vpop.f32.mrb[0].mxu0
    %v1072 = vadd.f32 0.0, %v1071
    %v1073 = vpop.f32.mrb[0].mxu0
    %v1074 = vadd.f32 0.0, %v1073
    %1075 = vmatprep.mubr.bf16.mxu0 %v417
    %1076 = vmatmul.mubr.bf16.gmra.mrb[0].mxu0 %v416
    %v1077 = vpop.f32.mrb[0].mxu0
    %v1078 = vadd.f32 0.0, %v1077
    %v1079 = vpop.f32.mrb[0].mxu0
    %v1080 = vadd.f32 0.0, %v1079
    %v1081 = vpop.f32.mrb[0].mxu0
    %v1082 = vadd.f32 0.0, %v1081
    %v1083 = vpop.f32.mrb[0].mxu0
    %v1084 = vadd.f32 0.0, %v1083
    %1085 = vmatprep.mubr.bf16.mxu0 %v419
    %1086 = vmatmul.mubr.bf16.gmra.mrb[0].mxu0 %v418
    %v1087 = vpop.f32.mrb[0].mxu0
    %v1088 = vadd.f32 0.0, %v1087
    %v1089 = vpop.f32.mrb[0].mxu0
    %v1090 = vadd.f32 0.0, %v1089
    %v1091 = vpop.f32.mrb[0].mxu0
    %v1092 = vadd.f32 0.0, %v1091
    %v1093 = vpop.f32.mrb[0].mxu0
    %v1094 = vadd.f32 0.0, %v1093
    %1095 = vmatprep.mubr.bf16.mxu0 %v421
    %1096 = vmatmul.mubr.bf16.gmra.mrb[0].mxu0 %v420
    %v1097 = vpop.f32.mrb[0].mxu0
    %v1098 = vadd.f32 0.0, %v1097
    %v1099 = vpop.f32.mrb[0].mxu0
    %v1100 = vadd.f32 0.0, %v1099
    %v1101 = vpop.f32.mrb[0].mxu0
    %v1102 = vadd.f32 0.0, %v1101
    %v1103 = vpop.f32.mrb[0].mxu0
    %v1104 = vadd.f32 0.0, %v1103
    %1105 = vmatprep.mubr.bf16.mxu0 %v423
    %1106 = vmatmul.mubr.bf16.gmra.mrb[0].mxu0 %v422
    %v1107 = vpop.f32.mrb[0].mxu0
    %v1108 = vadd.f32 0.0, %v1107
    %v1109 = vpop.f32.mrb[0].mxu0
    %v1110 = vadd.f32 0.0, %v1109
    %v1111 = vpop.f32.mrb[0].mxu0
    %v1112 = vadd.f32 0.0, %v1111
    %v1113 = vpop.f32.mrb[0].mxu0
    %v1114 = vadd.f32 0.0, %v1113
    %1115 = vmatprep.mubr.bf16.mxu0 %v425
    %1116 = vmatmul.mubr.bf16.gmra.mrb[0].mxu0 %v424
    %v1117 = vpop.f32.mrb[0].mxu0
    %v1118 = vadd.f32 0.0, %v1117
    %v1119 = vpop.f32.mrb[0].mxu0
    %v1120 = vadd.f32 0.0, %v1119
    %v1121 = vpop.f32.mrb[0].mxu0
    %v1122 = vadd.f32 0.0, %v1121
    %v1123 = vpop.f32.mrb[0].mxu0
    %v1124 = vadd.f32 0.0, %v1123
    %1125 = vdwg.mxu0
    %1126 = vmatprep.subr.bf16.mxu0 %v733
    %1127 = vmatpush1.bf16.msra.mxu0 %v732
    %1128 = vmatprep.subr.bf16.mxu0 %v739
    %1129 = vmatpush1.bf16.msra.mxu0 %v738
    %1130 = vmatprep.subr.bf16.mxu0 %v745
    %1131 = vmatpush1.bf16.msra.mxu0 %v744
    %1132 = vmatprep.subr.bf16.mxu0 %v751
    %1133 = vmatpush1.bf16.msra.mxu0 %v750
    %1134 = vmatprep.subr.bf16.mxu0 %v757
    %1135 = vmatpush1.bf16.msra.mxu0 %v756
    %1136 = vmatprep.subr.bf16.mxu0 %v763
    %1137 = vmatpush1.bf16.msra.mxu0 %v762
    %1138 = vmatprep.subr.bf16.mxu0 %v769
    %1139 = vmatpush1.bf16.msra.mxu0 %v768
    %1140 = vmatprep.subr.bf16.mxu0 %v775
    %1141 = vmatpush1.bf16.msra.mxu0 %v774
    %1142 = vmatprep.subr.bf16.mxu0 %v781
    %1143 = vmatpush1.bf16.msra.mxu0 %v780
    %1144 = vmatprep.subr.bf16.mxu0 %v787
    %1145 = vmatpush1.bf16.msra.mxu0 %v786
    %1146 = vmatprep.subr.bf16.mxu0 %v793
    %1147 = vmatpush1.bf16.msra.mxu0 %v792
    %1148 = vmatprep.subr.bf16.mxu0 %v799
    %1149 = vmatpush1.bf16.msra.mxu0 %v798
    %1150 = vmatprep.subr.bf16.mxu0 %v805
    %1151 = vmatpush1.bf16.msra.mxu0 %v804
    %1152 = vmatprep.subr.bf16.mxu0 %v811
    %1153 = vmatpush1.bf16.msra.mxu0 %v810
    %1154 = vmatprep.subr.bf16.mxu0 %v817
    %1155 = vmatpush1.bf16.msra.mxu0 %v816
    %1156 = vmatprep.subr.bf16.mxu0 %v823
    %1157 = vmatpush1.bf16.msra.mxu0 %v822
    %1158 = vmatprep.mubr.bf16.mxu0 %v413
    %1159 = vmatmul.mubr.bf16.gmra.mrb[0].mxu0 %v412
    %v1160 = vpop.f32.mrb[0].mxu0
    %v1161 = vadd.f32 0.0, %v1160
    %v1162 = vpop.f32.mrb[0].mxu0
    %v1163 = vadd.f32 0.0, %v1162
    %v1164 = vpop.f32.mrb[0].mxu0
    %v1165 = vadd.f32 0.0, %v1164
    %v1166 = vpop.f32.mrb[0].mxu0
    %v1167 = vadd.f32 0.0, %v1166
    %1168 = vmatprep.mubr.bf16.mxu0 %v415
    %1169 = vmatmul.mubr.bf16.gmra.mrb[0].mxu0 %v414
    %v1170 = vpop.f32.mrb[0].mxu0
    %v1171 = vadd.f32 0.0, %v1170
    %v1172 = vpop.f32.mrb[0].mxu0
    %v1173 = vadd.f32 0.0, %v1172
    %v1174 = vpop.f32.mrb[0].mxu0
    %v1175 = vadd.f32 0.0, %v1174
    %v1176 = vpop.f32.mrb[0].mxu0
    %v1177 = vadd.f32 0.0, %v1176
    %1178 = vmatprep.mubr.bf16.mxu0 %v417
    %1179 = vmatmul.mubr.bf16.gmra.mrb[0].mxu0 %v416
    %v1180 = vpop.f32.mrb[0].mxu0
    %v1181 = vadd.f32 0.0, %v1180
    %v1182 = vpop.f32.mrb[0].mxu0
    %v1183 = vadd.f32 0.0, %v1182
    %v1184 = vpop.f32.mrb[0].mxu0
    %v1185 = vadd.f32 0.0, %v1184
    %v1186 = vpop.f32.mrb[0].mxu0
    %v1187 = vadd.f32 0.0, %v1186
    %1188 = vmatprep.mubr.bf16.mxu0 %v419
    %1189 = vmatmul.mubr.bf16.gmra.mrb[0].mxu0 %v418
    %v1190 = vpop.f32.mrb[0].mxu0
    %v1191 = vadd.f32 0.0, %v1190
    %v1192 = vpop.f32.mrb[0].mxu0
    %v1193 = vadd.f32 0.0, %v1192
    %v1194 = vpop.f32.mrb[0].mxu0
    %v1195 = vadd.f32 0.0, %v1194
    %v1196 = vpop.f32.mrb[0].mxu0
    %v1197 = vadd.f32 0.0, %v1196
    %1198 = vmatprep.mubr.bf16.mxu0 %v421
    %1199 = vmatmul.mubr.bf16.gmra.mrb[0].mxu0 %v420
    %v1200 = vpop.f32.mrb[0].mxu0
    %v1201 = vadd.f32 0.0, %v1200
    %v1202 = vpop.f32.mrb[0].mxu0
    %v1203 = vadd.f32 0.0, %v1202
    %v1204 = vpop.f32.mrb[0].mxu0
    %v1205 = vadd.f32 0.0, %v1204
    %v1206 = vpop.f32.mrb[0].mxu0
    %v1207 = vadd.f32 0.0, %v1206
    %1208 = vmatprep.mubr.bf16.mxu0 %v423
    %1209 = vmatmul.mubr.bf16.gmra.mrb[0].mxu0 %v422
    %v1210 = vpop.f32.mrb[0].mxu0
    %v1211 = vadd.f32 0.0, %v1210
    %v1212 = vpop.f32.mrb[0].mxu0
    %v1213 = vadd.f32 0.0, %v1212
    %v1214 = vpop.f32.mrb[0].mxu0
    %v1215 = vadd.f32 0.0, %v1214
    %v1216 = vpop.f32.mrb[0].mxu0
    %v1217 = vadd.f32 0.0, %v1216
    %1218 = vmatprep.mubr.bf16.mxu0 %v425
    %1219 = vmatmul.mubr.bf16.gmra.mrb[0].mxu0 %v424
    %v1220 = vpop.f32.mrb[0].mxu0
    %v1221 = vadd.f32 0.0, %v1220
    %v1222 = vpop.f32.mrb[0].mxu0
    %v1223 = vadd.f32 0.0, %v1222
    %v1224 = vpop.f32.mrb[0].mxu0
    %v1225 = vadd.f32 0.0, %v1224
    %v1226 = vpop.f32.mrb[0].mxu0
    %v1227 = vadd.f32 0.0, %v1226
    %1228 = vdwg.mxu0
    %v1257 = vunpack.c.l.b16 %v40
    %v1258 = vunpack.c.h.b16 %v40
    %v1259 = vunpack.c.l.b16 %v41
    %v1260 = vunpack.c.h.b16 %v41
    %v1261 = vunpack.c.l.b16 %v42
    %v1262 = vunpack.c.h.b16 %v42
    %v1263 = vunpack.c.l.b16 %v43
    %v1264 = vunpack.c.h.b16 %v43
    %v1265 = vunpack.c.l.b16 %v44
    %v1266 = vunpack.c.h.b16 %v44
    %v1267 = vunpack.c.l.b16 %v45
    %v1268 = vunpack.c.h.b16 %v45
    %v1269 = vunpack.c.l.b16 %v46
    %v1270 = vunpack.c.h.b16 %v46
    %v1271 = vunpack.c.l.b16 %v47
    %v1272 = vunpack.c.h.b16 %v47
    %v1273 = vunpack.c.l.b16 %v48
    %v1274 = vunpack.c.h.b16 %v48
    %v1275 = vunpack.c.l.b16 %v49
    %v1276 = vunpack.c.h.b16 %v49
    %v1277 = vunpack.c.l.b16 %v50
    %v1278 = vunpack.c.h.b16 %v50
    %v1279 = vunpack.c.l.b16 %v51
    %v1280 = vunpack.c.h.b16 %v51
    %v1281 = vunpack.c.l.b16 %v52
    %v1282 = vunpack.c.h.b16 %v52
    %v1283 = vunpack.c.l.b16 %v53
    %v1284 = vunpack.c.h.b16 %v53
    %v1285 = vunpack.c.l.b16 %v54
    %v1286 = vunpack.c.h.b16 %v54
    %v1287 = vunpack.c.l.b16 %v55
    %v1288 = vunpack.c.h.b16 %v55
    %v1289 = vunpack.c.l.b16 %v56
    %v1290 = vunpack.c.h.b16 %v56
    %v1291 = vunpack.c.l.b16 %v57
    %v1292 = vunpack.c.h.b16 %v57
    %v1293 = vunpack.c.l.b16 %v58
    %v1294 = vunpack.c.h.b16 %v58
    %v1295 = vunpack.c.l.b16 %v59
    %v1296 = vunpack.c.h.b16 %v59
    %v1297 = vunpack.c.l.b16 %v60
    %v1298 = vunpack.c.h.b16 %v60
    %v1299 = vunpack.c.l.b16 %v61
    %v1300 = vunpack.c.h.b16 %v61
    %v1301 = vunpack.c.l.b16 %v62
    %v1302 = vunpack.c.h.b16 %v62
    %v1303 = vunpack.c.l.b16 %v63
    %v1304 = vunpack.c.h.b16 %v63
    %v1305 = vunpack.c.l.b16 %v64
    %v1306 = vunpack.c.h.b16 %v64
    %v1307 = vunpack.c.l.b16 %v65
    %v1308 = vunpack.c.h.b16 %v65
    %v1309 = vunpack.c.l.b16 %v66
    %v1310 = vunpack.c.h.b16 %v66
    %v1311 = vunpack.c.l.b16 %v67
    %v1312 = vunpack.c.h.b16 %v67
    %v1313 = vpack.c.b16 %v1261, %v1257
    %v1314 = vpack.c.b16 %v1262, %v1258
    %v1315 = vpack.c.b16 %v1263, %v1259
    %v1316 = vpack.c.b16 %v1264, %v1260
    %v1317 = vpack.c.b16 %v1269, %v1265
    %v1318 = vpack.c.b16 %v1270, %v1266
    %v1319 = vpack.c.b16 %v1271, %v1267
    %v1320 = vpack.c.b16 %v1272, %v1268
    %v1321 = vpack.c.b16 %v1277, %v1273
    %v1322 = vpack.c.b16 %v1278, %v1274
    %v1323 = vpack.c.b16 %v1279, %v1275
    %v1324 = vpack.c.b16 %v1280, %v1276
    %v1325 = vpack.c.b16 %v1285, %v1281
    %v1326 = vpack.c.b16 %v1286, %v1282
    %v1327 = vpack.c.b16 %v1287, %v1283
    %v1328 = vpack.c.b16 %v1288, %v1284
    %v1329 = vpack.c.b16 %v1293, %v1289
    %v1330 = vpack.c.b16 %v1294, %v1290
    %v1331 = vpack.c.b16 %v1295, %v1291
    %v1332 = vpack.c.b16 %v1296, %v1292
    %v1333 = vpack.c.b16 %v1301, %v1297
    %v1334 = vpack.c.b16 %v1302, %v1298
    %v1335 = vpack.c.b16 %v1303, %v1299
    %v1336 = vpack.c.b16 %v1304, %v1300
    %v1337 = vpack.c.b16 %v1309, %v1305
    %v1338 = vpack.c.b16 %v1310, %v1306
    %v1339 = vpack.c.b16 %v1311, %v1307
    %v1340 = vpack.c.b16 %v1312, %v1308
    %v1561 = vunpack.c.l.b16 %v68
    %v1562 = vunpack.c.h.b16 %v68
    %v1563 = vunpack.c.l.b16 %v69
    %v1564 = vunpack.c.h.b16 %v69
    %v1565 = vunpack.c.l.b16 %v70
    %v1566 = vunpack.c.h.b16 %v70
    %v1567 = vunpack.c.l.b16 %v71
    %v1568 = vunpack.c.h.b16 %v71
    %v1569 = vunpack.c.l.b16 %v72
    %v1570 = vunpack.c.h.b16 %v72
    %v1571 = vunpack.c.l.b16 %v73
    %v1572 = vunpack.c.h.b16 %v73
    %v1573 = vunpack.c.l.b16 %v74
    %v1574 = vunpack.c.h.b16 %v74
    %v1575 = vunpack.c.l.b16 %v75
    %v1576 = vunpack.c.h.b16 %v75
    %v1577 = vunpack.c.l.b16 %v76
    %v1578 = vunpack.c.h.b16 %v76
    %v1579 = vunpack.c.l.b16 %v77
    %v1580 = vunpack.c.h.b16 %v77
    %v1581 = vunpack.c.l.b16 %v78
    %v1582 = vunpack.c.h.b16 %v78
    %v1583 = vunpack.c.l.b16 %v79
    %v1584 = vunpack.c.h.b16 %v79
    %v1585 = vunpack.c.l.b16 %v80
    %v1586 = vunpack.c.h.b16 %v80
    %v1587 = vunpack.c.l.b16 %v81
    %v1588 = vunpack.c.h.b16 %v81
    %v1589 = vunpack.c.l.b16 %v82
    %v1590 = vunpack.c.h.b16 %v82
    %v1591 = vunpack.c.l.b16 %v83
    %v1592 = vunpack.c.h.b16 %v83
    %v1593 = vunpack.c.l.b16 %v84
    %v1594 = vunpack.c.h.b16 %v84
    %v1595 = vunpack.c.l.b16 %v85
    %v1596 = vunpack.c.h.b16 %v85
    %v1597 = vunpack.c.l.b16 %v86
    %v1598 = vunpack.c.h.b16 %v86
    %v1599 = vunpack.c.l.b16 %v87
    %v1600 = vunpack.c.h.b16 %v87
    %v1601 = vunpack.c.l.b16 %v88
    %v1602 = vunpack.c.h.b16 %v88
    %v1603 = vunpack.c.l.b16 %v89
    %v1604 = vunpack.c.h.b16 %v89
    %v1605 = vunpack.c.l.b16 %v90
    %v1606 = vunpack.c.h.b16 %v90
    %v1607 = vunpack.c.l.b16 %v91
    %v1608 = vunpack.c.h.b16 %v91
    %v1609 = vunpack.c.l.b16 %v92
    %v1610 = vunpack.c.h.b16 %v92
    %v1611 = vunpack.c.l.b16 %v93
    %v1612 = vunpack.c.h.b16 %v93
    %v1613 = vunpack.c.l.b16 %v94
    %v1614 = vunpack.c.h.b16 %v94
    %v1615 = vunpack.c.l.b16 %v95
    %v1616 = vunpack.c.h.b16 %v95
    %v1617 = vunpack.c.l.b16 %v96
    %v1618 = vunpack.c.h.b16 %v96
    %v1619 = vunpack.c.l.b16 %v97
    %v1620 = vunpack.c.h.b16 %v97
    %v1621 = vunpack.c.l.b16 %v98
    %v1622 = vunpack.c.h.b16 %v98
    %v1623 = vunpack.c.l.b16 %v99
    %v1624 = vunpack.c.h.b16 %v99
    %v1625 = vunpack.c.l.b16 %v100
    %v1626 = vunpack.c.h.b16 %v100
    %v1627 = vunpack.c.l.b16 %v101
    %v1628 = vunpack.c.h.b16 %v101
    %v1629 = vunpack.c.l.b16 %v102
    %v1630 = vunpack.c.h.b16 %v102
    %v1631 = vunpack.c.l.b16 %v103
    %v1632 = vunpack.c.h.b16 %v103
    %v1633 = vunpack.c.l.b16 %v104
    %v1634 = vunpack.c.h.b16 %v104
    %v1635 = vunpack.c.l.b16 %v105
    %v1636 = vunpack.c.h.b16 %v105
    %v1637 = vunpack.c.l.b16 %v106
    %v1638 = vunpack.c.h.b16 %v106
    %v1639 = vunpack.c.l.b16 %v107
    %v1640 = vunpack.c.h.b16 %v107
    %v1641 = vunpack.c.l.b16 %v108
    %v1642 = vunpack.c.h.b16 %v108
    %v1643 = vunpack.c.l.b16 %v109
    %v1644 = vunpack.c.h.b16 %v109
    %v1645 = vunpack.c.l.b16 %v110
    %v1646 = vunpack.c.h.b16 %v110
    %v1647 = vunpack.c.l.b16 %v111
    %v1648 = vunpack.c.h.b16 %v111
    %v1649 = vunpack.c.l.b16 %v112
    %v1650 = vunpack.c.h.b16 %v112
    %v1651 = vunpack.c.l.b16 %v113
    %v1652 = vunpack.c.h.b16 %v113
    %v1653 = vunpack.c.l.b16 %v114
    %v1654 = vunpack.c.h.b16 %v114
    %v1655 = vunpack.c.l.b16 %v115
    %v1656 = vunpack.c.h.b16 %v115
    %v1657 = vunpack.c.l.b16 %v116
    %v1658 = vunpack.c.h.b16 %v116
    %v1659 = vunpack.c.l.b16 %v117
    %v1660 = vunpack.c.h.b16 %v117
    %v1661 = vunpack.c.l.b16 %v118
    %v1662 = vunpack.c.h.b16 %v118
    %v1663 = vunpack.c.l.b16 %v119
    %v1664 = vunpack.c.h.b16 %v119
    %v1665 = vunpack.c.l.b16 %v120
    %v1666 = vunpack.c.h.b16 %v120
    %v1667 = vunpack.c.l.b16 %v121
    %v1668 = vunpack.c.h.b16 %v121
    %v1669 = vunpack.c.l.b16 %v122
    %v1670 = vunpack.c.h.b16 %v122
    %v1671 = vunpack.c.l.b16 %v123
    %v1672 = vunpack.c.h.b16 %v123
    %v1673 = vunpack.c.l.b16 %v124
    %v1674 = vunpack.c.h.b16 %v124
    %v1675 = vunpack.c.l.b16 %v125
    %v1676 = vunpack.c.h.b16 %v125
    %v1677 = vunpack.c.l.b16 %v126
    %v1678 = vunpack.c.h.b16 %v126
    %v1679 = vunpack.c.l.b16 %v127
    %v1680 = vunpack.c.h.b16 %v127
    %v1681 = vunpack.c.l.b16 %v128
    %v1682 = vunpack.c.h.b16 %v128
    %v1683 = vunpack.c.l.b16 %v129
    %v1684 = vunpack.c.h.b16 %v129
    %v1685 = vunpack.c.l.b16 %v130
    %v1686 = vunpack.c.h.b16 %v130
    %v1687 = vunpack.c.l.b16 %v131
    %v1688 = vunpack.c.h.b16 %v131
    %v1689 = vunpack.c.l.b16 %v132
    %v1690 = vunpack.c.h.b16 %v132
    %v1691 = vunpack.c.l.b16 %v133
    %v1692 = vunpack.c.h.b16 %v133
    %v1693 = vunpack.c.l.b16 %v134
    %v1694 = vunpack.c.h.b16 %v134
    %v1695 = vunpack.c.l.b16 %v135
    %v1696 = vunpack.c.h.b16 %v135
    %v1697 = vunpack.c.l.b16 %v136
    %v1698 = vunpack.c.h.b16 %v136
    %v1699 = vunpack.c.l.b16 %v137
    %v1700 = vunpack.c.h.b16 %v137
    %v1701 = vunpack.c.l.b16 %v138
    %v1702 = vunpack.c.h.b16 %v138
    %v1703 = vunpack.c.l.b16 %v139
    %v1704 = vunpack.c.h.b16 %v139
    %v1705 = vunpack.c.l.b16 %v140
    %v1706 = vunpack.c.h.b16 %v140
    %v1707 = vunpack.c.l.b16 %v141
    %v1708 = vunpack.c.h.b16 %v141
    %v1709 = vunpack.c.l.b16 %v142
    %v1710 = vunpack.c.h.b16 %v142
    %v1711 = vunpack.c.l.b16 %v143
    %v1712 = vunpack.c.h.b16 %v143
    %v1713 = vunpack.c.l.b16 %v144
    %v1714 = vunpack.c.h.b16 %v144
    %v1715 = vunpack.c.l.b16 %v145
    %v1716 = vunpack.c.h.b16 %v145
    %v1717 = vunpack.c.l.b16 %v146
    %v1718 = vunpack.c.h.b16 %v146
    %v1719 = vunpack.c.l.b16 %v147
    %v1720 = vunpack.c.h.b16 %v147
    %v1721 = vunpack.c.l.b16 %v148
    %v1722 = vunpack.c.h.b16 %v148
    %v1723 = vunpack.c.l.b16 %v149
    %v1724 = vunpack.c.h.b16 %v149
    %v1725 = vunpack.c.l.b16 %v150
    %v1726 = vunpack.c.h.b16 %v150
    %v1727 = vunpack.c.l.b16 %v151
    %v1728 = vunpack.c.h.b16 %v151
    %v1729 = vunpack.c.l.b16 %v152
    %v1730 = vunpack.c.h.b16 %v152
    %v1731 = vunpack.c.l.b16 %v153
    %v1732 = vunpack.c.h.b16 %v153
    %v1733 = vunpack.c.l.b16 %v154
    %v1734 = vunpack.c.h.b16 %v154
    %v1735 = vunpack.c.l.b16 %v155
    %v1736 = vunpack.c.h.b16 %v155
    %v1737 = vunpack.c.l.b16 %v156
    %v1738 = vunpack.c.h.b16 %v156
    %v1739 = vunpack.c.l.b16 %v157
    %v1740 = vunpack.c.h.b16 %v157
    %v1741 = vunpack.c.l.b16 %v158
    %v1742 = vunpack.c.h.b16 %v158
    %v1743 = vunpack.c.l.b16 %v159
    %v1744 = vunpack.c.h.b16 %v159
    %v1745 = vunpack.c.l.b16 %v160
    %v1746 = vunpack.c.h.b16 %v160
    %v1747 = vunpack.c.l.b16 %v161
    %v1748 = vunpack.c.h.b16 %v161
    %v1749 = vunpack.c.l.b16 %v162
    %v1750 = vunpack.c.h.b16 %v162
    %v1751 = vunpack.c.l.b16 %v163
    %v1752 = vunpack.c.h.b16 %v163
    %v1753 = vunpack.c.l.b16 %v164
    %v1754 = vunpack.c.h.b16 %v164
    %v1755 = vunpack.c.l.b16 %v165
    %v1756 = vunpack.c.h.b16 %v165
    %v1757 = vunpack.c.l.b16 %v166
    %v1758 = vunpack.c.h.b16 %v166
    %v1759 = vunpack.c.l.b16 %v167
    %v1760 = vunpack.c.h.b16 %v167
    %v1761 = vunpack.c.l.b16 %v168
    %v1762 = vunpack.c.h.b16 %v168
    %v1763 = vunpack.c.l.b16 %v169
    %v1764 = vunpack.c.h.b16 %v169
    %v1765 = vunpack.c.l.b16 %v170
    %v1766 = vunpack.c.h.b16 %v170
    %v1767 = vunpack.c.l.b16 %v171
    %v1768 = vunpack.c.h.b16 %v171
    %v1769 = vunpack.c.l.b16 %v172
    %v1770 = vunpack.c.h.b16 %v172
    %v1771 = vunpack.c.l.b16 %v173
    %v1772 = vunpack.c.h.b16 %v173
    %v1773 = vunpack.c.l.b16 %v174
    %v1774 = vunpack.c.h.b16 %v174
    %v1775 = vunpack.c.l.b16 %v175
    %v1776 = vunpack.c.h.b16 %v175
    %v1777 = vunpack.c.l.b16 %v176
    %v1778 = vunpack.c.h.b16 %v176
    %v1779 = vunpack.c.l.b16 %v177
    %v1780 = vunpack.c.h.b16 %v177
    %v1781 = vunpack.c.l.b16 %v178
    %v1782 = vunpack.c.h.b16 %v178
    %v1783 = vunpack.c.l.b16 %v179
    %v1784 = vunpack.c.h.b16 %v179
    %v1785 = vunpack.c.l.b16 %v180
    %v1786 = vunpack.c.h.b16 %v180
    %v1787 = vunpack.c.l.b16 %v181
    %v1788 = vunpack.c.h.b16 %v181
    %v1789 = vunpack.c.l.b16 %v182
    %v1790 = vunpack.c.h.b16 %v182
    %v1791 = vunpack.c.l.b16 %v183
    %v1792 = vunpack.c.h.b16 %v183
    %v1793 = vunpack.c.l.b16 %v184
    %v1794 = vunpack.c.h.b16 %v184
    %v1795 = vunpack.c.l.b16 %v185
    %v1796 = vunpack.c.h.b16 %v185
    %v1797 = vunpack.c.l.b16 %v186
    %v1798 = vunpack.c.h.b16 %v186
    %v1799 = vunpack.c.l.b16 %v187
    %v1800 = vunpack.c.h.b16 %v187
    %v1801 = vunpack.c.l.b16 %v188
    %v1802 = vunpack.c.h.b16 %v188
    %v1803 = vunpack.c.l.b16 %v189
    %v1804 = vunpack.c.h.b16 %v189
    %v1805 = vunpack.c.l.b16 %v190
    %v1806 = vunpack.c.h.b16 %v190
    %v1807 = vunpack.c.l.b16 %v191
    %v1808 = vunpack.c.h.b16 %v191
    %v1809 = vunpack.c.l.b16 %v192
    %v1810 = vunpack.c.h.b16 %v192
    %v1811 = vunpack.c.l.b16 %v193
    %v1812 = vunpack.c.h.b16 %v193
    %v1813 = vunpack.c.l.b16 %v194
    %v1814 = vunpack.c.h.b16 %v194
    %v1815 = vunpack.c.l.b16 %v195
    %v1816 = vunpack.c.h.b16 %v195
    %v1817 = vunpack.c.l.b16 %v196
    %v1818 = vunpack.c.h.b16 %v196
    %v1819 = vunpack.c.l.b16 %v197
    %v1820 = vunpack.c.h.b16 %v197
    %v1821 = vunpack.c.l.b16 %v198
    %v1822 = vunpack.c.h.b16 %v198
    %v1823 = vunpack.c.l.b16 %v199
    %v1824 = vunpack.c.h.b16 %v199
    %v1825 = vunpack.c.l.b16 %v200
    %v1826 = vunpack.c.h.b16 %v200
    %v1827 = vunpack.c.l.b16 %v201
    %v1828 = vunpack.c.h.b16 %v201
    %v1829 = vunpack.c.l.b16 %v202
    %v1830 = vunpack.c.h.b16 %v202
    %v1831 = vunpack.c.l.b16 %v203
    %v1832 = vunpack.c.h.b16 %v203
    %v1833 = vunpack.c.l.b16 %v204
    %v1834 = vunpack.c.h.b16 %v204
    %v1835 = vunpack.c.l.b16 %v205
    %v1836 = vunpack.c.h.b16 %v205
    %v1837 = vunpack.c.l.b16 %v206
    %v1838 = vunpack.c.h.b16 %v206
    %v1839 = vunpack.c.l.b16 %v207
    %v1840 = vunpack.c.h.b16 %v207
    %v1841 = vunpack.c.l.b16 %v208
    %v1842 = vunpack.c.h.b16 %v208
    %v1843 = vunpack.c.l.b16 %v209
    %v1844 = vunpack.c.h.b16 %v209
    %v1845 = vunpack.c.l.b16 %v210
    %v1846 = vunpack.c.h.b16 %v210
    %v1847 = vunpack.c.l.b16 %v211
    %v1848 = vunpack.c.h.b16 %v211
    %v1849 = vunpack.c.l.b16 %v212
    %v1850 = vunpack.c.h.b16 %v212
    %v1851 = vunpack.c.l.b16 %v213
    %v1852 = vunpack.c.h.b16 %v213
    %v1853 = vunpack.c.l.b16 %v214
    %v1854 = vunpack.c.h.b16 %v214
    %v1855 = vunpack.c.l.b16 %v215
    %v1856 = vunpack.c.h.b16 %v215
    %v1857 = vunpack.c.l.b16 %v216
    %v1858 = vunpack.c.h.b16 %v216
    %v1859 = vunpack.c.l.b16 %v217
    %v1860 = vunpack.c.h.b16 %v217
    %v1861 = vunpack.c.l.b16 %v218
    %v1862 = vunpack.c.h.b16 %v218
    %v1863 = vunpack.c.l.b16 %v219
    %v1864 = vunpack.c.h.b16 %v219
    %v1865 = vunpack.c.l.b16 %v220
    %v1866 = vunpack.c.h.b16 %v220
    %v1867 = vunpack.c.l.b16 %v221
    %v1868 = vunpack.c.h.b16 %v221
    %v1869 = vunpack.c.l.b16 %v222
    %v1870 = vunpack.c.h.b16 %v222
    %v1871 = vunpack.c.l.b16 %v223
    %v1872 = vunpack.c.h.b16 %v223
    %v1873 = vunpack.c.l.b16 %v224
    %v1874 = vunpack.c.h.b16 %v224
    %v1875 = vunpack.c.l.b16 %v225
    %v1876 = vunpack.c.h.b16 %v225
    %v1877 = vunpack.c.l.b16 %v226
    %v1878 = vunpack.c.h.b16 %v226
    %v1879 = vunpack.c.l.b16 %v227
    %v1880 = vunpack.c.h.b16 %v227
    %v1881 = vunpack.c.l.b16 %v228
    %v1882 = vunpack.c.h.b16 %v228
    %v1883 = vunpack.c.l.b16 %v229
    %v1884 = vunpack.c.h.b16 %v229
    %v1885 = vunpack.c.l.b16 %v230
    %v1886 = vunpack.c.h.b16 %v230
    %v1887 = vunpack.c.l.b16 %v231
    %v1888 = vunpack.c.h.b16 %v231
    %v1889 = vunpack.c.l.b16 %v232
    %v1890 = vunpack.c.h.b16 %v232
    %v1891 = vunpack.c.l.b16 %v233
    %v1892 = vunpack.c.h.b16 %v233
    %v1893 = vunpack.c.l.b16 %v234
    %v1894 = vunpack.c.h.b16 %v234
    %v1895 = vunpack.c.l.b16 %v235
    %v1896 = vunpack.c.h.b16 %v235
    %v1897 = vunpack.c.l.b16 %v236
    %v1898 = vunpack.c.h.b16 %v236
    %v1899 = vunpack.c.l.b16 %v237
    %v1900 = vunpack.c.h.b16 %v237
    %v1901 = vunpack.c.l.b16 %v238
    %v1902 = vunpack.c.h.b16 %v238
    %v1903 = vunpack.c.l.b16 %v239
    %v1904 = vunpack.c.h.b16 %v239
    %v1905 = vunpack.c.l.b16 %v240
    %v1906 = vunpack.c.h.b16 %v240
    %v1907 = vunpack.c.l.b16 %v241
    %v1908 = vunpack.c.h.b16 %v241
    %v1909 = vunpack.c.l.b16 %v242
    %v1910 = vunpack.c.h.b16 %v242
    %v1911 = vunpack.c.l.b16 %v243
    %v1912 = vunpack.c.h.b16 %v243
    %v1913 = vunpack.c.l.b16 %v244
    %v1914 = vunpack.c.h.b16 %v244
    %v1915 = vunpack.c.l.b16 %v245
    %v1916 = vunpack.c.h.b16 %v245
    %v1917 = vunpack.c.l.b16 %v246
    %v1918 = vunpack.c.h.b16 %v246
    %v1919 = vunpack.c.l.b16 %v247
    %v1920 = vunpack.c.h.b16 %v247
    %v1921 = vunpack.c.l.b16 %v248
    %v1922 = vunpack.c.h.b16 %v248
    %v1923 = vunpack.c.l.b16 %v249
    %v1924 = vunpack.c.h.b16 %v249
    %v1925 = vunpack.c.l.b16 %v250
    %v1926 = vunpack.c.h.b16 %v250
    %v1927 = vunpack.c.l.b16 %v251
    %v1928 = vunpack.c.h.b16 %v251
    %v1929 = vunpack.c.l.b16 %v252
    %v1930 = vunpack.c.h.b16 %v252
    %v1931 = vunpack.c.l.b16 %v253
    %v1932 = vunpack.c.h.b16 %v253
    %v1933 = vunpack.c.l.b16 %v254
    %v1934 = vunpack.c.h.b16 %v254
    %v1935 = vunpack.c.l.b16 %v255
    %v1936 = vunpack.c.h.b16 %v255
    %v1937 = vunpack.c.l.b16 %v256
    %v1938 = vunpack.c.h.b16 %v256
    %v1939 = vunpack.c.l.b16 %v257
    %v1940 = vunpack.c.h.b16 %v257
    %v1941 = vunpack.c.l.b16 %v258
    %v1942 = vunpack.c.h.b16 %v258
    %v1943 = vunpack.c.l.b16 %v259
    %v1944 = vunpack.c.h.b16 %v259
    %v1945 = vpack.c.b16 %v1567, %v1561
    %v1946 = vpack.c.b16 %v1568, %v1562
    %v1947 = vpack.c.b16 %v1569, %v1563
    %v1948 = vpack.c.b16 %v1570, %v1564
    %v1949 = vpack.c.b16 %v1571, %v1565
    %v1950 = vpack.c.b16 %v1572, %v1566
    %v1951 = vpack.c.b16 %v1579, %v1573
    %v1952 = vpack.c.b16 %v1580, %v1574
    %v1953 = vpack.c.b16 %v1581, %v1575
    %v1954 = vpack.c.b16 %v1582, %v1576
    %v1955 = vpack.c.b16 %v1583, %v1577
    %v1956 = vpack.c.b16 %v1584, %v1578
    %v1957 = vpack.c.b16 %v1591, %v1585
    %v1958 = vpack.c.b16 %v1592, %v1586
    %v1959 = vpack.c.b16 %v1593, %v1587
    %v1960 = vpack.c.b16 %v1594, %v1588
    %v1961 = vpack.c.b16 %v1595, %v1589
    %v1962 = vpack.c.b16 %v1596, %v1590
    %v1963 = vpack.c.b16 %v1603, %v1597
    %v1964 = vpack.c.b16 %v1604, %v1598
    %v1965 = vpack.c.b16 %v1605, %v1599
    %v1966 = vpack.c.b16 %v1606, %v1600
    %v1967 = vpack.c.b16 %v1607, %v1601
    %v1968 = vpack.c.b16 %v1608, %v1602
    %v1969 = vpack.c.b16 %v1615, %v1609
    %v1970 = vpack.c.b16 %v1616, %v1610
    %v1971 = vpack.c.b16 %v1617, %v1611
    %v1972 = vpack.c.b16 %v1618, %v1612
    %v1973 = vpack.c.b16 %v1619, %v1613
    %v1974 = vpack.c.b16 %v1620, %v1614
    %v1975 = vpack.c.b16 %v1627, %v1621
    %v1976 = vpack.c.b16 %v1628, %v1622
    %v1977 = vpack.c.b16 %v1629, %v1623
    %v1978 = vpack.c.b16 %v1630, %v1624
    %v1979 = vpack.c.b16 %v1631, %v1625
    %v1980 = vpack.c.b16 %v1632, %v1626
    %v1981 = vpack.c.b16 %v1639, %v1633
    %v1982 = vpack.c.b16 %v1640, %v1634
    %v1983 = vpack.c.b16 %v1641, %v1635
    %v1984 = vpack.c.b16 %v1642, %v1636
    %v1985 = vpack.c.b16 %v1643, %v1637
    %v1986 = vpack.c.b16 %v1644, %v1638
    %v1987 = vpack.c.b16 %v1651, %v1645
    %v1988 = vpack.c.b16 %v1652, %v1646
    %v1989 = vpack.c.b16 %v1653, %v1647
    %v1990 = vpack.c.b16 %v1654, %v1648
    %v1991 = vpack.c.b16 %v1655, %v1649
    %v1992 = vpack.c.b16 %v1656, %v1650
    %v1993 = vpack.c.b16 %v1663, %v1657
    %v1994 = vpack.c.b16 %v1664, %v1658
    %v1995 = vpack.c.b16 %v1665, %v1659
    %v1996 = vpack.c.b16 %v1666, %v1660
    %v1997 = vpack.c.b16 %v1667, %v1661
    %v1998 = vpack.c.b16 %v1668, %v1662
    %v1999 = vpack.c.b16 %v1675, %v1669
    %v2000 = vpack.c.b16 %v1676, %v1670
    %v2001 = vpack.c.b16 %v1677, %v1671
    %v2002 = vpack.c.b16 %v1678, %v1672
    %v2003 = vpack.c.b16 %v1679, %v1673
    %v2004 = vpack.c.b16 %v1680, %v1674
    %v2005 = vpack.c.b16 %v1687, %v1681
    %v2006 = vpack.c.b16 %v1688, %v1682
    %v2007 = vpack.c.b16 %v1689, %v1683
    %v2008 = vpack.c.b16 %v1690, %v1684
    %v2009 = vpack.c.b16 %v1691, %v1685
    %v2010 = vpack.c.b16 %v1692, %v1686
    %v2011 = vpack.c.b16 %v1699, %v1693
    %v2012 = vpack.c.b16 %v1700, %v1694
    %v2013 = vpack.c.b16 %v1701, %v1695
    %v2014 = vpack.c.b16 %v1702, %v1696
    %v2015 = vpack.c.b16 %v1703, %v1697
    %v2016 = vpack.c.b16 %v1704, %v1698
    %v2017 = vpack.c.b16 %v1711, %v1705
    %v2018 = vpack.c.b16 %v1712, %v1706
    %v2019 = vpack.c.b16 %v1713, %v1707
    %v2020 = vpack.c.b16 %v1714, %v1708
    %v2021 = vpack.c.b16 %v1715, %v1709
    %v2022 = vpack.c.b16 %v1716, %v1710
    %v2023 = vpack.c.b16 %v1723, %v1717
    %v2024 = vpack.c.b16 %v1724, %v1718
    %v2025 = vpack.c.b16 %v1725, %v1719
    %v2026 = vpack.c.b16 %v1726, %v1720
    %v2027 = vpack.c.b16 %v1727, %v1721
    %v2028 = vpack.c.b16 %v1728, %v1722
    %v2029 = vpack.c.b16 %v1735, %v1729
    %v2030 = vpack.c.b16 %v1736, %v1730
    %v2031 = vpack.c.b16 %v1737, %v1731
    %v2032 = vpack.c.b16 %v1738, %v1732
    %v2033 = vpack.c.b16 %v1739, %v1733
    %v2034 = vpack.c.b16 %v1740, %v1734
    %v2035 = vpack.c.b16 %v1747, %v1741
    %v2036 = vpack.c.b16 %v1748, %v1742
    %v2037 = vpack.c.b16 %v1749, %v1743
    %v2038 = vpack.c.b16 %v1750, %v1744
    %v2039 = vpack.c.b16 %v1751, %v1745
    %v2040 = vpack.c.b16 %v1752, %v1746
    %v2041 = vpack.c.b16 %v1759, %v1753
    %v2042 = vpack.c.b16 %v1760, %v1754
    %v2043 = vpack.c.b16 %v1761, %v1755
    %v2044 = vpack.c.b16 %v1762, %v1756
    %v2045 = vpack.c.b16 %v1763, %v1757
    %v2046 = vpack.c.b16 %v1764, %v1758
    %v2047 = vpack.c.b16 %v1771, %v1765
    %v2048 = vpack.c.b16 %v1772, %v1766
    %v2049 = vpack.c.b16 %v1773, %v1767
    %v2050 = vpack.c.b16 %v1774, %v1768
    %v2051 = vpack.c.b16 %v1775, %v1769
    %v2052 = vpack.c.b16 %v1776, %v1770
    %v2053 = vpack.c.b16 %v1783, %v1777
    %v2054 = vpack.c.b16 %v1784, %v1778
    %v2055 = vpack.c.b16 %v1785, %v1779
    %v2056 = vpack.c.b16 %v1786, %v1780
    %v2057 = vpack.c.b16 %v1787, %v1781
    %v2058 = vpack.c.b16 %v1788, %v1782
    %v2059 = vpack.c.b16 %v1795, %v1789
    %v2060 = vpack.c.b16 %v1796, %v1790
    %v2061 = vpack.c.b16 %v1797, %v1791
    %v2062 = vpack.c.b16 %v1798, %v1792
    %v2063 = vpack.c.b16 %v1799, %v1793
    %v2064 = vpack.c.b16 %v1800, %v1794
    %v2065 = vpack.c.b16 %v1807, %v1801
    %v2066 = vpack.c.b16 %v1808, %v1802
    %v2067 = vpack.c.b16 %v1809, %v1803
    %v2068 = vpack.c.b16 %v1810, %v1804
    %v2069 = vpack.c.b16 %v1811, %v1805
    %v2070 = vpack.c.b16 %v1812, %v1806
    %v2071 = vpack.c.b16 %v1819, %v1813
    %v2072 = vpack.c.b16 %v1820, %v1814
    %v2073 = vpack.c.b16 %v1821, %v1815
    %v2074 = vpack.c.b16 %v1822, %v1816
    %v2075 = vpack.c.b16 %v1823, %v1817
    %v2076 = vpack.c.b16 %v1824, %v1818
    %v2077 = vpack.c.b16 %v1831, %v1825
    %v2078 = vpack.c.b16 %v1832, %v1826
    %v2079 = vpack.c.b16 %v1833, %v1827
    %v2080 = vpack.c.b16 %v1834, %v1828
    %v2081 = vpack.c.b16 %v1835, %v1829
    %v2082 = vpack.c.b16 %v1836, %v1830
    %v2083 = vpack.c.b16 %v1843, %v1837
    %v2084 = vpack.c.b16 %v1844, %v1838
    %v2085 = vpack.c.b16 %v1845, %v1839
    %v2086 = vpack.c.b16 %v1846, %v1840
    %v2087 = vpack.c.b16 %v1847, %v1841
    %v2088 = vpack.c.b16 %v1848, %v1842
    %v2089 = vpack.c.b16 %v1855, %v1849
    %v2090 = vpack.c.b16 %v1856, %v1850
    %v2091 = vpack.c.b16 %v1857, %v1851
    %v2092 = vpack.c.b16 %v1858, %v1852
    %v2093 = vpack.c.b16 %v1859, %v1853
    %v2094 = vpack.c.b16 %v1860, %v1854
    %v2095 = vpack.c.b16 %v1867, %v1861
    %v2096 = vpack.c.b16 %v1868, %v1862
    %v2097 = vpack.c.b16 %v1869, %v1863
    %v2098 = vpack.c.b16 %v1870, %v1864
    %v2099 = vpack.c.b16 %v1871, %v1865
    %v2100 = vpack.c.b16 %v1872, %v1866
    %v2101 = vpack.c.b16 %v1879, %v1873
    %v2102 = vpack.c.b16 %v1880, %v1874
    %v2103 = vpack.c.b16 %v1881, %v1875
    %v2104 = vpack.c.b16 %v1882, %v1876
    %v2105 = vpack.c.b16 %v1883, %v1877
    %v2106 = vpack.c.b16 %v1884, %v1878
    %v2107 = vpack.c.b16 %v1891, %v1885
    %v2108 = vpack.c.b16 %v1892, %v1886
    %v2109 = vpack.c.b16 %v1893, %v1887
    %v2110 = vpack.c.b16 %v1894, %v1888
    %v2111 = vpack.c.b16 %v1895, %v1889
    %v2112 = vpack.c.b16 %v1896, %v1890
    %v2113 = vpack.c.b16 %v1903, %v1897
    %v2114 = vpack.c.b16 %v1904, %v1898
    %v2115 = vpack.c.b16 %v1905, %v1899
    %v2116 = vpack.c.b16 %v1906, %v1900
    %v2117 = vpack.c.b16 %v1907, %v1901
    %v2118 = vpack.c.b16 %v1908, %v1902
    %v2119 = vpack.c.b16 %v1915, %v1909
    %v2120 = vpack.c.b16 %v1916, %v1910
    %v2121 = vpack.c.b16 %v1917, %v1911
    %v2122 = vpack.c.b16 %v1918, %v1912
    %v2123 = vpack.c.b16 %v1919, %v1913
    %v2124 = vpack.c.b16 %v1920, %v1914
    %v2125 = vpack.c.b16 %v1927, %v1921
    %v2126 = vpack.c.b16 %v1928, %v1922
    %v2127 = vpack.c.b16 %v1929, %v1923
    %v2128 = vpack.c.b16 %v1930, %v1924
    %v2129 = vpack.c.b16 %v1931, %v1925
    %v2130 = vpack.c.b16 %v1932, %v1926
    %v2131 = vpack.c.b16 %v1939, %v1933
    %v2132 = vpack.c.b16 %v1940, %v1934
    %v2133 = vpack.c.b16 %v1941, %v1935
    %v2134 = vpack.c.b16 %v1942, %v1936
    %v2135 = vpack.c.b16 %v1943, %v1937
    %v2136 = vpack.c.b16 %v1944, %v1938
    %2329 = vmatprep.subr.bf16.mxu0 %v1946
    %2330 = vmatpush1.bf16.msra.mxu0 %v1945
    %2331 = vmatprep.subr.bf16.mxu0 %v1952
    %2332 = vmatpush1.bf16.msra.mxu0 %v1951
    %2333 = vmatprep.subr.bf16.mxu0 %v1958
    %2334 = vmatpush1.bf16.msra.mxu0 %v1957
    %2335 = vmatprep.subr.bf16.mxu0 %v1964
    %2336 = vmatpush1.bf16.msra.mxu0 %v1963
    %2337 = vmatprep.subr.bf16.mxu0 %v1970
    %2338 = vmatpush1.bf16.msra.mxu0 %v1969
    %2339 = vmatprep.subr.bf16.mxu0 %v1976
    %2340 = vmatpush1.bf16.msra.mxu0 %v1975
    %2341 = vmatprep.subr.bf16.mxu0 %v1982
    %2342 = vmatpush1.bf16.msra.mxu0 %v1981
    %2343 = vmatprep.subr.bf16.mxu0 %v1988
    %2344 = vmatpush1.bf16.msra.mxu0 %v1987
    %2345 = vmatprep.subr.bf16.mxu0 %v1994
    %2346 = vmatpush1.bf16.msra.mxu0 %v1993
    %2347 = vmatprep.subr.bf16.mxu0 %v2000
    %2348 = vmatpush1.bf16.msra.mxu0 %v1999
    %2349 = vmatprep.subr.bf16.mxu0 %v2006
    %2350 = vmatpush1.bf16.msra.mxu0 %v2005
    %2351 = vmatprep.subr.bf16.mxu0 %v2012
    %2352 = vmatpush1.bf16.msra.mxu0 %v2011
    %2353 = vmatprep.subr.bf16.mxu0 %v2018
    %2354 = vmatpush1.bf16.msra.mxu0 %v2017
    %2355 = vmatprep.subr.bf16.mxu0 %v2024
    %2356 = vmatpush1.bf16.msra.mxu0 %v2023
    %2357 = vmatprep.subr.bf16.mxu0 %v2030
    %2358 = vmatpush1.bf16.msra.mxu0 %v2029
    %2359 = vmatprep.subr.bf16.mxu0 %v2036
    %2360 = vmatpush1.bf16.msra.mxu0 %v2035
    %2361 = vmatprep.mubr.bf16.mxu0 %v1314
    %2362 = vmatmul.mubr.bf16.gmra.mrb[0].mxu0 %v1313
    %v2363 = vpop.f32.mrb[0].mxu0
    %v2364 = vadd.f32 %v955, %v2363
    %v2365 = vpop.f32.mrb[0].mxu0
    %v2366 = vadd.f32 %v957, %v2365
    %v2367 = vpop.f32.mrb[0].mxu0
    %v2368 = vadd.f32 %v959, %v2367
    %v2369 = vpop.f32.mrb[0].mxu0
    %v2370 = vadd.f32 %v961, %v2369
    %2371 = vmatprep.mubr.bf16.mxu0 %v1318
    %2372 = vmatmul.mubr.bf16.gmra.mrb[0].mxu0 %v1317
    %v2373 = vpop.f32.mrb[0].mxu0
    %v2374 = vadd.f32 %v965, %v2373
    %v2375 = vpop.f32.mrb[0].mxu0
    %v2376 = vadd.f32 %v967, %v2375
    %v2377 = vpop.f32.mrb[0].mxu0
    %v2378 = vadd.f32 %v969, %v2377
    %v2379 = vpop.f32.mrb[0].mxu0
    %v2380 = vadd.f32 %v971, %v2379
    %2381 = vmatprep.mubr.bf16.mxu0 %v1322
    %2382 = vmatmul.mubr.bf16.gmra.mrb[0].mxu0 %v1321
    %v2383 = vpop.f32.mrb[0].mxu0
    %v2384 = vadd.f32 %v975, %v2383
    %v2385 = vpop.f32.mrb[0].mxu0
    %v2386 = vadd.f32 %v977, %v2385
    %v2387 = vpop.f32.mrb[0].mxu0
    %v2388 = vadd.f32 %v979, %v2387
    %v2389 = vpop.f32.mrb[0].mxu0
    %v2390 = vadd.f32 %v981, %v2389
    %2391 = vmatprep.mubr.bf16.mxu0 %v1326
    %2392 = vmatmul.mubr.bf16.gmra.mrb[0].mxu0 %v1325
    %v2393 = vpop.f32.mrb[0].mxu0
    %v2394 = vadd.f32 %v985, %v2393
    %v2395 = vpop.f32.mrb[0].mxu0
    %v2396 = vadd.f32 %v987, %v2395
    %v2397 = vpop.f32.mrb[0].mxu0
    %v2398 = vadd.f32 %v989, %v2397
    %v2399 = vpop.f32.mrb[0].mxu0
    %v2400 = vadd.f32 %v991, %v2399
    %2401 = vmatprep.mubr.bf16.mxu0 %v1330
    %2402 = vmatmul.mubr.bf16.gmra.mrb[0].mxu0 %v1329
    %v2403 = vpop.f32.mrb[0].mxu0
    %v2404 = vadd.f32 %v995, %v2403
    %v2405 = vpop.f32.mrb[0].mxu0
    %v2406 = vadd.f32 %v997, %v2405
    %v2407 = vpop.f32.mrb[0].mxu0
    %v2408 = vadd.f32 %v999, %v2407
    %v2409 = vpop.f32.mrb[0].mxu0
    %v2410 = vadd.f32 %v1001, %v2409
    %2411 = vmatprep.mubr.bf16.mxu0 %v1334
    %2412 = vmatmul.mubr.bf16.gmra.mrb[0].mxu0 %v1333
    %v2413 = vpop.f32.mrb[0].mxu0
    %v2414 = vadd.f32 %v1005, %v2413
    %v2415 = vpop.f32.mrb[0].mxu0
    %v2416 = vadd.f32 %v1007, %v2415
    %v2417 = vpop.f32.mrb[0].mxu0
    %v2418 = vadd.f32 %v1009, %v2417
    %v2419 = vpop.f32.mrb[0].mxu0
    %v2420 = vadd.f32 %v1011, %v2419
    %2421 = vmatprep.mubr.bf16.mxu0 %v1338
    %2422 = vmatmul.mubr.bf16.gmra.mrb[0].mxu0 %v1337
    %v2423 = vpop.f32.mrb[0].mxu0
    %v2424 = vadd.f32 %v1015, %v2423
    %v2425 = vpop.f32.mrb[0].mxu0
    %v2426 = vadd.f32 %v1017, %v2425
    %v2427 = vpop.f32.mrb[0].mxu0
    %v2428 = vadd.f32 %v1019, %v2427
    %v2429 = vpop.f32.mrb[0].mxu0
    %v2430 = vadd.f32 %v1021, %v2429
    %2431 = vdwg.mxu0
    %2432 = vmatprep.subr.bf16.mxu0 %v2042
    %2433 = vmatpush1.bf16.msra.mxu0 %v2041
    %2434 = vmatprep.subr.bf16.mxu0 %v2048
    %2435 = vmatpush1.bf16.msra.mxu0 %v2047
    %2436 = vmatprep.subr.bf16.mxu0 %v2054
    %2437 = vmatpush1.bf16.msra.mxu0 %v2053
    %2438 = vmatprep.subr.bf16.mxu0 %v2060
    %2439 = vmatpush1.bf16.msra.mxu0 %v2059
    %2440 = vmatprep.subr.bf16.mxu0 %v2066
    %2441 = vmatpush1.bf16.msra.mxu0 %v2065
    %2442 = vmatprep.subr.bf16.mxu0 %v2072
    %2443 = vmatpush1.bf16.msra.mxu0 %v2071
    %2444 = vmatprep.subr.bf16.mxu0 %v2078
    %2445 = vmatpush1.bf16.msra.mxu0 %v2077
    %2446 = vmatprep.subr.bf16.mxu0 %v2084
    %2447 = vmatpush1.bf16.msra.mxu0 %v2083
    %2448 = vmatprep.subr.bf16.mxu0 %v2090
    %2449 = vmatpush1.bf16.msra.mxu0 %v2089
    %2450 = vmatprep.subr.bf16.mxu0 %v2096
    %2451 = vmatpush1.bf16.msra.mxu0 %v2095
    %2452 = vmatprep.subr.bf16.mxu0 %v2102
    %2453 = vmatpush1.bf16.msra.mxu0 %v2101
    %2454 = vmatprep.subr.bf16.mxu0 %v2108
    %2455 = vmatpush1.bf16.msra.mxu0 %v2107
    %2456 = vmatprep.subr.bf16.mxu0 %v2114
    %2457 = vmatpush1.bf16.msra.mxu0 %v2113
    %2458 = vmatprep.subr.bf16.mxu0 %v2120
    %2459 = vmatpush1.bf16.msra.mxu0 %v2119
    %2460 = vmatprep.subr.bf16.mxu0 %v2126
    %2461 = vmatpush1.bf16.msra.mxu0 %v2125
    %2462 = vmatprep.subr.bf16.mxu0 %v2132
    %2463 = vmatpush1.bf16.msra.mxu0 %v2131
    %2464 = vmatprep.mubr.bf16.mxu0 %v1316
    %2465 = vmatmul.mubr.bf16.gmra.mrb[0].mxu0 %v1315
    %v2466 = vpop.f32.mrb[0].mxu0
    %v2467 = vadd.f32 %v2364, %v2466
    %v2468 = vpop.f32.mrb[0].mxu0
    %v2469 = vadd.f32 %v2366, %v2468
    %v2470 = vpop.f32.mrb[0].mxu0
    %v2471 = vadd.f32 %v2368, %v2470
    %v2472 = vpop.f32.mrb[0].mxu0
    %v2473 = vadd.f32 %v2370, %v2472
    %2474 = vmatprep.mubr.bf16.mxu0 %v1320
    %2475 = vmatmul.mubr.bf16.gmra.mrb[0].mxu0 %v1319
    %v2476 = vpop.f32.mrb[0].mxu0
    %v2477 = vadd.f32 %v2374, %v2476
    %v2478 = vpop.f32.mrb[0].mxu0
    %v2479 = vadd.f32 %v2376, %v2478
    %v2480 = vpop.f32.mrb[0].mxu0
    %v2481 = vadd.f32 %v2378, %v2480
    %v2482 = vpop.f32.mrb[0].mxu0
    %v2483 = vadd.f32 %v2380, %v2482
    %2484 = vmatprep.mubr.bf16.mxu0 %v1324
    %2485 = vmatmul.mubr.bf16.gmra.mrb[0].mxu0 %v1323
    %v2486 = vpop.f32.mrb[0].mxu0
    %v2487 = vadd.f32 %v2384, %v2486
    %v2488 = vpop.f32.mrb[0].mxu0
    %v2489 = vadd.f32 %v2386, %v2488
    %v2490 = vpop.f32.mrb[0].mxu0
    %v2491 = vadd.f32 %v2388, %v2490
    %v2492 = vpop.f32.mrb[0].mxu0
    %v2493 = vadd.f32 %v2390, %v2492
    %2494 = vmatprep.mubr.bf16.mxu0 %v1328
    %2495 = vmatmul.mubr.bf16.gmra.mrb[0].mxu0 %v1327
    %v2496 = vpop.f32.mrb[0].mxu0
    %v2497 = vadd.f32 %v2394, %v2496
    %v2498 = vpop.f32.mrb[0].mxu0
    %v2499 = vadd.f32 %v2396, %v2498
    %v2500 = vpop.f32.mrb[0].mxu0
    %v2501 = vadd.f32 %v2398, %v2500
    %v2502 = vpop.f32.mrb[0].mxu0
    %v2503 = vadd.f32 %v2400, %v2502
    %2504 = vmatprep.mubr.bf16.mxu0 %v1332
    %2505 = vmatmul.mubr.bf16.gmra.mrb[0].mxu0 %v1331
    %v2506 = vpop.f32.mrb[0].mxu0
    %v2507 = vadd.f32 %v2404, %v2506
    %v2508 = vpop.f32.mrb[0].mxu0
    %v2509 = vadd.f32 %v2406, %v2508
    %v2510 = vpop.f32.mrb[0].mxu0
    %v2511 = vadd.f32 %v2408, %v2510
    %v2512 = vpop.f32.mrb[0].mxu0
    %v2513 = vadd.f32 %v2410, %v2512
    %2514 = vmatprep.mubr.bf16.mxu0 %v1336
    %2515 = vmatmul.mubr.bf16.gmra.mrb[0].mxu0 %v1335
    %v2516 = vpop.f32.mrb[0].mxu0
    %v2517 = vadd.f32 %v2414, %v2516
    %v2518 = vpop.f32.mrb[0].mxu0
    %v2519 = vadd.f32 %v2416, %v2518
    %v2520 = vpop.f32.mrb[0].mxu0
    %v2521 = vadd.f32 %v2418, %v2520
    %v2522 = vpop.f32.mrb[0].mxu0
    %v2523 = vadd.f32 %v2420, %v2522
    %2524 = vmatprep.mubr.bf16.mxu0 %v1340
    %2525 = vmatmul.mubr.bf16.gmra.mrb[0].mxu0 %v1339
    %v2526 = vpop.f32.mrb[0].mxu0
    %v2527 = vadd.f32 %v2424, %v2526
    %v2528 = vpop.f32.mrb[0].mxu0
    %v2529 = vadd.f32 %v2426, %v2528
    %v2530 = vpop.f32.mrb[0].mxu0
    %v2531 = vadd.f32 %v2428, %v2530
    %v2532 = vpop.f32.mrb[0].mxu0
    %v2533 = vadd.f32 %v2430, %v2532
    %2534 = vdwg.mxu0
    %2535 = vmatprep.subr.bf16.mxu0 %v1948
    %2536 = vmatpush1.bf16.msra.mxu0 %v1947
    %2537 = vmatprep.subr.bf16.mxu0 %v1954
    %2538 = vmatpush1.bf16.msra.mxu0 %v1953
    %2539 = vmatprep.subr.bf16.mxu0 %v1960
    %2540 = vmatpush1.bf16.msra.mxu0 %v1959
    %2541 = vmatprep.subr.bf16.mxu0 %v1966
    %2542 = vmatpush1.bf16.msra.mxu0 %v1965
    %2543 = vmatprep.subr.bf16.mxu0 %v1972
    %2544 = vmatpush1.bf16.msra.mxu0 %v1971
    %2545 = vmatprep.subr.bf16.mxu0 %v1978
    %2546 = vmatpush1.bf16.msra.mxu0 %v1977
    %2547 = vmatprep.subr.bf16.mxu0 %v1984
    %2548 = vmatpush1.bf16.msra.mxu0 %v1983
    %2549 = vmatprep.subr.bf16.mxu0 %v1990
    %2550 = vmatpush1.bf16.msra.mxu0 %v1989
    %2551 = vmatprep.subr.bf16.mxu0 %v1996
    %2552 = vmatpush1.bf16.msra.mxu0 %v1995
    %2553 = vmatprep.subr.bf16.mxu0 %v2002
    %2554 = vmatpush1.bf16.msra.mxu0 %v2001
    %2555 = vmatprep.subr.bf16.mxu0 %v2008
    %2556 = vmatpush1.bf16.msra.mxu0 %v2007
    %2557 = vmatprep.subr.bf16.mxu0 %v2014
    %2558 = vmatpush1.bf16.msra.mxu0 %v2013
    %2559 = vmatprep.subr.bf16.mxu0 %v2020
    %2560 = vmatpush1.bf16.msra.mxu0 %v2019
    %2561 = vmatprep.subr.bf16.mxu0 %v2026
    %2562 = vmatpush1.bf16.msra.mxu0 %v2025
    %2563 = vmatprep.subr.bf16.mxu0 %v2032
    %2564 = vmatpush1.bf16.msra.mxu0 %v2031
    %2565 = vmatprep.subr.bf16.mxu0 %v2038
    %2566 = vmatpush1.bf16.msra.mxu0 %v2037
    %2567 = vmatprep.mubr.bf16.mxu0 %v1314
    %2568 = vmatmul.mubr.bf16.gmra.mrb[0].mxu0 %v1313
    %v2569 = vpop.f32.mrb[0].mxu0
    %v2570 = vadd.f32 %v1058, %v2569
    %v2571 = vpop.f32.mrb[0].mxu0
    %v2572 = vadd.f32 %v1060, %v2571
    %v2573 = vpop.f32.mrb[0].mxu0
    %v2574 = vadd.f32 %v1062, %v2573
    %v2575 = vpop.f32.mrb[0].mxu0
    %v2576 = vadd.f32 %v1064, %v2575
    %2577 = vmatprep.mubr.bf16.mxu0 %v1318
    %2578 = vmatmul.mubr.bf16.gmra.mrb[0].mxu0 %v1317
    %v2579 = vpop.f32.mrb[0].mxu0
    %v2580 = vadd.f32 %v1068, %v2579
    %v2581 = vpop.f32.mrb[0].mxu0
    %v2582 = vadd.f32 %v1070, %v2581
    %v2583 = vpop.f32.mrb[0].mxu0
    %v2584 = vadd.f32 %v1072, %v2583
    %v2585 = vpop.f32.mrb[0].mxu0
    %v2586 = vadd.f32 %v1074, %v2585
    %2587 = vmatprep.mubr.bf16.mxu0 %v1322
    %2588 = vmatmul.mubr.bf16.gmra.mrb[0].mxu0 %v1321
    %v2589 = vpop.f32.mrb[0].mxu0
    %v2590 = vadd.f32 %v1078, %v2589
    %v2591 = vpop.f32.mrb[0].mxu0
    %v2592 = vadd.f32 %v1080, %v2591
    %v2593 = vpop.f32.mrb[0].mxu0
    %v2594 = vadd.f32 %v1082, %v2593
    %v2595 = vpop.f32.mrb[0].mxu0
    %v2596 = vadd.f32 %v1084, %v2595
    %2597 = vmatprep.mubr.bf16.mxu0 %v1326
    %2598 = vmatmul.mubr.bf16.gmra.mrb[0].mxu0 %v1325
    %v2599 = vpop.f32.mrb[0].mxu0
    %v2600 = vadd.f32 %v1088, %v2599
    %v2601 = vpop.f32.mrb[0].mxu0
    %v2602 = vadd.f32 %v1090, %v2601
    %v2603 = vpop.f32.mrb[0].mxu0
    %v2604 = vadd.f32 %v1092, %v2603
    %v2605 = vpop.f32.mrb[0].mxu0
    %v2606 = vadd.f32 %v1094, %v2605
    %2607 = vmatprep.mubr.bf16.mxu0 %v1330
    %2608 = vmatmul.mubr.bf16.gmra.mrb[0].mxu0 %v1329
    %v2609 = vpop.f32.mrb[0].mxu0
    %v2610 = vadd.f32 %v1098, %v2609
    %v2611 = vpop.f32.mrb[0].mxu0
    %v2612 = vadd.f32 %v1100, %v2611
    %v2613 = vpop.f32.mrb[0].mxu0
    %v2614 = vadd.f32 %v1102, %v2613
    %v2615 = vpop.f32.mrb[0].mxu0
    %v2616 = vadd.f32 %v1104, %v2615
    %2617 = vmatprep.mubr.bf16.mxu0 %v1334
    %2618 = vmatmul.mubr.bf16.gmra.mrb[0].mxu0 %v1333
    %v2619 = vpop.f32.mrb[0].mxu0
    %v2620 = vadd.f32 %v1108, %v2619
    %v2621 = vpop.f32.mrb[0].mxu0
    %v2622 = vadd.f32 %v1110, %v2621
    %v2623 = vpop.f32.mrb[0].mxu0
    %v2624 = vadd.f32 %v1112, %v2623
    %v2625 = vpop.f32.mrb[0].mxu0
    %v2626 = vadd.f32 %v1114, %v2625
    %2627 = vmatprep.mubr.bf16.mxu0 %v1338
    %2628 = vmatmul.mubr.bf16.gmra.mrb[0].mxu0 %v1337
    %v2629 = vpop.f32.mrb[0].mxu0
    %v2630 = vadd.f32 %v1118, %v2629
    %v2631 = vpop.f32.mrb[0].mxu0
    %v2632 = vadd.f32 %v1120, %v2631
    %v2633 = vpop.f32.mrb[0].mxu0
    %v2634 = vadd.f32 %v1122, %v2633
    %v2635 = vpop.f32.mrb[0].mxu0
    %v2636 = vadd.f32 %v1124, %v2635
    %2637 = vdwg.mxu0
    %2638 = vmatprep.subr.bf16.mxu0 %v2044
    %2639 = vmatpush1.bf16.msra.mxu0 %v2043
    %2640 = vmatprep.subr.bf16.mxu0 %v2050
    %2641 = vmatpush1.bf16.msra.mxu0 %v2049
    %2642 = vmatprep.subr.bf16.mxu0 %v2056
    %2643 = vmatpush1.bf16.msra.mxu0 %v2055
    %2644 = vmatprep.subr.bf16.mxu0 %v2062
    %2645 = vmatpush1.bf16.msra.mxu0 %v2061
    %2646 = vmatprep.subr.bf16.mxu0 %v2068
    %2647 = vmatpush1.bf16.msra.mxu0 %v2067
    %2648 = vmatprep.subr.bf16.mxu0 %v2074
    %2649 = vmatpush1.bf16.msra.mxu0 %v2073
    %2650 = vmatprep.subr.bf16.mxu0 %v2080
    %2651 = vmatpush1.bf16.msra.mxu0 %v2079
    %2652 = vmatprep.subr.bf16.mxu0 %v2086
    %2653 = vmatpush1.bf16.msra.mxu0 %v2085
    %2654 = vmatprep.subr.bf16.mxu0 %v2092
    %2655 = vmatpush1.bf16.msra.mxu0 %v2091
    %2656 = vmatprep.subr.bf16.mxu0 %v2098
    %2657 = vmatpush1.bf16.msra.mxu0 %v2097
    %2658 = vmatprep.subr.bf16.mxu0 %v2104
    %2659 = vmatpush1.bf16.msra.mxu0 %v2103
    %2660 = vmatprep.subr.bf16.mxu0 %v2110
    %2661 = vmatpush1.bf16.msra.mxu0 %v2109
    %2662 = vmatprep.subr.bf16.mxu0 %v2116
    %2663 = vmatpush1.bf16.msra.mxu0 %v2115
    %2664 = vmatprep.subr.bf16.mxu0 %v2122
    %2665 = vmatpush1.bf16.msra.mxu0 %v2121
    %2666 = vmatprep.subr.bf16.mxu0 %v2128
    %2667 = vmatpush1.bf16.msra.mxu0 %v2127
    %2668 = vmatprep.subr.bf16.mxu0 %v2134
    %2669 = vmatpush1.bf16.msra.mxu0 %v2133
    %2670 = vmatprep.mubr.bf16.mxu0 %v1316
    %2671 = vmatmul.mubr.bf16.gmra.mrb[0].mxu0 %v1315
    %v2672 = vpop.f32.mrb[0].mxu0
    %v2673 = vadd.f32 %v2570, %v2672
    %v2674 = vpop.f32.mrb[0].mxu0
    %v2675 = vadd.f32 %v2572, %v2674
    %v2676 = vpop.f32.mrb[0].mxu0
    %v2677 = vadd.f32 %v2574, %v2676
    %v2678 = vpop.f32.mrb[0].mxu0
    %v2679 = vadd.f32 %v2576, %v2678
    %2680 = vmatprep.mubr.bf16.mxu0 %v1320
    %2681 = vmatmul.mubr.bf16.gmra.mrb[0].mxu0 %v1319
    %v2682 = vpop.f32.mrb[0].mxu0
    %v2683 = vadd.f32 %v2580, %v2682
    %v2684 = vpop.f32.mrb[0].mxu0
    %v2685 = vadd.f32 %v2582, %v2684
    %v2686 = vpop.f32.mrb[0].mxu0
    %v2687 = vadd.f32 %v2584, %v2686
    %v2688 = vpop.f32.mrb[0].mxu0
    %v2689 = vadd.f32 %v2586, %v2688
    %2690 = vmatprep.mubr.bf16.mxu0 %v1324
    %2691 = vmatmul.mubr.bf16.gmra.mrb[0].mxu0 %v1323
    %v2692 = vpop.f32.mrb[0].mxu0
    %v2693 = vadd.f32 %v2590, %v2692
    %v2694 = vpop.f32.mrb[0].mxu0
    %v2695 = vadd.f32 %v2592, %v2694
    %v2696 = vpop.f32.mrb[0].mxu0
    %v2697 = vadd.f32 %v2594, %v2696
    %v2698 = vpop.f32.mrb[0].mxu0
    %v2699 = vadd.f32 %v2596, %v2698
    %2700 = vmatprep.mubr.bf16.mxu0 %v1328
    %2701 = vmatmul.mubr.bf16.gmra.mrb[0].mxu0 %v1327
    %v2702 = vpop.f32.mrb[0].mxu0
    %v2703 = vadd.f32 %v2600, %v2702
    %v2704 = vpop.f32.mrb[0].mxu0
    %v2705 = vadd.f32 %v2602, %v2704
    %v2706 = vpop.f32.mrb[0].mxu0
    %v2707 = vadd.f32 %v2604, %v2706
    %v2708 = vpop.f32.mrb[0].mxu0
    %v2709 = vadd.f32 %v2606, %v2708
    %2710 = vmatprep.mubr.bf16.mxu0 %v1332
    %2711 = vmatmul.mubr.bf16.gmra.mrb[0].mxu0 %v1331
    %v2712 = vpop.f32.mrb[0].mxu0
    %v2713 = vadd.f32 %v2610, %v2712
    %v2714 = vpop.f32.mrb[0].mxu0
    %v2715 = vadd.f32 %v2612, %v2714
    %v2716 = vpop.f32.mrb[0].mxu0
    %v2717 = vadd.f32 %v2614, %v2716
    %v2718 = vpop.f32.mrb[0].mxu0
    %v2719 = vadd.f32 %v2616, %v2718
    %2720 = vmatprep.mubr.bf16.mxu0 %v1336
    %2721 = vmatmul.mubr.bf16.gmra.mrb[0].mxu0 %v1335
    %v2722 = vpop.f32.mrb[0].mxu0
    %v2723 = vadd.f32 %v2620, %v2722
    %v2724 = vpop.f32.mrb[0].mxu0
    %v2725 = vadd.f32 %v2622, %v2724
    %v2726 = vpop.f32.mrb[0].mxu0
    %v2727 = vadd.f32 %v2624, %v2726
    %v2728 = vpop.f32.mrb[0].mxu0
    %v2729 = vadd.f32 %v2626, %v2728
    %2730 = vmatprep.mubr.bf16.mxu0 %v1340
    %2731 = vmatmul.mubr.bf16.gmra.mrb[0].mxu0 %v1339
    %v2732 = vpop.f32.mrb[0].mxu0
    %v2733 = vadd.f32 %v2630, %v2732
    %v2734 = vpop.f32.mrb[0].mxu0
    %v2735 = vadd.f32 %v2632, %v2734
    %v2736 = vpop.f32.mrb[0].mxu0
    %v2737 = vadd.f32 %v2634, %v2736
    %v2738 = vpop.f32.mrb[0].mxu0
    %v2739 = vadd.f32 %v2636, %v2738
    %2740 = vdwg.mxu0
    %2741 = vmatprep.subr.bf16.mxu0 %v1950
    %2742 = vmatpush1.bf16.msra.mxu0 %v1949
    %2743 = vmatprep.subr.bf16.mxu0 %v1956
    %2744 = vmatpush1.bf16.msra.mxu0 %v1955
    %2745 = vmatprep.subr.bf16.mxu0 %v1962
    %2746 = vmatpush1.bf16.msra.mxu0 %v1961
    %2747 = vmatprep.subr.bf16.mxu0 %v1968
    %2748 = vmatpush1.bf16.msra.mxu0 %v1967
    %2749 = vmatprep.subr.bf16.mxu0 %v1974
    %2750 = vmatpush1.bf16.msra.mxu0 %v1973
    %2751 = vmatprep.subr.bf16.mxu0 %v1980
    %2752 = vmatpush1.bf16.msra.mxu0 %v1979
    %2753 = vmatprep.subr.bf16.mxu0 %v1986
    %2754 = vmatpush1.bf16.msra.mxu0 %v1985
    %2755 = vmatprep.subr.bf16.mxu0 %v1992
    %2756 = vmatpush1.bf16.msra.mxu0 %v1991
    %2757 = vmatprep.subr.bf16.mxu0 %v1998
    %2758 = vmatpush1.bf16.msra.mxu0 %v1997
    %2759 = vmatprep.subr.bf16.mxu0 %v2004
    %2760 = vmatpush1.bf16.msra.mxu0 %v2003
    %2761 = vmatprep.subr.bf16.mxu0 %v2010
    %2762 = vmatpush1.bf16.msra.mxu0 %v2009
    %2763 = vmatprep.subr.bf16.mxu0 %v2016
    %2764 = vmatpush1.bf16.msra.mxu0 %v2015
    %2765 = vmatprep.subr.bf16.mxu0 %v2022
    %2766 = vmatpush1.bf16.msra.mxu0 %v2021
    %2767 = vmatprep.subr.bf16.mxu0 %v2028
    %2768 = vmatpush1.bf16.msra.mxu0 %v2027
    %2769 = vmatprep.subr.bf16.mxu0 %v2034
    %2770 = vmatpush1.bf16.msra.mxu0 %v2033
    %2771 = vmatprep.subr.bf16.mxu0 %v2040
    %2772 = vmatpush1.bf16.msra.mxu0 %v2039
    %2773 = vmatprep.mubr.bf16.mxu0 %v1314
    %2774 = vmatmul.mubr.bf16.gmra.mrb[0].mxu0 %v1313
    %v2775 = vpop.f32.mrb[0].mxu0
    %v2776 = vadd.f32 %v1161, %v2775
    %v2777 = vpop.f32.mrb[0].mxu0
    %v2778 = vadd.f32 %v1163, %v2777
    %v2779 = vpop.f32.mrb[0].mxu0
    %v2780 = vadd.f32 %v1165, %v2779
    %v2781 = vpop.f32.mrb[0].mxu0
    %v2782 = vadd.f32 %v1167, %v2781
    %2783 = vmatprep.mubr.bf16.mxu0 %v1318
    %2784 = vmatmul.mubr.bf16.gmra.mrb[0].mxu0 %v1317
    %v2785 = vpop.f32.mrb[0].mxu0
    %v2786 = vadd.f32 %v1171, %v2785
    %v2787 = vpop.f32.mrb[0].mxu0
    %v2788 = vadd.f32 %v1173, %v2787
    %v2789 = vpop.f32.mrb[0].mxu0
    %v2790 = vadd.f32 %v1175, %v2789
    %v2791 = vpop.f32.mrb[0].mxu0
    %v2792 = vadd.f32 %v1177, %v2791
    %2793 = vmatprep.mubr.bf16.mxu0 %v1322
    %2794 = vmatmul.mubr.bf16.gmra.mrb[0].mxu0 %v1321
    %v2795 = vpop.f32.mrb[0].mxu0
    %v2796 = vadd.f32 %v1181, %v2795
    %v2797 = vpop.f32.mrb[0].mxu0
    %v2798 = vadd.f32 %v1183, %v2797
    %v2799 = vpop.f32.mrb[0].mxu0
    %v2800 = vadd.f32 %v1185, %v2799
    %v2801 = vpop.f32.mrb[0].mxu0
    %v2802 = vadd.f32 %v1187, %v2801
    %2803 = vmatprep.mubr.bf16.mxu0 %v1326
    %2804 = vmatmul.mubr.bf16.gmra.mrb[0].mxu0 %v1325
    %v2805 = vpop.f32.mrb[0].mxu0
    %v2806 = vadd.f32 %v1191, %v2805
    %v2807 = vpop.f32.mrb[0].mxu0
    %v2808 = vadd.f32 %v1193, %v2807
    %v2809 = vpop.f32.mrb[0].mxu0
    %v2810 = vadd.f32 %v1195, %v2809
    %v2811 = vpop.f32.mrb[0].mxu0
    %v2812 = vadd.f32 %v1197, %v2811
    %2813 = vmatprep.mubr.bf16.mxu0 %v1330
    %2814 = vmatmul.mubr.bf16.gmra.mrb[0].mxu0 %v1329
    %v2815 = vpop.f32.mrb[0].mxu0
    %v2816 = vadd.f32 %v1201, %v2815
    %v2817 = vpop.f32.mrb[0].mxu0
    %v2818 = vadd.f32 %v1203, %v2817
    %v2819 = vpop.f32.mrb[0].mxu0
    %v2820 = vadd.f32 %v1205, %v2819
    %v2821 = vpop.f32.mrb[0].mxu0
    %v2822 = vadd.f32 %v1207, %v2821
    %2823 = vmatprep.mubr.bf16.mxu0 %v1334
    %2824 = vmatmul.mubr.bf16.gmra.mrb[0].mxu0 %v1333
    %v2825 = vpop.f32.mrb[0].mxu0
    %v2826 = vadd.f32 %v1211, %v2825
    %v2827 = vpop.f32.mrb[0].mxu0
    %v2828 = vadd.f32 %v1213, %v2827
    %v2829 = vpop.f32.mrb[0].mxu0
    %v2830 = vadd.f32 %v1215, %v2829
    %v2831 = vpop.f32.mrb[0].mxu0
    %v2832 = vadd.f32 %v1217, %v2831
    %2833 = vmatprep.mubr.bf16.mxu0 %v1338
    %2834 = vmatmul.mubr.bf16.gmra.mrb[0].mxu0 %v1337
    %v2835 = vpop.f32.mrb[0].mxu0
    %v2836 = vadd.f32 %v1221, %v2835
    %v2837 = vpop.f32.mrb[0].mxu0
    %v2838 = vadd.f32 %v1223, %v2837
    %v2839 = vpop.f32.mrb[0].mxu0
    %v2840 = vadd.f32 %v1225, %v2839
    %v2841 = vpop.f32.mrb[0].mxu0
    %v2842 = vadd.f32 %v1227, %v2841
    %2843 = vdwg.mxu0
    %2844 = vmatprep.subr.bf16.mxu0 %v2046
    %2845 = vmatpush1.bf16.msra.mxu0 %v2045
    %2846 = vmatprep.subr.bf16.mxu0 %v2052
    %2847 = vmatpush1.bf16.msra.mxu0 %v2051
    %2848 = vmatprep.subr.bf16.mxu0 %v2058
    %2849 = vmatpush1.bf16.msra.mxu0 %v2057
    %2850 = vmatprep.subr.bf16.mxu0 %v2064
    %2851 = vmatpush1.bf16.msra.mxu0 %v2063
    %2852 = vmatprep.subr.bf16.mxu0 %v2070
    %2853 = vmatpush1.bf16.msra.mxu0 %v2069
    %2854 = vmatprep.subr.bf16.mxu0 %v2076
    %2855 = vmatpush1.bf16.msra.mxu0 %v2075
    %2856 = vmatprep.subr.bf16.mxu0 %v2082
    %2857 = vmatpush1.bf16.msra.mxu0 %v2081
    %2858 = vmatprep.subr.bf16.mxu0 %v2088
    %2859 = vmatpush1.bf16.msra.mxu0 %v2087
    %2860 = vmatprep.subr.bf16.mxu0 %v2094
    %2861 = vmatpush1.bf16.msra.mxu0 %v2093
    %2862 = vmatprep.subr.bf16.mxu0 %v2100
    %2863 = vmatpush1.bf16.msra.mxu0 %v2099
    %2864 = vmatprep.subr.bf16.mxu0 %v2106
    %2865 = vmatpush1.bf16.msra.mxu0 %v2105
    %2866 = vmatprep.subr.bf16.mxu0 %v2112
    %2867 = vmatpush1.bf16.msra.mxu0 %v2111
    %2868 = vmatprep.subr.bf16.mxu0 %v2118
    %2869 = vmatpush1.bf16.msra.mxu0 %v2117
    %2870 = vmatprep.subr.bf16.mxu0 %v2124
    %2871 = vmatpush1.bf16.msra.mxu0 %v2123
    %2872 = vmatprep.subr.bf16.mxu0 %v2130
    %2873 = vmatpush1.bf16.msra.mxu0 %v2129
    %2874 = vmatprep.subr.bf16.mxu0 %v2136
    %2875 = vmatpush1.bf16.msra.mxu0 %v2135
    %2876 = vmatprep.mubr.bf16.mxu0 %v1316
    %2877 = vmatmul.mubr.bf16.gmra.mrb[0].mxu0 %v1315
    %v2878 = vpop.f32.mrb[0].mxu0
    %v2879 = vadd.f32 %v2776, %v2878
    %v2880 = vpop.f32.mrb[0].mxu0
    %v2881 = vadd.f32 %v2778, %v2880
    %v2882 = vpop.f32.mrb[0].mxu0
    %v2883 = vadd.f32 %v2780, %v2882
    %v2884 = vpop.f32.mrb[0].mxu0
    %v2885 = vadd.f32 %v2782, %v2884
    %2886 = vmatprep.mubr.bf16.mxu0 %v1320
    %2887 = vmatmul.mubr.bf16.gmra.mrb[0].mxu0 %v1319
    %v2888 = vpop.f32.mrb[0].mxu0
    %v2889 = vadd.f32 %v2786, %v2888
    %v2890 = vpop.f32.mrb[0].mxu0
    %v2891 = vadd.f32 %v2788, %v2890
    %v2892 = vpop.f32.mrb[0].mxu0
    %v2893 = vadd.f32 %v2790, %v2892
    %v2894 = vpop.f32.mrb[0].mxu0
    %v2895 = vadd.f32 %v2792, %v2894
    %2896 = vmatprep.mubr.bf16.mxu0 %v1324
    %2897 = vmatmul.mubr.bf16.gmra.mrb[0].mxu0 %v1323
    %v2898 = vpop.f32.mrb[0].mxu0
    %v2899 = vadd.f32 %v2796, %v2898
    %v2900 = vpop.f32.mrb[0].mxu0
    %v2901 = vadd.f32 %v2798, %v2900
    %v2902 = vpop.f32.mrb[0].mxu0
    %v2903 = vadd.f32 %v2800, %v2902
    %v2904 = vpop.f32.mrb[0].mxu0
    %v2905 = vadd.f32 %v2802, %v2904
    %2906 = vmatprep.mubr.bf16.mxu0 %v1328
    %2907 = vmatmul.mubr.bf16.gmra.mrb[0].mxu0 %v1327
    %v2908 = vpop.f32.mrb[0].mxu0
    %v2909 = vadd.f32 %v2806, %v2908
    %v2910 = vpop.f32.mrb[0].mxu0
    %v2911 = vadd.f32 %v2808, %v2910
    %v2912 = vpop.f32.mrb[0].mxu0
    %v2913 = vadd.f32 %v2810, %v2912
    %v2914 = vpop.f32.mrb[0].mxu0
    %v2915 = vadd.f32 %v2812, %v2914
    %2916 = vmatprep.mubr.bf16.mxu0 %v1332
    %2917 = vmatmul.mubr.bf16.gmra.mrb[0].mxu0 %v1331
    %v2918 = vpop.f32.mrb[0].mxu0
    %v2919 = vadd.f32 %v2816, %v2918
    %v2920 = vpop.f32.mrb[0].mxu0
    %v2921 = vadd.f32 %v2818, %v2920
    %v2922 = vpop.f32.mrb[0].mxu0
    %v2923 = vadd.f32 %v2820, %v2922
    %v2924 = vpop.f32.mrb[0].mxu0
    %v2925 = vadd.f32 %v2822, %v2924
    %2926 = vmatprep.mubr.bf16.mxu0 %v1336
    %2927 = vmatmul.mubr.bf16.gmra.mrb[0].mxu0 %v1335
    %v2928 = vpop.f32.mrb[0].mxu0
    %v2929 = vadd.f32 %v2826, %v2928
    %v2930 = vpop.f32.mrb[0].mxu0
    %v2931 = vadd.f32 %v2828, %v2930
    %v2932 = vpop.f32.mrb[0].mxu0
    %v2933 = vadd.f32 %v2830, %v2932
    %v2934 = vpop.f32.mrb[0].mxu0
    %v2935 = vadd.f32 %v2832, %v2934
    %2936 = vmatprep.mubr.bf16.mxu0 %v1340
    %2937 = vmatmul.mubr.bf16.gmra.mrb[0].mxu0 %v1339
    %v2938 = vpop.f32.mrb[0].mxu0
    %v2939 = vadd.f32 %v2836, %v2938
    %v2940 = vpop.f32.mrb[0].mxu0
    %v2941 = vadd.f32 %v2838, %v2940
    %v2942 = vpop.f32.mrb[0].mxu0
    %v2943 = vadd.f32 %v2840, %v2942
    %v2944 = vpop.f32.mrb[0].mxu0
    %v2945 = vadd.f32 %v2842, %v2944
    %2946 = vdwg.mxu0
    %v2947 = vld [vmem:[%s5] sm:$0x3f]
    %v2949 = vlaneseq
    %v2950 = vshrl.u32 %v2949, 7
    %v2951 = vsub.s32 0, %v2950
    %v2952 = vrot.slane %v2947, %v2951
    %v2953 = vlaneseq
    %v2954 = vshrl.u32 %v2953, 7
    %v2955 = vsub.s32 1, %v2954
    %v2956 = vrot.slane %v2947, %v2955
    %v2957 = vlaneseq
    %v2958 = vshrl.u32 %v2957, 7
    %v2959 = vsub.s32 2, %v2958
    %v2960 = vrot.slane %v2947, %v2959
    %v2961 = vlaneseq
    %v2962 = vshrl.u32 %v2961, 7
    %v2963 = vsub.s32 3, %v2962
    %v2964 = vrot.slane %v2947, %v2963
    %v2965 = vlaneseq
    %v2966 = vshrl.u32 %v2965, 7
    %v2967 = vsub.s32 4, %v2966
    %v2968 = vrot.slane %v2947, %v2967
    %v2969 = vlaneseq
    %v2970 = vshrl.u32 %v2969, 7
    %v2971 = vsub.s32 5, %v2970
    %v2972 = vrot.slane %v2947, %v2971
    %v2979 = vadd.f32 %v2467, %v2952
    %v2980 = vadd.f32 %v2469, %v2956
    %v2981 = vadd.f32 %v2673, %v2960
    %v2982 = vadd.f32 %v2675, %v2964
    %v2983 = vadd.f32 %v2879, %v2968
    %v2984 = vadd.f32 %v2881, %v2972
    %v2985 = vadd.f32 %v2471, %v2952
    %v2986 = vadd.f32 %v2473, %v2956
    %v2987 = vadd.f32 %v2677, %v2960
    %v2988 = vadd.f32 %v2679, %v2964
    %v2989 = vadd.f32 %v2883, %v2968
    %v2990 = vadd.f32 %v2885, %v2972
    %v2991 = vadd.f32 %v2477, %v2952
    %v2992 = vadd.f32 %v2479, %v2956
    %v2993 = vadd.f32 %v2683, %v2960
    %v2994 = vadd.f32 %v2685, %v2964
    %v2995 = vadd.f32 %v2889, %v2968
    %v2996 = vadd.f32 %v2891, %v2972
    %v2997 = vadd.f32 %v2481, %v2952
    %v2998 = vadd.f32 %v2483, %v2956
    %v2999 = vadd.f32 %v2687, %v2960
    %v3000 = vadd.f32 %v2689, %v2964
    %v3001 = vadd.f32 %v2893, %v2968
    %v3002 = vadd.f32 %v2895, %v2972
    %v3003 = vadd.f32 %v2487, %v2952
    %v3004 = vadd.f32 %v2489, %v2956
    %v3005 = vadd.f32 %v2693, %v2960
    %v3006 = vadd.f32 %v2695, %v2964
    %v3007 = vadd.f32 %v2899, %v2968
    %v3008 = vadd.f32 %v2901, %v2972
    %v3009 = vadd.f32 %v2491, %v2952
    %v3010 = vadd.f32 %v2493, %v2956
    %v3011 = vadd.f32 %v2697, %v2960
    %v3012 = vadd.f32 %v2699, %v2964
    %v3013 = vadd.f32 %v2903, %v2968
    %v3014 = vadd.f32 %v2905, %v2972
    %v3015 = vadd.f32 %v2497, %v2952
    %v3016 = vadd.f32 %v2499, %v2956
    %v3017 = vadd.f32 %v2703, %v2960
    %v3018 = vadd.f32 %v2705, %v2964
    %v3019 = vadd.f32 %v2909, %v2968
    %v3020 = vadd.f32 %v2911, %v2972
    %v3021 = vadd.f32 %v2501, %v2952
    %v3022 = vadd.f32 %v2503, %v2956
    %v3023 = vadd.f32 %v2707, %v2960
    %v3024 = vadd.f32 %v2709, %v2964
    %v3025 = vadd.f32 %v2913, %v2968
    %v3026 = vadd.f32 %v2915, %v2972
    %v3027 = vadd.f32 %v2507, %v2952
    %v3028 = vadd.f32 %v2509, %v2956
    %v3029 = vadd.f32 %v2713, %v2960
    %v3030 = vadd.f32 %v2715, %v2964
    %v3031 = vadd.f32 %v2919, %v2968
    %v3032 = vadd.f32 %v2921, %v2972
    %v3033 = vadd.f32 %v2511, %v2952
    %v3034 = vadd.f32 %v2513, %v2956
    %v3035 = vadd.f32 %v2717, %v2960
    %v3036 = vadd.f32 %v2719, %v2964
    %v3037 = vadd.f32 %v2923, %v2968
    %v3038 = vadd.f32 %v2925, %v2972
    %v3039 = vadd.f32 %v2517, %v2952
    %v3040 = vadd.f32 %v2519, %v2956
    %v3041 = vadd.f32 %v2723, %v2960
    %v3042 = vadd.f32 %v2725, %v2964
    %v3043 = vadd.f32 %v2929, %v2968
    %v3044 = vadd.f32 %v2931, %v2972
    %v3045 = vadd.f32 %v2521, %v2952
    %v3046 = vadd.f32 %v2523, %v2956
    %v3047 = vadd.f32 %v2727, %v2960
    %v3048 = vadd.f32 %v2729, %v2964
    %v3049 = vadd.f32 %v2933, %v2968
    %v3050 = vadd.f32 %v2935, %v2972
    %v3051 = vadd.f32 %v2527, %v2952
    %v3052 = vadd.f32 %v2529, %v2956
    %v3053 = vadd.f32 %v2733, %v2960
    %v3054 = vadd.f32 %v2735, %v2964
    %v3055 = vadd.f32 %v2939, %v2968
    %v3056 = vadd.f32 %v2941, %v2972
    %v3057 = vadd.f32 %v2531, %v2952
    %v3058 = vadd.f32 %v2533, %v2956
    %v3059 = vadd.f32 %v2737, %v2960
    %v3060 = vadd.f32 %v2739, %v2964
    %v3061 = vadd.f32 %v2943, %v2968
    %v3062 = vadd.f32 %v2945, %v2972
    %v3063 = vld [vmem:[%s6] sm:$0xff]
    %v3064 = vld [vmem:[%s6 + $0x8] sm:$0xff]
    %v3065 = vld [vmem:[%s6 + $0x10] sm:$0xff]
    %v3066 = vld [vmem:[%s6 + $0x18] sm:$0xff]
    %v3067 = vld [vmem:[%s6 + $0x20] sm:$0xff]
    %v3068 = vld [vmem:[%s6 + $0x28] sm:$0xff]
    %v3069 = vld [vmem:[%s6 + $0x30] sm:$0xff]
    %v3070 = vld [vmem:[%s6 + $0x38] sm:$0xff]
    %v3071 = vld [vmem:[%s6 + $0x40] sm:$0xff]
    %v3072 = vld [vmem:[%s6 + $0x48] sm:$0xff]
    %v3073 = vld [vmem:[%s6 + $0x50] sm:$0xff]
    %v3074 = vld [vmem:[%s6 + $0x58] sm:$0xff]
    %v3075 = vld [vmem:[%s6 + $0x60] sm:$0xff]
    %v3076 = vld [vmem:[%s6 + $0x68] sm:$0xff]
    %v3077 = vld [vmem:[%s6 + $0x70] sm:$0xff]
    %v3078 = vld [vmem:[%s6 + $0x78] sm:$0xff]
    %v3079 = vld [vmem:[%s6 + $0x80] sm:$0xff]
    %v3080 = vld [vmem:[%s6 + $0x88] sm:$0xff]
    %v3081 = vld [vmem:[%s6 + $0x90] sm:$0xff]
    %v3082 = vld [vmem:[%s6 + $0x98] sm:$0xff]
    %v3083 = vld [vmem:[%s6 + $0xa0] sm:$0xff]
    %v3084 = vunpack.c.l.bf16 %v3063
    %v3085 = vunpack.c.h.bf16 %v3063
    %v3086 = vunpack.c.l.bf16 %v3064
    %v3087 = vunpack.c.h.bf16 %v3064
    %v3088 = vunpack.c.l.bf16 %v3065
    %v3089 = vunpack.c.h.bf16 %v3065
    %v3090 = vunpack.c.l.bf16 %v3066
    %v3091 = vunpack.c.h.bf16 %v3066
    %v3092 = vunpack.c.l.bf16 %v3067
    %v3093 = vunpack.c.h.bf16 %v3067
    %v3094 = vunpack.c.l.bf16 %v3068
    %v3095 = vunpack.c.h.bf16 %v3068
    %v3096 = vunpack.c.l.bf16 %v3069
    %v3097 = vunpack.c.h.bf16 %v3069
    %v3098 = vunpack.c.l.bf16 %v3070
    %v3099 = vunpack.c.h.bf16 %v3070
    %v3100 = vunpack.c.l.bf16 %v3071
    %v3101 = vunpack.c.h.bf16 %v3071
    %v3102 = vunpack.c.l.bf16 %v3072
    %v3103 = vunpack.c.h.bf16 %v3072
    %v3104 = vunpack.c.l.bf16 %v3073
    %v3105 = vunpack.c.h.bf16 %v3073
    %v3106 = vunpack.c.l.bf16 %v3074
    %v3107 = vunpack.c.h.bf16 %v3074
    %v3108 = vunpack.c.l.bf16 %v3075
    %v3109 = vunpack.c.h.bf16 %v3075
    %v3110 = vunpack.c.l.bf16 %v3076
    %v3111 = vunpack.c.h.bf16 %v3076
    %v3112 = vunpack.c.l.bf16 %v3077
    %v3113 = vunpack.c.h.bf16 %v3077
    %v3114 = vunpack.c.l.bf16 %v3078
    %v3115 = vunpack.c.h.bf16 %v3078
    %v3116 = vunpack.c.l.bf16 %v3079
    %v3117 = vunpack.c.h.bf16 %v3079
    %v3118 = vunpack.c.l.bf16 %v3080
    %v3119 = vunpack.c.h.bf16 %v3080
    %v3120 = vunpack.c.l.bf16 %v3081
    %v3121 = vunpack.c.h.bf16 %v3081
    %v3122 = vunpack.c.l.bf16 %v3082
    %v3123 = vunpack.c.h.bf16 %v3082
    %v3124 = vunpack.c.l.bf16 %v3083
    %v3125 = vunpack.c.h.bf16 %v3083
    %v3126 = vmul.f32 %v2979, %v2979
    %v3127 = vmul.f32 %v2980, %v2980
    %v3128 = vmul.f32 %v2981, %v2981
    %v3129 = vmul.f32 %v2982, %v2982
    %v3130 = vmul.f32 %v2983, %v2983
    %v3131 = vmul.f32 %v2984, %v2984
    %v3132 = vmul.f32 %v2985, %v2985
    %v3133 = vmul.f32 %v2986, %v2986
    %v3134 = vmul.f32 %v2987, %v2987
    %v3135 = vmul.f32 %v2988, %v2988
    %v3136 = vmul.f32 %v2989, %v2989
    %v3137 = vmul.f32 %v2990, %v2990
    %v3138 = vmul.f32 %v2991, %v2991
    %v3139 = vmul.f32 %v2992, %v2992
    %v3140 = vmul.f32 %v2993, %v2993
    %v3141 = vmul.f32 %v2994, %v2994
    %v3142 = vmul.f32 %v2995, %v2995
    %v3143 = vmul.f32 %v2996, %v2996
    %v3144 = vmul.f32 %v2997, %v2997
    %v3145 = vmul.f32 %v2998, %v2998
    %v3146 = vmul.f32 %v2999, %v2999
    %v3147 = vmul.f32 %v3000, %v3000
    %v3148 = vmul.f32 %v3001, %v3001
    %v3149 = vmul.f32 %v3002, %v3002
    %v3150 = vmul.f32 %v3003, %v3003
    %v3151 = vmul.f32 %v3004, %v3004
    %v3152 = vmul.f32 %v3005, %v3005
    %v3153 = vmul.f32 %v3006, %v3006
    %v3154 = vmul.f32 %v3007, %v3007
    %v3155 = vmul.f32 %v3008, %v3008
    %v3156 = vmul.f32 %v3009, %v3009
    %v3157 = vmul.f32 %v3010, %v3010
    %v3158 = vmul.f32 %v3011, %v3011
    %v3159 = vmul.f32 %v3012, %v3012
    %v3160 = vmul.f32 %v3013, %v3013
    %v3161 = vmul.f32 %v3014, %v3014
    %v3162 = vmul.f32 %v3015, %v3015
    %v3163 = vmul.f32 %v3016, %v3016
    %v3164 = vmul.f32 %v3017, %v3017
    %v3165 = vmul.f32 %v3018, %v3018
    %v3166 = vmul.f32 %v3019, %v3019
    %v3167 = vmul.f32 %v3020, %v3020
    %v3168 = vmul.f32 %v3021, %v3021
    %v3169 = vmul.f32 %v3022, %v3022
    %v3170 = vmul.f32 %v3023, %v3023
    %v3171 = vmul.f32 %v3024, %v3024
    %v3172 = vmul.f32 %v3025, %v3025
    %v3173 = vmul.f32 %v3026, %v3026
    %v3174 = vmul.f32 %v3027, %v3027
    %v3175 = vmul.f32 %v3028, %v3028
    %v3176 = vmul.f32 %v3029, %v3029
    %v3177 = vmul.f32 %v3030, %v3030
    %v3178 = vmul.f32 %v3031, %v3031
    %v3179 = vmul.f32 %v3032, %v3032
    %v3180 = vmul.f32 %v3033, %v3033
    %v3181 = vmul.f32 %v3034, %v3034
    %v3182 = vmul.f32 %v3035, %v3035
    %v3183 = vmul.f32 %v3036, %v3036
    %v3184 = vmul.f32 %v3037, %v3037
    %v3185 = vmul.f32 %v3038, %v3038
    %v3186 = vmul.f32 %v3039, %v3039
    %v3187 = vmul.f32 %v3040, %v3040
    %v3188 = vmul.f32 %v3041, %v3041
    %v3189 = vmul.f32 %v3042, %v3042
    %v3190 = vmul.f32 %v3043, %v3043
    %v3191 = vmul.f32 %v3044, %v3044
    %v3192 = vmul.f32 %v3045, %v3045
    %v3193 = vmul.f32 %v3046, %v3046
    %v3194 = vmul.f32 %v3047, %v3047
    %v3195 = vmul.f32 %v3048, %v3048
    %v3196 = vmul.f32 %v3049, %v3049
    %v3197 = vmul.f32 %v3050, %v3050
    %v3198 = vmul.f32 %v3051, %v3051
    %v3199 = vmul.f32 %v3052, %v3052
    %v3200 = vmul.f32 %v3053, %v3053
    %v3201 = vmul.f32 %v3054, %v3054
    %v3202 = vmul.f32 %v3055, %v3055
    %v3203 = vmul.f32 %v3056, %v3056
    %v3204 = vmul.f32 %v3057, %v3057
    %v3205 = vmul.f32 %v3058, %v3058
    %v3206 = vmul.f32 %v3059, %v3059
    %v3207 = vmul.f32 %v3060, %v3060
    %v3208 = vmul.f32 %v3061, %v3061
    %v3209 = vmul.f32 %v3062, %v3062
    %v3210 = vmul.f32 %v2979, %v3084
    %v3211 = vmul.f32 %v2980, %v3085
    %v3212 = vmul.f32 %v2981, %v3086
    %v3213 = vmul.f32 %v2982, %v3087
    %v3214 = vmul.f32 %v2983, %v3088
    %v3215 = vmul.f32 %v2984, %v3089
    %v3216 = vmul.f32 %v2985, %v3090
    %v3217 = vmul.f32 %v2986, %v3091
    %v3218 = vmul.f32 %v2987, %v3092
    %v3219 = vmul.f32 %v2988, %v3093
    %v3220 = vmul.f32 %v2989, %v3094
    %v3221 = vmul.f32 %v2990, %v3095
    %v3222 = vmul.f32 %v2991, %v3096
    %v3223 = vmul.f32 %v2992, %v3097
    %v3224 = vmul.f32 %v2993, %v3098
    %v3225 = vmul.f32 %v2994, %v3099
    %v3226 = vmul.f32 %v2995, %v3100
    %v3227 = vmul.f32 %v2996, %v3101
    %v3228 = vmul.f32 %v2997, %v3102
    %v3229 = vmul.f32 %v2998, %v3103
    %v3230 = vmul.f32 %v2999, %v3104
    %v3231 = vmul.f32 %v3000, %v3105
    %v3232 = vmul.f32 %v3001, %v3106
    %v3233 = vmul.f32 %v3002, %v3107
    %v3234 = vmul.f32 %v3003, %v3108
    %v3235 = vmul.f32 %v3004, %v3109
    %v3236 = vmul.f32 %v3005, %v3110
    %v3237 = vmul.f32 %v3006, %v3111
    %v3238 = vmul.f32 %v3007, %v3112
    %v3239 = vmul.f32 %v3008, %v3113
    %v3240 = vmul.f32 %v3009, %v3114
    %v3241 = vmul.f32 %v3010, %v3115
    %v3242 = vmul.f32 %v3011, %v3116
    %v3243 = vmul.f32 %v3012, %v3117
    %v3244 = vmul.f32 %v3013, %v3118
    %v3245 = vmul.f32 %v3014, %v3119
    %v3246 = vmul.f32 %v3015, %v3120
    %v3247 = vmul.f32 %v3016, %v3121
    %v3248 = vmul.f32 %v3017, %v3122
    %v3249 = vmul.f32 %v3018, %v3123
    %v3250 = vmul.f32 %v3019, %v3124
    %v3251 = vmul.f32 %v3020, %v3125
    %v3252 = vmul.f32 %v3021, %v3084
    %v3253 = vmul.f32 %v3022, %v3085
    %v3254 = vmul.f32 %v3023, %v3086
    %v3255 = vmul.f32 %v3024, %v3087
    %v3256 = vmul.f32 %v3025, %v3088
    %v3257 = vmul.f32 %v3026, %v3089
    %v3258 = vmul.f32 %v3027, %v3090
    %v3259 = vmul.f32 %v3028, %v3091
    %v3260 = vmul.f32 %v3029, %v3092
    %v3261 = vmul.f32 %v3030, %v3093
    %v3262 = vmul.f32 %v3031, %v3094
    %v3263 = vmul.f32 %v3032, %v3095
    %v3264 = vmul.f32 %v3033, %v3096
    %v3265 = vmul.f32 %v3034, %v3097
    %v3266 = vmul.f32 %v3035, %v3098
    %v3267 = vmul.f32 %v3036, %v3099
    %v3268 = vmul.f32 %v3037, %v3100
    %v3269 = vmul.f32 %v3038, %v3101
    %v3270 = vmul.f32 %v3039, %v3102
    %v3271 = vmul.f32 %v3040, %v3103
    %v3272 = vmul.f32 %v3041, %v3104
    %v3273 = vmul.f32 %v3042, %v3105
    %v3274 = vmul.f32 %v3043, %v3106
    %v3275 = vmul.f32 %v3044, %v3107
    %v3276 = vmul.f32 %v3045, %v3108
    %v3277 = vmul.f32 %v3046, %v3109
    %v3278 = vmul.f32 %v3047, %v3110
    %v3279 = vmul.f32 %v3048, %v3111
    %v3280 = vmul.f32 %v3049, %v3112
    %v3281 = vmul.f32 %v3050, %v3113
    %v3282 = vmul.f32 %v3051, %v3114
    %v3283 = vmul.f32 %v3052, %v3115
    %v3284 = vmul.f32 %v3053, %v3116
    %v3285 = vmul.f32 %v3054, %v3117
    %v3286 = vmul.f32 %v3055, %v3118
    %v3287 = vmul.f32 %v3056, %v3119
    %v3288 = vmul.f32 %v3057, %v3120
    %v3289 = vmul.f32 %v3058, %v3121
    %v3290 = vmul.f32 %v3059, %v3122
    %v3291 = vmul.f32 %v3060, %v3123
    %v3292 = vmul.f32 %v3061, %v3124
    %v3293 = vmul.f32 %v3062, %v3125
    %v3294 = vld [vmem:[%s2] sm:$0x3]
    %vm3295 = vcmask 916480
    %v3297 = vsel %vm3295, %v3294, 0
    %3299 = vmatprep.subr.mxu0 %v2980
    %3300 = vmatpush1.msra.mxu0 %v2979
    %3301 = vmatprep.subr.mxu0 %v2986
    %3302 = vmatpush1.msra.mxu0 %v2985
    %3303 = vmatprep.subr.mxu0 %v2992
    %3304 = vmatpush1.msra.mxu0 %v2991
    %3305 = vmatprep.subr.mxu0 %v2998
    %3306 = vmatpush1.msra.mxu0 %v2997
    %3307 = vmatprep.subr.mxu0 %v3004
    %3308 = vmatpush1.msra.mxu0 %v3003
    %3309 = vmatprep.subr.mxu0 %v3010
    %3310 = vmatpush1.msra.mxu0 %v3009
    %3311 = vmatprep.subr.mxu0 %v3016
    %3312 = vmatpush1.msra.mxu0 %v3015
    %3313 = vmatprep.subr.mxu0 %v3022
    %3314 = vmatpush1.msra.mxu0 %v3021
    %3315 = vmatprep.subr.mxu0 %v3028
    %3316 = vmatpush1.msra.mxu0 %v3027
    %3317 = vmatprep.subr.mxu0 %v3034
    %3318 = vmatpush1.msra.mxu0 %v3033
    %3319 = vmatprep.subr.mxu0 %v3040
    %3320 = vmatpush1.msra.mxu0 %v3039
    %3321 = vmatprep.subr.mxu0 %v3046
    %3322 = vmatpush1.msra.mxu0 %v3045
    %3323 = vmatprep.subr.mxu0 %v3052
    %3324 = vmatpush1.msra.mxu0 %v3051
    %3325 = vmatprep.subr.mxu0 %v3058
    %3326 = vmatpush1.msra.mxu0 %v3057
    %3327 = vmatprep.subr.mxu0 0.0
    %3328 = vmatpush1.msra.mxu0 0.0
    %3329 = vmatprep.subr.mxu0 0.0
    %3330 = vmatpush1.msra.mxu0 0.0
    %3331 = vmatprep.subr.mxu0 0.0
    %3332 = vmatpush1.msra.mxu0 0.0
    %3333 = vmatprep.subr.mxu0 0.0
    %3334 = vmatpush1.msra.mxu0 0.0
    %3335 = vmatprep.subr.mxu0 0.0
    %3336 = vmatpush1.msra.mxu0 0.0
    %3337 = vmatprep.subr.mxu0 0.0
    %3338 = vmatpush1.msra.mxu0 0.0
    %3339 = vmatprep.subr.mxu0 0.0
    %3340 = vmatpush1.msra.mxu0 0.0
    %3341 = vmatprep.subr.mxu0 0.0
    %3342 = vmatpush1.msra.mxu0 0.0
    %3343 = vmatprep.subr.mxu0 0.0
    %3344 = vmatpush1.msra.mxu0 0.0
    %3345 = vmatprep.subr.mxu0 0.0
    %3346 = vmatpush1.msra.mxu0 0.0
    %3347 = vmatprep.subr.mxu0 0.0
    %3348 = vmatpush1.msra.mxu0 0.0
    %3349 = vmatprep.subr.mxu0 0.0
    %3350 = vmatpush1.msra.mxu0 0.0
    %3351 = vmatprep.subr.mxu0 0.0
    %3352 = vmatpush1.msra.mxu0 0.0
    %3353 = vmatprep.subr.mxu0 0.0
    %3354 = vmatpush1.msra.mxu0 0.0
    %3355 = vmatprep.subr.mxu0 0.0
    %3356 = vmatpush1.msra.mxu0 0.0
    %3357 = vmatprep.subr.mxu0 0.0
    %3358 = vmatpush1.msra.mxu0 0.0
    %3359 = vmatprep.subr.mxu0 0.0
    %3360 = vmatpush1.msra.mxu0 0.0
    %3361 = vmatprep.subr.mxu0 0.0
    %3362 = vmatpush1.msra.mxu0 0.0
    %3363 = vmatprep.mubr.f32.mxu0 0.0
    %3364 = vmatmul.mubr.f32.gmra.mrb[0].mxu0 %v3297
    %v3365 = vpop.f32.mrb[0].mxu0
    %v3366 = vadd.f32 0.0, %v3365
    %v3367 = vpop.f32.mrb[0].mxu0
    %v3368 = vadd.f32 0.0, %v3367
    %3369 = vdwg.mxu0
    %3370 = vmatprep.subr.mxu0 %v2982
    %3371 = vmatpush1.msra.mxu0 %v2981
    %3372 = vmatprep.subr.mxu0 %v2988
    %3373 = vmatpush1.msra.mxu0 %v2987
    %3374 = vmatprep.subr.mxu0 %v2994
    %3375 = vmatpush1.msra.mxu0 %v2993
    %3376 = vmatprep.subr.mxu0 %v3000
    %3377 = vmatpush1.msra.mxu0 %v2999
    %3378 = vmatprep.subr.mxu0 %v3006
    %3379 = vmatpush1.msra.mxu0 %v3005
    %3380 = vmatprep.subr.mxu0 %v3012
    %3381 = vmatpush1.msra.mxu0 %v3011
    %3382 = vmatprep.subr.mxu0 %v3018
    %3383 = vmatpush1.msra.mxu0 %v3017
    %3384 = vmatprep.subr.mxu0 %v3024
    %3385 = vmatpush1.msra.mxu0 %v3023
    %3386 = vmatprep.subr.mxu0 %v3030
    %3387 = vmatpush1.msra.mxu0 %v3029
    %3388 = vmatprep.subr.mxu0 %v3036
    %3389 = vmatpush1.msra.mxu0 %v3035
    %3390 = vmatprep.subr.mxu0 %v3042
    %3391 = vmatpush1.msra.mxu0 %v3041
    %3392 = vmatprep.subr.mxu0 %v3048
    %3393 = vmatpush1.msra.mxu0 %v3047
    %3394 = vmatprep.subr.mxu0 %v3054
    %3395 = vmatpush1.msra.mxu0 %v3053
    %3396 = vmatprep.subr.mxu0 %v3060
    %3397 = vmatpush1.msra.mxu0 %v3059
    %3398 = vmatprep.subr.mxu0 0.0
    %3399 = vmatpush1.msra.mxu0 0.0
    %3400 = vmatprep.subr.mxu0 0.0
    %3401 = vmatpush1.msra.mxu0 0.0
    %3402 = vmatprep.subr.mxu0 0.0
    %3403 = vmatpush1.msra.mxu0 0.0
    %3404 = vmatprep.subr.mxu0 0.0
    %3405 = vmatpush1.msra.mxu0 0.0
    %3406 = vmatprep.subr.mxu0 0.0
    %3407 = vmatpush1.msra.mxu0 0.0
    %3408 = vmatprep.subr.mxu0 0.0
    %3409 = vmatpush1.msra.mxu0 0.0
    %3410 = vmatprep.subr.mxu0 0.0
    %3411 = vmatpush1.msra.mxu0 0.0
    %3412 = vmatprep.subr.mxu0 0.0
    %3413 = vmatpush1.msra.mxu0 0.0
    %3414 = vmatprep.subr.mxu0 0.0
    %3415 = vmatpush1.msra.mxu0 0.0
    %3416 = vmatprep.subr.mxu0 0.0
    %3417 = vmatpush1.msra.mxu0 0.0
    %3418 = vmatprep.subr.mxu0 0.0
    %3419 = vmatpush1.msra.mxu0 0.0
    %3420 = vmatprep.subr.mxu0 0.0
    %3421 = vmatpush1.msra.mxu0 0.0
    %3422 = vmatprep.subr.mxu0 0.0
    %3423 = vmatpush1.msra.mxu0 0.0
    %3424 = vmatprep.subr.mxu0 0.0
    %3425 = vmatpush1.msra.mxu0 0.0
    %3426 = vmatprep.subr.mxu0 0.0
    %3427 = vmatpush1.msra.mxu0 0.0
    %3428 = vmatprep.subr.mxu0 0.0
    %3429 = vmatpush1.msra.mxu0 0.0
    %3430 = vmatprep.subr.mxu0 0.0
    %3431 = vmatpush1.msra.mxu0 0.0
    %3432 = vmatprep.subr.mxu0 0.0
    %3433 = vmatpush1.msra.mxu0 0.0
    %3434 = vmatprep.mubr.f32.mxu0 0.0
    %3435 = vmatmul.mubr.f32.gmra.mrb[0].mxu0 %v3297
    %v3436 = vpop.f32.mrb[0].mxu0
    %v3437 = vadd.f32 0.0, %v3436
    %v3438 = vpop.f32.mrb[0].mxu0
    %v3439 = vadd.f32 0.0, %v3438
    %3440 = vdwg.mxu0
    %3441 = vmatprep.subr.mxu0 %v2984
    %3442 = vmatpush1.msra.mxu0 %v2983
    %3443 = vmatprep.subr.mxu0 %v2990
    %3444 = vmatpush1.msra.mxu0 %v2989
    %3445 = vmatprep.subr.mxu0 %v2996
    %3446 = vmatpush1.msra.mxu0 %v2995
    %3447 = vmatprep.subr.mxu0 %v3002
    %3448 = vmatpush1.msra.mxu0 %v3001
    %3449 = vmatprep.subr.mxu0 %v3008
    %3450 = vmatpush1.msra.mxu0 %v3007
    %3451 = vmatprep.subr.mxu0 %v3014
    %3452 = vmatpush1.msra.mxu0 %v3013
    %3453 = vmatprep.subr.mxu0 %v3020
    %3454 = vmatpush1.msra.mxu0 %v3019
    %3455 = vmatprep.subr.mxu0 %v3026
    %3456 = vmatpush1.msra.mxu0 %v3025
    %3457 = vmatprep.subr.mxu0 %v3032
    %3458 = vmatpush1.msra.mxu0 %v3031
    %3459 = vmatprep.subr.mxu0 %v3038
    %3460 = vmatpush1.msra.mxu0 %v3037
    %3461 = vmatprep.subr.mxu0 %v3044
    %3462 = vmatpush1.msra.mxu0 %v3043
    %3463 = vmatprep.subr.mxu0 %v3050
    %3464 = vmatpush1.msra.mxu0 %v3049
    %3465 = vmatprep.subr.mxu0 %v3056
    %3466 = vmatpush1.msra.mxu0 %v3055
    %3467 = vmatprep.subr.mxu0 %v3062
    %3468 = vmatpush1.msra.mxu0 %v3061
    %3469 = vmatprep.subr.mxu0 0.0
    %3470 = vmatpush1.msra.mxu0 0.0
    %3471 = vmatprep.subr.mxu0 0.0
    %3472 = vmatpush1.msra.mxu0 0.0
    %3473 = vmatprep.subr.mxu0 0.0
    %3474 = vmatpush1.msra.mxu0 0.0
    %3475 = vmatprep.subr.mxu0 0.0
    %3476 = vmatpush1.msra.mxu0 0.0
    %3477 = vmatprep.subr.mxu0 0.0
    %3478 = vmatpush1.msra.mxu0 0.0
    %3479 = vmatprep.subr.mxu0 0.0
    %3480 = vmatpush1.msra.mxu0 0.0
    %3481 = vmatprep.subr.mxu0 0.0
    %3482 = vmatpush1.msra.mxu0 0.0
    %3483 = vmatprep.subr.mxu0 0.0
    %3484 = vmatpush1.msra.mxu0 0.0
    %3485 = vmatprep.subr.mxu0 0.0
    %3486 = vmatpush1.msra.mxu0 0.0
    %3487 = vmatprep.subr.mxu0 0.0
    %3488 = vmatpush1.msra.mxu0 0.0
    %3489 = vmatprep.subr.mxu0 0.0
    %3490 = vmatpush1.msra.mxu0 0.0
    %3491 = vmatprep.subr.mxu0 0.0
    %3492 = vmatpush1.msra.mxu0 0.0
    %3493 = vmatprep.subr.mxu0 0.0
    %3494 = vmatpush1.msra.mxu0 0.0
    %3495 = vmatprep.subr.mxu0 0.0
    %3496 = vmatpush1.msra.mxu0 0.0
    %3497 = vmatprep.subr.mxu0 0.0
    %3498 = vmatpush1.msra.mxu0 0.0
    %3499 = vmatprep.subr.mxu0 0.0
    %3500 = vmatpush1.msra.mxu0 0.0
    %3501 = vmatprep.subr.mxu0 0.0
    %3502 = vmatpush1.msra.mxu0 0.0
    %3503 = vmatprep.subr.mxu0 0.0
    %3504 = vmatpush1.msra.mxu0 0.0
    %3505 = vmatprep.mubr.f32.mxu0 0.0
    %3506 = vmatmul.mubr.f32.gmra.mrb[0].mxu0 %v3297
    %v3507 = vpop.f32.mrb[0].mxu0
    %v3508 = vadd.f32 0.0, %v3507
    %v3509 = vpop.f32.mrb[0].mxu0
    %v3510 = vadd.f32 0.0, %v3509
    %3511 = vdwg.mxu0
    %3512 = vmatprep.subr.mxu0 %v3127
    %3513 = vmatpush1.msra.mxu0 %v3126
    %3514 = vmatprep.subr.mxu0 %v3133
    %3515 = vmatpush1.msra.mxu0 %v3132
    %3516 = vmatprep.subr.mxu0 %v3139
    %3517 = vmatpush1.msra.mxu0 %v3138
    %3518 = vmatprep.subr.mxu0 %v3145
    %3519 = vmatpush1.msra.mxu0 %v3144
    %3520 = vmatprep.subr.mxu0 %v3151
    %3521 = vmatpush1.msra.mxu0 %v3150
    %3522 = vmatprep.subr.mxu0 %v3157
    %3523 = vmatpush1.msra.mxu0 %v3156
    %3524 = vmatprep.subr.mxu0 %v3163
    %3525 = vmatpush1.msra.mxu0 %v3162
    %3526 = vmatprep.subr.mxu0 %v3169
    %3527 = vmatpush1.msra.mxu0 %v3168
    %3528 = vmatprep.subr.mxu0 %v3175
    %3529 = vmatpush1.msra.mxu0 %v3174
    %3530 = vmatprep.subr.mxu0 %v3181
    %3531 = vmatpush1.msra.mxu0 %v3180
    %3532 = vmatprep.subr.mxu0 %v3187
    %3533 = vmatpush1.msra.mxu0 %v3186
    %3534 = vmatprep.subr.mxu0 %v3193
    %3535 = vmatpush1.msra.mxu0 %v3192
    %3536 = vmatprep.subr.mxu0 %v3199
    %3537 = vmatpush1.msra.mxu0 %v3198
    %3538 = vmatprep.subr.mxu0 %v3205
    %3539 = vmatpush1.msra.mxu0 %v3204
    %3540 = vmatprep.subr.mxu0 0.0
    %3541 = vmatpush1.msra.mxu0 0.0
    %3542 = vmatprep.subr.mxu0 0.0
    %3543 = vmatpush1.msra.mxu0 0.0
    %3544 = vmatprep.subr.mxu0 0.0
    %3545 = vmatpush1.msra.mxu0 0.0
    %3546 = vmatprep.subr.mxu0 0.0
    %3547 = vmatpush1.msra.mxu0 0.0
    %3548 = vmatprep.subr.mxu0 0.0
    %3549 = vmatpush1.msra.mxu0 0.0
    %3550 = vmatprep.subr.mxu0 0.0
    %3551 = vmatpush1.msra.mxu0 0.0
    %3552 = vmatprep.subr.mxu0 0.0
    %3553 = vmatpush1.msra.mxu0 0.0
    %3554 = vmatprep.subr.mxu0 0.0
    %3555 = vmatpush1.msra.mxu0 0.0
    %3556 = vmatprep.subr.mxu0 0.0
    %3557 = vmatpush1.msra.mxu0 0.0
    %3558 = vmatprep.subr.mxu0 0.0
    %3559 = vmatpush1.msra.mxu0 0.0
    %3560 = vmatprep.subr.mxu0 0.0
    %3561 = vmatpush1.msra.mxu0 0.0
    %3562 = vmatprep.subr.mxu0 0.0
    %3563 = vmatpush1.msra.mxu0 0.0
    %3564 = vmatprep.subr.mxu0 0.0
    %3565 = vmatpush1.msra.mxu0 0.0
    %3566 = vmatprep.subr.mxu0 0.0
    %3567 = vmatpush1.msra.mxu0 0.0
    %3568 = vmatprep.subr.mxu0 0.0
    %3569 = vmatpush1.msra.mxu0 0.0
    %3570 = vmatprep.subr.mxu0 0.0
    %3571 = vmatpush1.msra.mxu0 0.0
    %3572 = vmatprep.subr.mxu0 0.0
    %3573 = vmatpush1.msra.mxu0 0.0
    %3574 = vmatprep.subr.mxu0 0.0
    %3575 = vmatpush1.msra.mxu0 0.0
    %3576 = vmatprep.mubr.f32.mxu0 0.0
    %3577 = vmatmul.mubr.f32.gmra.mrb[0].mxu0 %v3297
    %v3578 = vpop.f32.mrb[0].mxu0
    %v3579 = vadd.f32 0.0, %v3578
    %v3580 = vpop.f32.mrb[0].mxu0
    %v3581 = vadd.f32 0.0, %v3580
    %3582 = vdwg.mxu0
    %3583 = vmatprep.subr.mxu0 %v3129
    %3584 = vmatpush1.msra.mxu0 %v3128
    %3585 = vmatprep.subr.mxu0 %v3135
    %3586 = vmatpush1.msra.mxu0 %v3134
    %3587 = vmatprep.subr.mxu0 %v3141
    %3588 = vmatpush1.msra.mxu0 %v3140
    %3589 = vmatprep.subr.mxu0 %v3147
    %3590 = vmatpush1.msra.mxu0 %v3146
    %3591 = vmatprep.subr.mxu0 %v3153
    %3592 = vmatpush1.msra.mxu0 %v3152
    %3593 = vmatprep.subr.mxu0 %v3159
    %3594 = vmatpush1.msra.mxu0 %v3158
    %3595 = vmatprep.subr.mxu0 %v3165
    %3596 = vmatpush1.msra.mxu0 %v3164
    %3597 = vmatprep.subr.mxu0 %v3171
    %3598 = vmatpush1.msra.mxu0 %v3170
    %3599 = vmatprep.subr.mxu0 %v3177
    %3600 = vmatpush1.msra.mxu0 %v3176
    %3601 = vmatprep.subr.mxu0 %v3183
    %3602 = vmatpush1.msra.mxu0 %v3182
    %3603 = vmatprep.subr.mxu0 %v3189
    %3604 = vmatpush1.msra.mxu0 %v3188
    %3605 = vmatprep.subr.mxu0 %v3195
    %3606 = vmatpush1.msra.mxu0 %v3194
    %3607 = vmatprep.subr.mxu0 %v3201
    %3608 = vmatpush1.msra.mxu0 %v3200
    %3609 = vmatprep.subr.mxu0 %v3207
    %3610 = vmatpush1.msra.mxu0 %v3206
    %3611 = vmatprep.subr.mxu0 0.0
    %3612 = vmatpush1.msra.mxu0 0.0
    %3613 = vmatprep.subr.mxu0 0.0
    %3614 = vmatpush1.msra.mxu0 0.0
    %3615 = vmatprep.subr.mxu0 0.0
    %3616 = vmatpush1.msra.mxu0 0.0
    %3617 = vmatprep.subr.mxu0 0.0
    %3618 = vmatpush1.msra.mxu0 0.0
    %3619 = vmatprep.subr.mxu0 0.0
    %3620 = vmatpush1.msra.mxu0 0.0
    %3621 = vmatprep.subr.mxu0 0.0
    %3622 = vmatpush1.msra.mxu0 0.0
    %3623 = vmatprep.subr.mxu0 0.0
    %3624 = vmatpush1.msra.mxu0 0.0
    %3625 = vmatprep.subr.mxu0 0.0
    %3626 = vmatpush1.msra.mxu0 0.0
    %3627 = vmatprep.subr.mxu0 0.0
    %3628 = vmatpush1.msra.mxu0 0.0
    %3629 = vmatprep.subr.mxu0 0.0
    %3630 = vmatpush1.msra.mxu0 0.0
    %3631 = vmatprep.subr.mxu0 0.0
    %3632 = vmatpush1.msra.mxu0 0.0
    %3633 = vmatprep.subr.mxu0 0.0
    %3634 = vmatpush1.msra.mxu0 0.0
    %3635 = vmatprep.subr.mxu0 0.0
    %3636 = vmatpush1.msra.mxu0 0.0
    %3637 = vmatprep.subr.mxu0 0.0
    %3638 = vmatpush1.msra.mxu0 0.0
    %3639 = vmatprep.subr.mxu0 0.0
    %3640 = vmatpush1.msra.mxu0 0.0
    %3641 = vmatprep.subr.mxu0 0.0
    %3642 = vmatpush1.msra.mxu0 0.0
    %3643 = vmatprep.subr.mxu0 0.0
    %3644 = vmatpush1.msra.mxu0 0.0
    %3645 = vmatprep.subr.mxu0 0.0
    %3646 = vmatpush1.msra.mxu0 0.0
    %3647 = vmatprep.mubr.f32.mxu0 0.0
    %3648 = vmatmul.mubr.f32.gmra.mrb[0].mxu0 %v3297
    %v3649 = vpop.f32.mrb[0].mxu0
    %v3650 = vadd.f32 0.0, %v3649
    %v3651 = vpop.f32.mrb[0].mxu0
    %v3652 = vadd.f32 0.0, %v3651
    %3653 = vdwg.mxu0
    %3654 = vmatprep.subr.mxu0 %v3131
    %3655 = vmatpush1.msra.mxu0 %v3130
    %3656 = vmatprep.subr.mxu0 %v3137
    %3657 = vmatpush1.msra.mxu0 %v3136
    %3658 = vmatprep.subr.mxu0 %v3143
    %3659 = vmatpush1.msra.mxu0 %v3142
    %3660 = vmatprep.subr.mxu0 %v3149
    %3661 = vmatpush1.msra.mxu0 %v3148
    %3662 = vmatprep.subr.mxu0 %v3155
    %3663 = vmatpush1.msra.mxu0 %v3154
    %3664 = vmatprep.subr.mxu0 %v3161
    %3665 = vmatpush1.msra.mxu0 %v3160
    %3666 = vmatprep.subr.mxu0 %v3167
    %3667 = vmatpush1.msra.mxu0 %v3166
    %3668 = vmatprep.subr.mxu0 %v3173
    %3669 = vmatpush1.msra.mxu0 %v3172
    %3670 = vmatprep.subr.mxu0 %v3179
    %3671 = vmatpush1.msra.mxu0 %v3178
    %3672 = vmatprep.subr.mxu0 %v3185
    %3673 = vmatpush1.msra.mxu0 %v3184
    %3674 = vmatprep.subr.mxu0 %v3191
    %3675 = vmatpush1.msra.mxu0 %v3190
    %3676 = vmatprep.subr.mxu0 %v3197
    %3677 = vmatpush1.msra.mxu0 %v3196
    %3678 = vmatprep.subr.mxu0 %v3203
    %3679 = vmatpush1.msra.mxu0 %v3202
    %3680 = vmatprep.subr.mxu0 %v3209
    %3681 = vmatpush1.msra.mxu0 %v3208
    %3682 = vmatprep.subr.mxu0 0.0
    %3683 = vmatpush1.msra.mxu0 0.0
    %3684 = vmatprep.subr.mxu0 0.0
    %3685 = vmatpush1.msra.mxu0 0.0
    %3686 = vmatprep.subr.mxu0 0.0
    %3687 = vmatpush1.msra.mxu0 0.0
    %3688 = vmatprep.subr.mxu0 0.0
    %3689 = vmatpush1.msra.mxu0 0.0
    %3690 = vmatprep.subr.mxu0 0.0
    %3691 = vmatpush1.msra.mxu0 0.0
    %3692 = vmatprep.subr.mxu0 0.0
    %3693 = vmatpush1.msra.mxu0 0.0
    %3694 = vmatprep.subr.mxu0 0.0
    %3695 = vmatpush1.msra.mxu0 0.0
    %3696 = vmatprep.subr.mxu0 0.0
    %3697 = vmatpush1.msra.mxu0 0.0
    %3698 = vmatprep.subr.mxu0 0.0
    %3699 = vmatpush1.msra.mxu0 0.0
    %3700 = vmatprep.subr.mxu0 0.0
    %3701 = vmatpush1.msra.mxu0 0.0
    %3702 = vmatprep.subr.mxu0 0.0
    %3703 = vmatpush1.msra.mxu0 0.0
    %3704 = vmatprep.subr.mxu0 0.0
    %3705 = vmatpush1.msra.mxu0 0.0
    %3706 = vmatprep.subr.mxu0 0.0
    %3707 = vmatpush1.msra.mxu0 0.0
    %3708 = vmatprep.subr.mxu0 0.0
    %3709 = vmatpush1.msra.mxu0 0.0
    %3710 = vmatprep.subr.mxu0 0.0
    %3711 = vmatpush1.msra.mxu0 0.0
    %3712 = vmatprep.subr.mxu0 0.0
    %3713 = vmatpush1.msra.mxu0 0.0
    %3714 = vmatprep.subr.mxu0 0.0
    %3715 = vmatpush1.msra.mxu0 0.0
    %3716 = vmatprep.subr.mxu0 0.0
    %3717 = vmatpush1.msra.mxu0 0.0
    %3718 = vmatprep.mubr.f32.mxu0 0.0
    %3719 = vmatmul.mubr.f32.gmra.mrb[0].mxu0 %v3297
    %v3720 = vpop.f32.mrb[0].mxu0
    %v3721 = vadd.f32 0.0, %v3720
    %v3722 = vpop.f32.mrb[0].mxu0
    %v3723 = vadd.f32 0.0, %v3722
    %3724 = vdwg.mxu0
    %3725 = vmatprep.subr.mxu0 %v3211
    %3726 = vmatpush1.msra.mxu0 %v3210
    %3727 = vmatprep.subr.mxu0 %v3217
    %3728 = vmatpush1.msra.mxu0 %v3216
    %3729 = vmatprep.subr.mxu0 %v3223
    %3730 = vmatpush1.msra.mxu0 %v3222
    %3731 = vmatprep.subr.mxu0 %v3229
    %3732 = vmatpush1.msra.mxu0 %v3228
    %3733 = vmatprep.subr.mxu0 %v3235
    %3734 = vmatpush1.msra.mxu0 %v3234
    %3735 = vmatprep.subr.mxu0 %v3241
    %3736 = vmatpush1.msra.mxu0 %v3240
    %3737 = vmatprep.subr.mxu0 %v3247
    %3738 = vmatpush1.msra.mxu0 %v3246
    %3739 = vmatprep.subr.mxu0 %v3253
    %3740 = vmatpush1.msra.mxu0 %v3252
    %3741 = vmatprep.subr.mxu0 %v3259
    %3742 = vmatpush1.msra.mxu0 %v3258
    %3743 = vmatprep.subr.mxu0 %v3265
    %3744 = vmatpush1.msra.mxu0 %v3264
    %3745 = vmatprep.subr.mxu0 %v3271
    %3746 = vmatpush1.msra.mxu0 %v3270
    %3747 = vmatprep.subr.mxu0 %v3277
    %3748 = vmatpush1.msra.mxu0 %v3276
    %3749 = vmatprep.subr.mxu0 %v3283
    %3750 = vmatpush1.msra.mxu0 %v3282
    %3751 = vmatprep.subr.mxu0 %v3289
    %3752 = vmatpush1.msra.mxu0 %v3288
    %3753 = vmatprep.subr.mxu0 0.0
    %3754 = vmatpush1.msra.mxu0 0.0
    %3755 = vmatprep.subr.mxu0 0.0
    %3756 = vmatpush1.msra.mxu0 0.0
    %3757 = vmatprep.subr.mxu0 0.0
    %3758 = vmatpush1.msra.mxu0 0.0
    %3759 = vmatprep.subr.mxu0 0.0
    %3760 = vmatpush1.msra.mxu0 0.0
    %3761 = vmatprep.subr.mxu0 0.0
    %3762 = vmatpush1.msra.mxu0 0.0
    %3763 = vmatprep.subr.mxu0 0.0
    %3764 = vmatpush1.msra.mxu0 0.0
    %3765 = vmatprep.subr.mxu0 0.0
    %3766 = vmatpush1.msra.mxu0 0.0
    %3767 = vmatprep.subr.mxu0 0.0
    %3768 = vmatpush1.msra.mxu0 0.0
    %3769 = vmatprep.subr.mxu0 0.0
    %3770 = vmatpush1.msra.mxu0 0.0
    %3771 = vmatprep.subr.mxu0 0.0
    %3772 = vmatpush1.msra.mxu0 0.0
    %3773 = vmatprep.subr.mxu0 0.0
    %3774 = vmatpush1.msra.mxu0 0.0
    %3775 = vmatprep.subr.mxu0 0.0
    %3776 = vmatpush1.msra.mxu0 0.0
    %3777 = vmatprep.subr.mxu0 0.0
    %3778 = vmatpush1.msra.mxu0 0.0
    %3779 = vmatprep.subr.mxu0 0.0
    %3780 = vmatpush1.msra.mxu0 0.0
    %3781 = vmatprep.subr.mxu0 0.0
    %3782 = vmatpush1.msra.mxu0 0.0
    %3783 = vmatprep.subr.mxu0 0.0
    %3784 = vmatpush1.msra.mxu0 0.0
    %3785 = vmatprep.subr.mxu0 0.0
    %3786 = vmatpush1.msra.mxu0 0.0
    %3787 = vmatprep.subr.mxu0 0.0
    %3788 = vmatpush1.msra.mxu0 0.0
    %3789 = vmatprep.mubr.f32.mxu0 0.0
    %3790 = vmatmul.mubr.f32.gmra.mrb[0].mxu0 %v3297
    %v3791 = vpop.f32.mrb[0].mxu0
    %v3792 = vadd.f32 0.0, %v3791
    %v3793 = vpop.f32.mrb[0].mxu0
    %v3794 = vadd.f32 0.0, %v3793
    %3795 = vdwg.mxu0
    %3796 = vmatprep.subr.mxu0 %v3213
    %3797 = vmatpush1.msra.mxu0 %v3212
    %3798 = vmatprep.subr.mxu0 %v3219
    %3799 = vmatpush1.msra.mxu0 %v3218
    %3800 = vmatprep.subr.mxu0 %v3225
    %3801 = vmatpush1.msra.mxu0 %v3224
    %3802 = vmatprep.subr.mxu0 %v3231
    %3803 = vmatpush1.msra.mxu0 %v3230
    %3804 = vmatprep.subr.mxu0 %v3237
    %3805 = vmatpush1.msra.mxu0 %v3236
    %3806 = vmatprep.subr.mxu0 %v3243
    %3807 = vmatpush1.msra.mxu0 %v3242
    %3808 = vmatprep.subr.mxu0 %v3249
    %3809 = vmatpush1.msra.mxu0 %v3248
    %3810 = vmatprep.subr.mxu0 %v3255
    %3811 = vmatpush1.msra.mxu0 %v3254
    %3812 = vmatprep.subr.mxu0 %v3261
    %3813 = vmatpush1.msra.mxu0 %v3260
    %3814 = vmatprep.subr.mxu0 %v3267
    %3815 = vmatpush1.msra.mxu0 %v3266
    %3816 = vmatprep.subr.mxu0 %v3273
    %3817 = vmatpush1.msra.mxu0 %v3272
    %3818 = vmatprep.subr.mxu0 %v3279
    %3819 = vmatpush1.msra.mxu0 %v3278
    %3820 = vmatprep.subr.mxu0 %v3285
    %3821 = vmatpush1.msra.mxu0 %v3284
    %3822 = vmatprep.subr.mxu0 %v3291
    %3823 = vmatpush1.msra.mxu0 %v3290
    %3824 = vmatprep.subr.mxu0 0.0
    %3825 = vmatpush1.msra.mxu0 0.0
    %3826 = vmatprep.subr.mxu0 0.0
    %3827 = vmatpush1.msra.mxu0 0.0
    %3828 = vmatprep.subr.mxu0 0.0
    %3829 = vmatpush1.msra.mxu0 0.0
    %3830 = vmatprep.subr.mxu0 0.0
    %3831 = vmatpush1.msra.mxu0 0.0
    %3832 = vmatprep.subr.mxu0 0.0
    %3833 = vmatpush1.msra.mxu0 0.0
    %3834 = vmatprep.subr.mxu0 0.0
    %3835 = vmatpush1.msra.mxu0 0.0
    %3836 = vmatprep.subr.mxu0 0.0
    %3837 = vmatpush1.msra.mxu0 0.0
    %3838 = vmatprep.subr.mxu0 0.0
    %3839 = vmatpush1.msra.mxu0 0.0
    %3840 = vmatprep.subr.mxu0 0.0
    %3841 = vmatpush1.msra.mxu0 0.0
    %3842 = vmatprep.subr.mxu0 0.0
    %3843 = vmatpush1.msra.mxu0 0.0
    %3844 = vmatprep.subr.mxu0 0.0
    %3845 = vmatpush1.msra.mxu0 0.0
    %3846 = vmatprep.subr.mxu0 0.0
    %3847 = vmatpush1.msra.mxu0 0.0
    %3848 = vmatprep.subr.mxu0 0.0
    %3849 = vmatpush1.msra.mxu0 0.0
    %3850 = vmatprep.subr.mxu0 0.0
    %3851 = vmatpush1.msra.mxu0 0.0
    %3852 = vmatprep.subr.mxu0 0.0
    %3853 = vmatpush1.msra.mxu0 0.0
    %3854 = vmatprep.subr.mxu0 0.0
    %3855 = vmatpush1.msra.mxu0 0.0
    %3856 = vmatprep.subr.mxu0 0.0
    %3857 = vmatpush1.msra.mxu0 0.0
    %3858 = vmatprep.subr.mxu0 0.0
    %3859 = vmatpush1.msra.mxu0 0.0
    %3860 = vmatprep.mubr.f32.mxu0 0.0
    %3861 = vmatmul.mubr.f32.gmra.mrb[0].mxu0 %v3297
    %v3862 = vpop.f32.mrb[0].mxu0
    %v3863 = vadd.f32 0.0, %v3862
    %v3864 = vpop.f32.mrb[0].mxu0
    %v3865 = vadd.f32 0.0, %v3864
    %3866 = vdwg.mxu0
    %3867 = vmatprep.subr.mxu0 %v3215
    %3868 = vmatpush1.msra.mxu0 %v3214
    %3869 = vmatprep.subr.mxu0 %v3221
    %3870 = vmatpush1.msra.mxu0 %v3220
    %3871 = vmatprep.subr.mxu0 %v3227
    %3872 = vmatpush1.msra.mxu0 %v3226
    %3873 = vmatprep.subr.mxu0 %v3233
    %3874 = vmatpush1.msra.mxu0 %v3232
    %3875 = vmatprep.subr.mxu0 %v3239
    %3876 = vmatpush1.msra.mxu0 %v3238
    %3877 = vmatprep.subr.mxu0 %v3245
    %3878 = vmatpush1.msra.mxu0 %v3244
    %3879 = vmatprep.subr.mxu0 %v3251
    %3880 = vmatpush1.msra.mxu0 %v3250
    %3881 = vmatprep.subr.mxu0 %v3257
    %3882 = vmatpush1.msra.mxu0 %v3256
    %3883 = vmatprep.subr.mxu0 %v3263
    %3884 = vmatpush1.msra.mxu0 %v3262
    %3885 = vmatprep.subr.mxu0 %v3269
    %3886 = vmatpush1.msra.mxu0 %v3268
    %3887 = vmatprep.subr.mxu0 %v3275
    %3888 = vmatpush1.msra.mxu0 %v3274
    %3889 = vmatprep.subr.mxu0 %v3281
    %3890 = vmatpush1.msra.mxu0 %v3280
    %3891 = vmatprep.subr.mxu0 %v3287
    %3892 = vmatpush1.msra.mxu0 %v3286
    %3893 = vmatprep.subr.mxu0 %v3293
    %3894 = vmatpush1.msra.mxu0 %v3292
    %3895 = vmatprep.subr.mxu0 0.0
    %3896 = vmatpush1.msra.mxu0 0.0
    %3897 = vmatprep.subr.mxu0 0.0
    %3898 = vmatpush1.msra.mxu0 0.0
    %3899 = vmatprep.subr.mxu0 0.0
    %3900 = vmatpush1.msra.mxu0 0.0
    %3901 = vmatprep.subr.mxu0 0.0
    %3902 = vmatpush1.msra.mxu0 0.0
    %3903 = vmatprep.subr.mxu0 0.0
    %3904 = vmatpush1.msra.mxu0 0.0
    %3905 = vmatprep.subr.mxu0 0.0
    %3906 = vmatpush1.msra.mxu0 0.0
    %3907 = vmatprep.subr.mxu0 0.0
    %3908 = vmatpush1.msra.mxu0 0.0
    %3909 = vmatprep.subr.mxu0 0.0
    %3910 = vmatpush1.msra.mxu0 0.0
    %3911 = vmatprep.subr.mxu0 0.0
    %3912 = vmatpush1.msra.mxu0 0.0
    %3913 = vmatprep.subr.mxu0 0.0
    %3914 = vmatpush1.msra.mxu0 0.0
    %3915 = vmatprep.subr.mxu0 0.0
    %3916 = vmatpush1.msra.mxu0 0.0
    %3917 = vmatprep.subr.mxu0 0.0
    %3918 = vmatpush1.msra.mxu0 0.0
    %3919 = vmatprep.subr.mxu0 0.0
    %3920 = vmatpush1.msra.mxu0 0.0
    %3921 = vmatprep.subr.mxu0 0.0
    %3922 = vmatpush1.msra.mxu0 0.0
    %3923 = vmatprep.subr.mxu0 0.0
    %3924 = vmatpush1.msra.mxu0 0.0
    %3925 = vmatprep.subr.mxu0 0.0
    %3926 = vmatpush1.msra.mxu0 0.0
    %3927 = vmatprep.subr.mxu0 0.0
    %3928 = vmatpush1.msra.mxu0 0.0
    %3929 = vmatprep.subr.mxu0 0.0
    %3930 = vmatpush1.msra.mxu0 0.0
    %3931 = vmatprep.mubr.f32.mxu0 0.0
    %3932 = vmatmul.mubr.f32.gmra.mrb[0].mxu0 %v3297
    %v3933 = vpop.f32.mrb[0].mxu0
    %v3934 = vadd.f32 0.0, %v3933
    %v3935 = vpop.f32.mrb[0].mxu0
    %v3936 = vadd.f32 0.0, %v3935
    %3937 = vdwg.mxu0
    %vm3938 = vcmask 1041408
    %v3939 = vsel %vm3938, %v3366, 0.0
    %v3940 = vsel %vm3938, %v3368, 0.0
    %v3941 = vadd.f32 %v3939, %v3940
    %v3942 = vsel %vm3938, %v3437, 0.0
    %v3943 = vadd.f32 %v3941, %v3942
    %v3944 = vsel %vm3938, %v3439, 0.0
    %v3945 = vadd.f32 %v3943, %v3944
    %v3946 = vsel %vm3938, %v3508, 0.0
    %v3947 = vadd.f32 %v3945, %v3946
    %v3948 = vsel %vm3938, %v3510, 0.0
    %v3949 = vadd.f32 %v3947, %v3948
    %3950 = vadd.xlane.f32.xlu0 %v3949
    %v3951 = vpop.xlane.xlu0 %3950
    %v3952 = vmul.f32 %v3951, 0.0013020834
    %v3953 = vsel %vm3938, %v3579, 0.0
    %v3954 = vsel %vm3938, %v3581, 0.0
    %v3955 = vadd.f32 %v3953, %v3954
    %v3956 = vsel %vm3938, %v3650, 0.0
    %v3957 = vadd.f32 %v3955, %v3956
    %v3958 = vsel %vm3938, %v3652, 0.0
    %v3959 = vadd.f32 %v3957, %v3958
    %v3960 = vsel %vm3938, %v3721, 0.0
    %v3961 = vadd.f32 %v3959, %v3960
    %v3962 = vsel %vm3938, %v3723, 0.0
    %v3963 = vadd.f32 %v3961, %v3962
    %3964 = vadd.xlane.f32.xlu0 %v3963
    %v3965 = vpop.xlane.xlu0 %3964
    %v3966 = vmul.f32 %v3965, 0.0013020834
    %v3967 = vmul.f32 %v3952, %v3952
    %v3968 = vsub.f32 %v3966, %v3967
    %v3969 = vmax.f32 %v3968, 0.0
    %v3970 = vadd.f32 %v3969, 1e-05
    %v3971 = vrsqrt.pop %v3970
    %v3972 = vld [vmem:[%s7] sm:$0x3f]
    %v3974 = vlaneseq
    %v3975 = vshrl.u32 %v3974, 7
    %v3976 = vsub.s32 0, %v3975
    %v3977 = vrot.slane %v3972, %v3976
    %v3978 = vlaneseq
    %v3979 = vshrl.u32 %v3978, 7
    %v3980 = vsub.s32 1, %v3979
    %v3981 = vrot.slane %v3972, %v3980
    %v3982 = vlaneseq
    %v3983 = vshrl.u32 %v3982, 7
    %v3984 = vsub.s32 2, %v3983
    %v3985 = vrot.slane %v3972, %v3984
    %v3986 = vlaneseq
    %v3987 = vshrl.u32 %v3986, 7
    %v3988 = vsub.s32 3, %v3987
    %v3989 = vrot.slane %v3972, %v3988
    %v3990 = vlaneseq
    %v3991 = vshrl.u32 %v3990, 7
    %v3992 = vsub.s32 4, %v3991
    %v3993 = vrot.slane %v3972, %v3992
    %v3994 = vlaneseq
    %v3995 = vshrl.u32 %v3994, 7
    %v3996 = vsub.s32 5, %v3995
    %v3997 = vrot.slane %v3972, %v3996
    %v4004 = vmul.f32 %v3952, %v3977
    %v4005 = vmul.f32 %v3952, %v3981
    %v4006 = vmul.f32 %v3952, %v3985
    %v4007 = vmul.f32 %v3952, %v3989
    %v4008 = vmul.f32 %v3952, %v3993
    %v4009 = vmul.f32 %v3952, %v3997
    %v4010 = vsub.f32 %v3792, %v4004
    %v4011 = vsub.f32 %v3794, %v4005
    %v4012 = vsub.f32 %v3863, %v4006
    %v4013 = vsub.f32 %v3865, %v4007
    %v4014 = vsub.f32 %v3934, %v4008
    %v4015 = vsub.f32 %v3936, %v4009
    %v4016 = vmul.f32 %v3971, %v4010
    %v4017 = vmul.f32 %v3971, %v4011
    %v4018 = vmul.f32 %v3971, %v4012
    %v4019 = vmul.f32 %v3971, %v4013
    %v4020 = vmul.f32 %v3971, %v4014
    %v4021 = vmul.f32 %v3971, %v4015
    %v4022 = vld [vmem:[%s8] sm:$0x3f]
    %v4024 = vlaneseq
    %v4025 = vshrl.u32 %v4024, 7
    %v4026 = vsub.s32 0, %v4025
    %v4027 = vrot.slane %v4022, %v4026
    %v4028 = vlaneseq
    %v4029 = vshrl.u32 %v4028, 7
    %v4030 = vsub.s32 1, %v4029
    %v4031 = vrot.slane %v4022, %v4030
    %v4032 = vlaneseq
    %v4033 = vshrl.u32 %v4032, 7
    %v4034 = vsub.s32 2, %v4033
    %v4035 = vrot.slane %v4022, %v4034
    %v4036 = vlaneseq
    %v4037 = vshrl.u32 %v4036, 7
    %v4038 = vsub.s32 3, %v4037
    %v4039 = vrot.slane %v4022, %v4038
    %v4040 = vlaneseq
    %v4041 = vshrl.u32 %v4040, 7
    %v4042 = vsub.s32 4, %v4041
    %v4043 = vrot.slane %v4022, %v4042
    %v4044 = vlaneseq
    %v4045 = vshrl.u32 %v4044, 7
    %v4046 = vsub.s32 5, %v4045
    %v4047 = vrot.slane %v4022, %v4046
    %v4054 = vadd.f32 %v4016, %v4027
    %v4055 = vadd.f32 %v4017, %v4031
    %v4056 = vadd.f32 %v4018, %v4035
    %v4057 = vadd.f32 %v4019, %v4039
    %v4058 = vadd.f32 %v4020, %v4043
    %v4059 = vadd.f32 %v4021, %v4047
    %v4060 = vmax.f32 %v4054, 0.0
    %v4061 = vmax.f32 %v4055, 0.0
    %v4062 = vmax.f32 %v4056, 0.0
    %v4063 = vmax.f32 %v4057, 0.0
    %v4064 = vmax.f32 %v4058, 0.0
    %v4065 = vmax.f32 %v4059, 0.0
    %v4066 = vpack.c.bf16 %v4060, %v4060
    %v4067 = vpack.c.bf16 %v4061, %v4061
    %v4068 = vpack.c.bf16 %v4062, %v4062
    %v4069 = vpack.c.bf16 %v4063, %v4063
    %v4070 = vpack.c.bf16 %v4064, %v4064
    %v4071 = vpack.c.bf16 %v4065, %v4065
    %v4072 = vld [vmem:[%s9] sm:$0xf]
    %v4073 = vld [vmem:[%s9 + $0x4] sm:$0xf]
    %v4074 = vld [vmem:[%s9 + $0x8] sm:$0xf]
    %v4075 = vld [vmem:[%s9 + $0xc] sm:$0xf]
    %v4076 = vld [vmem:[%s9 + $0x10] sm:$0xf]
    %v4077 = vld [vmem:[%s9 + $0x14] sm:$0xf]
    %v4078 = vld [vmem:[%s9 + $0x18] sm:$0xf]
    %v4079 = vld [vmem:[%s9 + $0x1c] sm:$0xf]
    %v4080 = vld [vmem:[%s9 + $0x20] sm:$0xf]
    %v4081 = vld [vmem:[%s9 + $0x24] sm:$0xf]
    %v4082 = vld [vmem:[%s9 + $0x28] sm:$0xf]
    %v4083 = vld [vmem:[%s9 + $0x2c] sm:$0xf]
    %v4084 = vld [vmem:[%s9 + $0x30] sm:$0xf]
    %v4085 = vld [vmem:[%s9 + $0x34] sm:$0xf]
    %v4086 = vld [vmem:[%s9 + $0x38] sm:$0xf]
    %v4087 = vld [vmem:[%s9 + $0x3c] sm:$0xf]
    %v4088 = vld [vmem:[%s9 + $0x40] sm:$0xf]
    %v4089 = vld [vmem:[%s9 + $0x44] sm:$0xf]
    %v4090 = vld [vmem:[%s9 + $0x48] sm:$0xf]
    %v4091 = vld [vmem:[%s9 + $0x4c] sm:$0xf]
    %v4092 = vld [vmem:[%s9 + $0x50] sm:$0xf]
    %v4093 = vld [vmem:[%s9 + $0x54] sm:$0xf]
    %v4094 = vld [vmem:[%s9 + $0x58] sm:$0xf]
    %v4095 = vld [vmem:[%s9 + $0x5c] sm:$0xf]
    %v4096 = vld [vmem:[%s9 + $0x60] sm:$0xf]
    %v4097 = vld [vmem:[%s9 + $0x64] sm:$0xf]
    %v4098 = vld [vmem:[%s9 + $0x68] sm:$0xf]
    %v4099 = vld [vmem:[%s9 + $0x6c] sm:$0xf]
    %v4100 = vld [vmem:[%s9 + $0x70] sm:$0xf]
    %v4101 = vld [vmem:[%s9 + $0x74] sm:$0xf]
    %v4102 = vld [vmem:[%s9 + $0x78] sm:$0xf]
    %v4103 = vld [vmem:[%s9 + $0x7c] sm:$0xf]
    %v4104 = vld [vmem:[%s9 + $0x80] sm:$0xf]
    %v4105 = vld [vmem:[%s9 + $0x84] sm:$0xf]
    %v4106 = vld [vmem:[%s9 + $0x88] sm:$0xf]
    %v4107 = vld [vmem:[%s9 + $0x8c] sm:$0xf]
    %v4108 = vld [vmem:[%s9 + $0x90] sm:$0xf]
    %v4109 = vld [vmem:[%s9 + $0x94] sm:$0xf]
    %v4110 = vld [vmem:[%s9 + $0x98] sm:$0xf]
    %v4111 = vld [vmem:[%s9 + $0x9c] sm:$0xf]
    %v4112 = vld [vmem:[%s9 + $0xa0] sm:$0xf]
    %v4113 = vld [vmem:[%s9 + $0xa4] sm:$0xf]
    %v4114 = vld [vmem:[%s9 + $0xa8] sm:$0xf]
    %v4115 = vld [vmem:[%s9 + $0xac] sm:$0xf]
    %v4116 = vld [vmem:[%s9 + $0xb0] sm:$0xf]
    %v4117 = vld [vmem:[%s9 + $0xb4] sm:$0xf]
    %v4118 = vld [vmem:[%s9 + $0xb8] sm:$0xf]
    %v4119 = vld [vmem:[%s9 + $0xbc] sm:$0xf]
    %v4120 = vld [vmem:[%s9 + $0xc0] sm:$0xf]
    %v4121 = vld [vmem:[%s9 + $0xc4] sm:$0xf]
    %v4122 = vld [vmem:[%s9 + $0xc8] sm:$0xf]
    %v4123 = vld [vmem:[%s9 + $0xcc] sm:$0xf]
    %v4124 = vld [vmem:[%s9 + $0xd0] sm:$0xf]
    %v4125 = vld [vmem:[%s9 + $0xd4] sm:$0xf]
    %v4126 = vld [vmem:[%s9 + $0xd8] sm:$0xf]
    %v4127 = vld [vmem:[%s9 + $0xdc] sm:$0xf]
    %v4128 = vld [vmem:[%s9 + $0xe0] sm:$0xf]
    %v4129 = vld [vmem:[%s9 + $0xe4] sm:$0xf]
    %v4130 = vld [vmem:[%s9 + $0xe8] sm:$0xf]
    %v4131 = vld [vmem:[%s9 + $0xec] sm:$0xf]
    %v4132 = vld [vmem:[%s9 + $0xf0] sm:$0xf]
    %v4133 = vld [vmem:[%s9 + $0xf4] sm:$0xf]
    %v4134 = vld [vmem:[%s9 + $0xf8] sm:$0xf]
    %v4135 = vld [vmem:[%s9 + $0xfc] sm:$0xf]
    %v4136 = vld [vmem:[%s9 + $0x100] sm:$0xf]
    %v4137 = vld [vmem:[%s9 + $0x104] sm:$0xf]
    %v4138 = vld [vmem:[%s9 + $0x108] sm:$0xf]
    %v4139 = vld [vmem:[%s9 + $0x10c] sm:$0xf]
    %v4140 = vld [vmem:[%s9 + $0x110] sm:$0xf]
    %v4141 = vld [vmem:[%s9 + $0x114] sm:$0xf]
    %v4142 = vld [vmem:[%s9 + $0x118] sm:$0xf]
    %v4143 = vld [vmem:[%s9 + $0x11c] sm:$0xf]
    %v4144 = vld [vmem:[%s9 + $0x120] sm:$0xf]
    %v4145 = vld [vmem:[%s9 + $0x124] sm:$0xf]
    %v4146 = vld [vmem:[%s9 + $0x128] sm:$0xf]
    %v4147 = vld [vmem:[%s9 + $0x12c] sm:$0xf]
    %v4148 = vld [vmem:[%s9 + $0x130] sm:$0xf]
    %v4149 = vld [vmem:[%s9 + $0x134] sm:$0xf]
    %v4150 = vld [vmem:[%s9 + $0x138] sm:$0xf]
    %v4151 = vld [vmem:[%s9 + $0x13c] sm:$0xf]
    %v4152 = vld [vmem:[%s9 + $0x140] sm:$0xf]
    %v4153 = vld [vmem:[%s9 + $0x144] sm:$0xf]
    %v4154 = vld [vmem:[%s9 + $0x148] sm:$0xf]
    %v4155 = vld [vmem:[%s9 + $0x14c] sm:$0xf]
    %v4156 = vld [vmem:[%s9 + $0x150] sm:$0xf]
    %v4157 = vld [vmem:[%s9 + $0x154] sm:$0xf]
    %v4158 = vld [vmem:[%s9 + $0x158] sm:$0xf]
    %v4159 = vld [vmem:[%s9 + $0x15c] sm:$0xf]
    %v4160 = vld [vmem:[%s9 + $0x160] sm:$0xf]
    %v4161 = vld [vmem:[%s9 + $0x164] sm:$0xf]
    %v4162 = vld [vmem:[%s9 + $0x168] sm:$0xf]
    %v4163 = vld [vmem:[%s9 + $0x16c] sm:$0xf]
    %v4164 = vld [vmem:[%s9 + $0x170] sm:$0xf]
    %v4165 = vld [vmem:[%s9 + $0x174] sm:$0xf]
    %v4166 = vld [vmem:[%s9 + $0x178] sm:$0xf]
    %v4167 = vld [vmem:[%s9 + $0x17c] sm:$0xf]
    %v4168 = vld [vmem:[%s10] sm:$0x1]
    %v4170 = vlaneseq
    %v4171 = vshrl.u32 %v4170, 7
    %v4172 = vsub.s32 0, %v4171
    %v4173 = vrot.slane %v4168, %v4172
    %v4271 = vunpack.c.l.b16 %v4072
    %v4272 = vunpack.c.l.b16 %v4073
    %v4273 = vunpack.c.l.b16 %v4074
    %v4274 = vunpack.c.l.b16 %v4075
    %v4275 = vunpack.c.l.b16 %v4076
    %v4276 = vunpack.c.l.b16 %v4077
    %v4277 = vunpack.c.l.b16 %v4078
    %v4278 = vunpack.c.l.b16 %v4079
    %v4279 = vunpack.c.l.b16 %v4080
    %v4280 = vunpack.c.l.b16 %v4081
    %v4281 = vunpack.c.l.b16 %v4082
    %v4282 = vunpack.c.l.b16 %v4083
    %v4283 = vunpack.c.l.b16 %v4084
    %v4284 = vunpack.c.l.b16 %v4085
    %v4285 = vunpack.c.l.b16 %v4086
    %v4286 = vunpack.c.l.b16 %v4087
    %v4287 = vunpack.c.l.b16 %v4088
    %v4288 = vunpack.c.l.b16 %v4089
    %v4289 = vunpack.c.l.b16 %v4090
    %v4290 = vunpack.c.l.b16 %v4091
    %v4291 = vunpack.c.l.b16 %v4092
    %v4292 = vunpack.c.l.b16 %v4093
    %v4293 = vunpack.c.l.b16 %v4094
    %v4294 = vunpack.c.l.b16 %v4095
    %v4295 = vunpack.c.l.b16 %v4096
    %v4296 = vunpack.c.l.b16 %v4097
    %v4297 = vunpack.c.l.b16 %v4098
    %v4298 = vunpack.c.l.b16 %v4099
    %v4299 = vunpack.c.l.b16 %v4100
    %v4300 = vunpack.c.l.b16 %v4101
    %v4301 = vunpack.c.l.b16 %v4102
    %v4302 = vunpack.c.l.b16 %v4103
    %v4303 = vunpack.c.l.b16 %v4104
    %v4304 = vunpack.c.l.b16 %v4105
    %v4305 = vunpack.c.l.b16 %v4106
    %v4306 = vunpack.c.l.b16 %v4107
    %v4307 = vunpack.c.l.b16 %v4108
    %v4308 = vunpack.c.l.b16 %v4109
    %v4309 = vunpack.c.l.b16 %v4110
    %v4310 = vunpack.c.l.b16 %v4111
    %v4311 = vunpack.c.l.b16 %v4112
    %v4312 = vunpack.c.l.b16 %v4113
    %v4313 = vunpack.c.l.b16 %v4114
    %v4314 = vunpack.c.l.b16 %v4115
    %v4315 = vunpack.c.l.b16 %v4116
    %v4316 = vunpack.c.l.b16 %v4117
    %v4317 = vunpack.c.l.b16 %v4118
    %v4318 = vunpack.c.l.b16 %v4119
    %v4319 = vunpack.c.l.b16 %v4120
    %v4320 = vunpack.c.l.b16 %v4121
    %v4321 = vunpack.c.l.b16 %v4122
    %v4322 = vunpack.c.l.b16 %v4123
    %v4323 = vunpack.c.l.b16 %v4124
    %v4324 = vunpack.c.l.b16 %v4125
    %v4325 = vunpack.c.l.b16 %v4126
    %v4326 = vunpack.c.l.b16 %v4127
    %v4327 = vunpack.c.l.b16 %v4128
    %v4328 = vunpack.c.l.b16 %v4129
    %v4329 = vunpack.c.l.b16 %v4130
    %v4330 = vunpack.c.l.b16 %v4131
    %v4331 = vunpack.c.l.b16 %v4132
    %v4332 = vunpack.c.l.b16 %v4133
    %v4333 = vunpack.c.l.b16 %v4134
    %v4334 = vunpack.c.l.b16 %v4135
    %v4335 = vunpack.c.l.b16 %v4136
    %v4336 = vunpack.c.l.b16 %v4137
    %v4337 = vunpack.c.l.b16 %v4138
    %v4338 = vunpack.c.l.b16 %v4139
    %v4339 = vunpack.c.l.b16 %v4140
    %v4340 = vunpack.c.l.b16 %v4141
    %v4341 = vunpack.c.l.b16 %v4142
    %v4342 = vunpack.c.l.b16 %v4143
    %v4343 = vunpack.c.l.b16 %v4144
    %v4344 = vunpack.c.l.b16 %v4145
    %v4345 = vunpack.c.l.b16 %v4146
    %v4346 = vunpack.c.l.b16 %v4147
    %v4347 = vunpack.c.l.b16 %v4148
    %v4348 = vunpack.c.l.b16 %v4149
    %v4349 = vunpack.c.l.b16 %v4150
    %v4350 = vunpack.c.l.b16 %v4151
    %v4351 = vunpack.c.l.b16 %v4152
    %v4352 = vunpack.c.l.b16 %v4153
    %v4353 = vunpack.c.l.b16 %v4154
    %v4354 = vunpack.c.l.b16 %v4155
    %v4355 = vunpack.c.l.b16 %v4156
    %v4356 = vunpack.c.l.b16 %v4157
    %v4357 = vunpack.c.l.b16 %v4158
    %v4358 = vunpack.c.l.b16 %v4159
    %v4359 = vunpack.c.l.b16 %v4160
    %v4360 = vunpack.c.l.b16 %v4161
    %v4361 = vunpack.c.l.b16 %v4162
    %v4362 = vunpack.c.l.b16 %v4163
    %v4363 = vunpack.c.l.b16 %v4164
    %v4364 = vunpack.c.l.b16 %v4165
    %v4365 = vunpack.c.l.b16 %v4166
    %v4366 = vunpack.c.l.b16 %v4167
    %v4367 = vpack.c.b16 %v4272, %v4271
    %v4368 = vpack.c.b16 %v4274, %v4273
    %v4369 = vpack.c.b16 %v4276, %v4275
    %v4370 = vpack.c.b16 %v4278, %v4277
    %v4371 = vpack.c.b16 %v4280, %v4279
    %v4372 = vpack.c.b16 %v4282, %v4281
    %v4373 = vpack.c.b16 %v4284, %v4283
    %v4374 = vpack.c.b16 %v4286, %v4285
    %v4375 = vpack.c.b16 %v4288, %v4287
    %v4376 = vpack.c.b16 %v4290, %v4289
    %v4377 = vpack.c.b16 %v4292, %v4291
    %v4378 = vpack.c.b16 %v4294, %v4293
    %v4379 = vpack.c.b16 %v4296, %v4295
    %v4380 = vpack.c.b16 %v4298, %v4297
    %v4381 = vpack.c.b16 %v4300, %v4299
    %v4382 = vpack.c.b16 %v4302, %v4301
    %v4383 = vpack.c.b16 %v4304, %v4303
    %v4384 = vpack.c.b16 %v4306, %v4305
    %v4385 = vpack.c.b16 %v4308, %v4307
    %v4386 = vpack.c.b16 %v4310, %v4309
    %v4387 = vpack.c.b16 %v4312, %v4311
    %v4388 = vpack.c.b16 %v4314, %v4313
    %v4389 = vpack.c.b16 %v4316, %v4315
    %v4390 = vpack.c.b16 %v4318, %v4317
    %v4391 = vpack.c.b16 %v4320, %v4319
    %v4392 = vpack.c.b16 %v4322, %v4321
    %v4393 = vpack.c.b16 %v4324, %v4323
    %v4394 = vpack.c.b16 %v4326, %v4325
    %v4395 = vpack.c.b16 %v4328, %v4327
    %v4396 = vpack.c.b16 %v4330, %v4329
    %v4397 = vpack.c.b16 %v4332, %v4331
    %v4398 = vpack.c.b16 %v4334, %v4333
    %v4399 = vpack.c.b16 %v4336, %v4335
    %v4400 = vpack.c.b16 %v4338, %v4337
    %v4401 = vpack.c.b16 %v4340, %v4339
    %v4402 = vpack.c.b16 %v4342, %v4341
    %v4403 = vpack.c.b16 %v4344, %v4343
    %v4404 = vpack.c.b16 %v4346, %v4345
    %v4405 = vpack.c.b16 %v4348, %v4347
    %v4406 = vpack.c.b16 %v4350, %v4349
    %v4407 = vpack.c.b16 %v4352, %v4351
    %v4408 = vpack.c.b16 %v4354, %v4353
    %v4409 = vpack.c.b16 %v4356, %v4355
    %v4410 = vpack.c.b16 %v4358, %v4357
    %v4411 = vpack.c.b16 %v4360, %v4359
    %v4412 = vpack.c.b16 %v4362, %v4361
    %v4413 = vpack.c.b16 %v4364, %v4363
    %v4414 = vpack.c.b16 %v4366, %v4365
    %4463 = vmatprep.subr.bf16.mxu0 0
    %4464 = vmatpush1.bf16.msra.mxu0 %v4367
    %4465 = vmatprep.subr.bf16.mxu0 0
    %4466 = vmatpush1.bf16.msra.mxu0 %v4368
    %4467 = vmatprep.subr.bf16.mxu0 0
    %4468 = vmatpush1.bf16.msra.mxu0 %v4369
    %4469 = vmatprep.subr.bf16.mxu0 0
    %4470 = vmatpush1.bf16.msra.mxu0 %v4370
    %4471 = vmatprep.subr.bf16.mxu0 0
    %4472 = vmatpush1.bf16.msra.mxu0 %v4371
    %4473 = vmatprep.subr.bf16.mxu0 0
    %4474 = vmatpush1.bf16.msra.mxu0 %v4372
    %4475 = vmatprep.subr.bf16.mxu0 0
    %4476 = vmatpush1.bf16.msra.mxu0 %v4373
    %4477 = vmatprep.subr.bf16.mxu0 0
    %4478 = vmatpush1.bf16.msra.mxu0 %v4374
    %4479 = vmatprep.subr.bf16.mxu0 0
    %4480 = vmatpush1.bf16.msra.mxu0 %v4375
    %4481 = vmatprep.subr.bf16.mxu0 0
    %4482 = vmatpush1.bf16.msra.mxu0 %v4376
    %4483 = vmatprep.subr.bf16.mxu0 0
    %4484 = vmatpush1.bf16.msra.mxu0 %v4377
    %4485 = vmatprep.subr.bf16.mxu0 0
    %4486 = vmatpush1.bf16.msra.mxu0 %v4378
    %4487 = vmatprep.subr.bf16.mxu0 0
    %4488 = vmatpush1.bf16.msra.mxu0 %v4379
    %4489 = vmatprep.subr.bf16.mxu0 0
    %4490 = vmatpush1.bf16.msra.mxu0 %v4380
    %4491 = vmatprep.subr.bf16.mxu0 0
    %4492 = vmatpush1.bf16.msra.mxu0 %v4381
    %4493 = vmatprep.subr.bf16.mxu0 0
    %4494 = vmatpush1.bf16.msra.mxu0 %v4382
    %4495 = vmatprep.mubr.bf16.mxu0 %v4067
    %4496 = vmatmul.mubr.bf16.gmra.mrb[0].mxu0 %v4066
    %v4497 = vpop.f32.mrb[0].mxu0
    %v4498 = vadd.f32 %v4173, %v4497
    %v4499 = vpop.f32.mrb[0].mxu0
    %v4500 = vpop.f32.mrb[0].mxu0
    %v4501 = vpop.f32.mrb[0].mxu0
    %4502 = vdwg.mxu0
    %4503 = vmatprep.subr.bf16.mxu0 0
    %4504 = vmatpush1.bf16.msra.mxu0 %v4383
    %4505 = vmatprep.subr.bf16.mxu0 0
    %4506 = vmatpush1.bf16.msra.mxu0 %v4384
    %4507 = vmatprep.subr.bf16.mxu0 0
    %4508 = vmatpush1.bf16.msra.mxu0 %v4385
    %4509 = vmatprep.subr.bf16.mxu0 0
    %4510 = vmatpush1.bf16.msra.mxu0 %v4386
    %4511 = vmatprep.subr.bf16.mxu0 0
    %4512 = vmatpush1.bf16.msra.mxu0 %v4387
    %4513 = vmatprep.subr.bf16.mxu0 0
    %4514 = vmatpush1.bf16.msra.mxu0 %v4388
    %4515 = vmatprep.subr.bf16.mxu0 0
    %4516 = vmatpush1.bf16.msra.mxu0 %v4389
    %4517 = vmatprep.subr.bf16.mxu0 0
    %4518 = vmatpush1.bf16.msra.mxu0 %v4390
    %4519 = vmatprep.subr.bf16.mxu0 0
    %4520 = vmatpush1.bf16.msra.mxu0 %v4391
    %4521 = vmatprep.subr.bf16.mxu0 0
    %4522 = vmatpush1.bf16.msra.mxu0 %v4392
    %4523 = vmatprep.subr.bf16.mxu0 0
    %4524 = vmatpush1.bf16.msra.mxu0 %v4393
    %4525 = vmatprep.subr.bf16.mxu0 0
    %4526 = vmatpush1.bf16.msra.mxu0 %v4394
    %4527 = vmatprep.subr.bf16.mxu0 0
    %4528 = vmatpush1.bf16.msra.mxu0 %v4395
    %4529 = vmatprep.subr.bf16.mxu0 0
    %4530 = vmatpush1.bf16.msra.mxu0 %v4396
    %4531 = vmatprep.subr.bf16.mxu0 0
    %4532 = vmatpush1.bf16.msra.mxu0 %v4397
    %4533 = vmatprep.subr.bf16.mxu0 0
    %4534 = vmatpush1.bf16.msra.mxu0 %v4398
    %4535 = vmatprep.mubr.bf16.mxu0 %v4069
    %4536 = vmatmul.mubr.bf16.gmra.mrb[0].mxu0 %v4068
    %v4537 = vpop.f32.mrb[0].mxu0
    %v4538 = vadd.f32 %v4498, %v4537
    %v4539 = vpop.f32.mrb[0].mxu0
    %v4540 = vpop.f32.mrb[0].mxu0
    %v4541 = vpop.f32.mrb[0].mxu0
    %4542 = vdwg.mxu0
    %4543 = vmatprep.subr.bf16.mxu0 0
    %4544 = vmatpush1.bf16.msra.mxu0 %v4399
    %4545 = vmatprep.subr.bf16.mxu0 0
    %4546 = vmatpush1.bf16.msra.mxu0 %v4400
    %4547 = vmatprep.subr.bf16.mxu0 0
    %4548 = vmatpush1.bf16.msra.mxu0 %v4401
    %4549 = vmatprep.subr.bf16.mxu0 0
    %4550 = vmatpush1.bf16.msra.mxu0 %v4402
    %4551 = vmatprep.subr.bf16.mxu0 0
    %4552 = vmatpush1.bf16.msra.mxu0 %v4403
    %4553 = vmatprep.subr.bf16.mxu0 0
    %4554 = vmatpush1.bf16.msra.mxu0 %v4404
    %4555 = vmatprep.subr.bf16.mxu0 0
    %4556 = vmatpush1.bf16.msra.mxu0 %v4405
    %4557 = vmatprep.subr.bf16.mxu0 0
    %4558 = vmatpush1.bf16.msra.mxu0 %v4406
    %4559 = vmatprep.subr.bf16.mxu0 0
    %4560 = vmatpush1.bf16.msra.mxu0 %v4407
    %4561 = vmatprep.subr.bf16.mxu0 0
    %4562 = vmatpush1.bf16.msra.mxu0 %v4408
    %4563 = vmatprep.subr.bf16.mxu0 0
    %4564 = vmatpush1.bf16.msra.mxu0 %v4409
    %4565 = vmatprep.subr.bf16.mxu0 0
    %4566 = vmatpush1.bf16.msra.mxu0 %v4410
    %4567 = vmatprep.subr.bf16.mxu0 0
    %4568 = vmatpush1.bf16.msra.mxu0 %v4411
    %4569 = vmatprep.subr.bf16.mxu0 0
    %4570 = vmatpush1.bf16.msra.mxu0 %v4412
    %4571 = vmatprep.subr.bf16.mxu0 0
    %4572 = vmatpush1.bf16.msra.mxu0 %v4413
    %4573 = vmatprep.subr.bf16.mxu0 0
    %4574 = vmatpush1.bf16.msra.mxu0 %v4414
    %4575 = vmatprep.mubr.bf16.mxu0 %v4071
    %4576 = vmatmul.mubr.bf16.gmra.mrb[0].mxu0 %v4070
    %v4577 = vpop.f32.mrb[0].mxu0
    %v4578 = vadd.f32 %v4538, %v4577
    %v4579 = vpop.f32.mrb[0].mxu0
    %v4580 = vpop.f32.mrb[0].mxu0
    %v4581 = vpop.f32.mrb[0].mxu0
    %4582 = vdwg.mxu0
    %vm4583 = vcmask 58368
    %4584 = vst.msk [vmem:[#allocation2] sm:$0x3] %vm4583, %v4578
    // Predicated region
    $region46: #{restevit_head_forward.1} parent=1 // pred_check
      _
    $region47: #{restevit_head_forward.1} parent=1 // pred_check_branch
      %4586 = sbr.rel (0) target = $region49
    $region48: #{restevit_head_forward.1} parent=1 // pred_region
      %s4588 = ssub.s32 32, 32
      %4589 = vsyncadd [#allocation3], %s4588
      %s4591 = sshll.u32 [#allocation2], 4
      %s4592 = int_to_ptr.vmem [resolvable:$true] %s4591
      %4594 = dma.vmem_to_hbm [thread:$0]  %s4592, 32, %s11, [#allocation3]
    $region49: #{restevit_head_forward.1} parent=1 // pred_fallthru
      _
    // Predicated region
    $region50: #{restevit_head_forward.1} parent=1 // pred_check
      _
    $region51: #{restevit_head_forward.1} parent=1 // pred_check_branch
      %4596 = sbr.rel (0) target = $region53
    $region52: #{restevit_head_forward.1} parent=1 // pred_region
      %4597 = dma.done [#allocation3], 32
    $region53: #{restevit_head_forward.1} parent=1 // pred_fallthru
      _
    %4598 = vsyncpa [#allocation3], 1

</llo_original>
